<compile_context>
chip_gen: v7x
topology: tpu7x:2x2x1
jax: 0.10.0
libtpu: 0.0.40
codegen_flags: <defaults>
</compile_context>

<pallas_src>
import functools
import math

import jax
import jax.numpy as jnp
from jax.experimental import pallas as pl
from jax.experimental.pallas import tpu as pltpu

F32 = jnp.float32
BF16 = jnp.bfloat16
LANE = 128


def _vmem():
    return pl.BlockSpec(memory_space=pltpu.MemorySpace.VMEM)


# ----------------------------------------------------------------------------
# Static per-flow channel-piece plan (shared by the packer and the kernel).
# ----------------------------------------------------------------------------
def _plan_flows(cfg):
    n_flows, n_ee, n_es = cfg['n_flows'], cfg['n_early_every'], cfg['n_early_size']
    pieces = [cfg['n_group']]
    plan = []
    for k in range(n_flows):
        if k % n_ee == 0 and k > 0:
            taken = 0
            while taken < n_es:
                taken += pieces.pop(0)
            assert taken == n_es, "early split must land on a piece boundary"
        in_sizes = list(pieces)
        n_rem = sum(in_sizes)
        n_half = n_rem // 2
        next_early = (k + 1 < n_flows) and ((k + 1) % n_ee == 0)
        if next_early:
            assert cfg['n_early_size'] <= n_half
            if n_half > n_es:
                za_splits = [n_es, n_half - n_es]
            else:
                za_splits = [n_es]
        else:
            za_splits = [n_half]
        plan.append(dict(in_sizes=in_sizes, za_splits=za_splits,
                         n_half=n_half, n_rem=n_rem))
        pieces = list(za_splits) + [n_rem - n_half]   # za pieces + zb
    return plan


# ----------------------------------------------------------------------------
# One-time weight packing (run at model-load time, NOT per forward).
# ----------------------------------------------------------------------------
def pack_waveglow_weights(params, cfg):
    nc, L, K = cfg['wn_channels'], cfg['wn_layers'], cfg['wn_kernel']
    plan = _plan_flows(cfg)

    w_blocks, b_blocks = {}, {}

    def add_w(name, mat):
        w_blocks[name] = jnp.asarray(mat, F32)

    def add_b(name, vec):
        b_blocks[name] = jnp.asarray(vec, F32).reshape(-1)

    # Fold the (k=1, no-activation) cond net into a single (cond_out, n_mel) map.
    cw = jnp.eye(cfg['n_mel'], dtype=F32)
    cb = jnp.zeros((cfg['n_mel'],), F32)
    for (w, b_) in params['cond_layers']:
        w = jnp.asarray(w, F32)
        b_ = jnp.asarray(b_, F32)
        cb = w @ cb + b_
        cw = w @ cw

    for k in range(cfg['n_flows']):
        p = plan[k]
        n_half = p['n_half']
        in_sizes, za_splits = p['in_sizes'], p['za_splits']
        w_inv = jnp.asarray(params['convinv'][k], F32)
        wn = params['WN'][k]

        wa, wb = w_inv[:n_half], w_inv[n_half:]
        r0 = 0
        for ri, rr in enumerate(za_splits):
            c0 = 0
            for ci, cc in enumerate(in_sizes):
                add_w(f'wa{k}_{ri}_{ci}', wa[r0:r0 + rr, c0:c0 + cc])
                c0 += cc
            r0 += rr
        c0 = 0
        for ci, cc in enumerate(in_sizes):
            add_w(f'wb{k}_{ci}', wb[:, c0:c0 + cc])
            c0 += cc

        start_w = jnp.asarray(wn['start_w'], F32)
        r0 = 0
        for ri, rr in enumerate(za_splits):
            add_w(f'start{k}_{ri}', start_w[:, r0:r0 + rr])
            r0 += rr
        add_b(f'start{k}', wn['start_b'])

        # All layers' cond projections stacked; the cond-net conv AND the
        # in-layer biases are folded in here.
        add_w(f'cond{k}', jnp.concatenate(
            [jnp.asarray(wn['cond_w'][i], F32) @ cw for i in range(L)], axis=0))
        add_b(f'cond{k}', jnp.concatenate(
            [jnp.asarray(wn['cond_w'][i], F32) @ cb
             + jnp.asarray(wn['cond_b'][i], F32)
             + jnp.asarray(wn['in_b'][i], F32) for i in range(L)], axis=0))

        for i in range(L):
            in_w = jnp.asarray(wn['in_w'][i], F32)            # (2nc, nc, K)
            for tap in range(K):
                add_w(f'in{k}_{i}_{tap}', in_w[:, :, tap])    # (2nc, nc)
            add_w(f'rs{k}_{i}', wn['rs_w'][i])                # true shape, no padding
            add_b(f'rs{k}_{i}', wn['rs_b'][i])

        end_w = jnp.asarray(wn['end_w'], F32)
        end_b = jnp.asarray(wn['end_b'], F32)
        add_w(f'end_t{k}', end_w[:n_half])
        add_b(f'end_t{k}', end_b[:n_half])
        add_w(f'end_s{k}', end_w[n_half:])
        add_b(f'end_s{k}', end_b[n_half:])

    # Pack everything into one bf16 weight slab + one f32 bias slab.
    wcols = max(m.shape[1] for m in w_blocks.values())
    ROWQ = 16                                    # bf16 sublane-packing quantum
    w_layout, w_parts, off = {}, [], 0
    for name, m in w_blocks.items():
        rows, cols = m.shape
        prows = -(-rows // ROWQ) * ROWQ
        w_parts.append(jnp.zeros((prows, wcols), F32).at[:rows, :cols].set(m))
        w_layout[name] = (off, rows, cols)
        off += prows
    w_slab = jnp.concatenate(w_parts, axis=0).astype(BF16)

    b_layout, b_parts, boff = {}, [], 0
    for name, v in b_blocks.items():
        rows = v.shape[0]
        prows = -(-rows // 8) * 8
        b_parts.append(jnp.zeros((prows, 1), F32).at[:rows, 0].set(v))
        b_layout[name] = (boff, rows)
        boff += prows
    b_slab = jnp.concatenate(b_parts, axis=0)

    # slogdet of the invertible 1x1 convs: parameters -> computed once here.
    slogdets = jnp.stack([jnp.linalg.slogdet(jnp.asarray(params['convinv'][k], F32))[1]
                          for k in range(cfg['n_flows'])])

    packed = dict(w_slab=w_slab, b_slab=b_slab, slogdets=slogdets)
    layout = dict(w=w_layout, b=b_layout)
    return packed, layout


# ----------------------------------------------------------------------------
# The single fused kernel: all flows (1x1 mix + WN + coupling + NaN scrub +
# early splits) with the audio slab resident in VMEM throughout.
# ----------------------------------------------------------------------------
def _waveglow_kernel(audio_ref, cond_ref, tmask_ref, w_ref, b_ref,
                     out_ref, ls_ref, *, cfg, layout, plan):
    nc, L, K = cfg['wn_channels'], cfg['wn_layers'], cfg['wn_kernel']
    n_flows = cfg['n_flows']
    n_ee, n_es = cfg['n_early_every'], cfg['n_early_size']
    bt = audio_ref.shape[1]
    wl, bl = layout['w'], layout['b']

    def wv(name):                        # bf16 weight view (static slab offsets)
        r0, rows, cols = wl[name]
        return w_ref[r0:r0 + rows, 0:cols]

    def bv(name):                        # (rows, 1) f32 bias column
        r0, rows = bl[name]
        return b_ref[r0:r0 + rows, :]

    def mm(w, x):                        # bf16 MXU operands, f32 accumulation
        return jnp.dot(w, x.astype(BF16), preferred_element_type=F32)

    tmask = tmask_ref[...]               # (1, BT), 1 iff t < T
    cond = cond_ref[...]                 # raw upsampled mel (n_mel, BT)

    pieces = [audio_ref[...]]            # channel pieces of the current audio
    out_row = 0

    for k in range(n_flows):
        p = plan[k]

        # Early-output split: pieces were pre-split by the previous flow so the
        # boundary always lands on a piece boundary -> plain row-slice stores.
        if k % n_ee == 0 and k > 0:
            taken = 0
            while taken < n_es:
                piece = pieces.pop(0)
                out_ref[out_row:out_row + piece.shape[0], :] = piece
                out_row += piece.shape[0]
                taken += piece.shape[0]

        # --- invertible 1x1 conv (mix_first=True); weights pre-split by rows
        #     (xa pieces / xb) and columns (input pieces) in the packer.
        in_bf = [q.astype(BF16) for q in pieces]
        xa_pcs = []
        for ri in range(len(p['za_splits'])):
            acc = None
            for ci in range(len(in_bf)):
                d = jnp.dot(wv(f'wa{k}_{ri}_{ci}'), in_bf[ci],
                            preferred_element_type=F32)
                acc = d if acc is None else acc + d
            xa_pcs.append(acc)
        xb = None
        for ci in range(len(in_bf)):
            d = jnp.dot(wv(f'wb{k}_{ci}'), in_bf[ci], preferred_element_type=F32)
            xb = d if xb is None else xb + d

        # --- WN: all layers' folded cond projections in ONE stacked matmul.
        cond_acts = mm(wv(f'cond{k}'), cond) + bv(f'cond{k}')

        h = None
        for ri in range(len(p['za_splits'])):
            d = mm(wv(f'start{k}_{ri}'), xa_pcs[ri])
            h = d if h is None else h + d
        h = h + bv(f'start{k}')

        skip = None
        for i in range(L):
            dil = 2 ** i
            pad = dil * (K - 1) // 2
            hm = h * tmask                       # keep pad region exactly zero
            acts = cond_acts[i * 2 * nc:(i + 1) * 2 * nc, :]
            for tap in range(K):                 # per-tap accumulating dots
                off = tap * dil - pad
                x_tap = hm if off == 0 else pltpu.roll(hm, (-off) % bt, axis=1)
                acts = acts + mm(wv(f'in{k}_{i}_{tap}'), x_tap)
            g = jnp.tanh(acts[:nc, :]) * jax.nn.sigmoid(acts[nc:, :])
            rs = mm(wv(f'rs{k}_{i}'), g) + bv(f'rs{k}_{i}')
            if i < L - 1:
                h = h + rs[:nc, :]               # residual
                s_new = rs[nc:, :]               # skip contribution
            else:
                s_new = rs                       # last layer: all -> skip
            skip = s_new if skip is None else skip + s_new

        # --- end 1x1 conv (pre-split into t / log_s halves) + affine coupling.
        t_aff = mm(wv(f'end_t{k}'), skip) + bv(f'end_t{k}')
        log_s = mm(wv(f'end_s{k}'), skip) + bv(f'end_s{k}')
        log_s = log_s * tmask                    # keep pad region zero / finite

        zb = xb * jnp.exp(log_s) + t_aff
        zb = jnp.where(jnp.isnan(zb), 0.0, zb)   # ignore_nan
        za_pcs = [jnp.where(jnp.isnan(x), 0.0, x) for x in xa_pcs]
        pieces = za_pcs + [zb]

        ls_ref[k:k + 1, :] = jnp.sum(log_s, axis=0, keepdims=True)

    for piece in pieces:                         # remaining (final) audio
        out_ref[out_row:out_row + piece.shape[0], :] = piece
        out_row += piece.shape[0]


def waveglow_call(audio_flat, cond_flat, tmask, w_slab, b_slab, cfg, layout):
    n_group, bt = audio_flat.shape
    plan = _plan_flows(cfg)
    kern = functools.partial(_waveglow_kernel, cfg=cfg, layout=layout, plan=plan)
    return pl.pallas_call(
        kern,
        out_shape=(jax.ShapeDtypeStruct((n_group, bt), F32),
                   jax.ShapeDtypeStruct((cfg['n_flows'], bt), F32)),
        in_specs=[_vmem()] * 5,
        out_specs=(_vmem(), _vmem()),
    )(audio_flat, cond_flat, tmask, w_slab, b_slab)


# ----------------------------------------------------------------------------
# Host-side layout helpers (tiny XLA glue).
# ----------------------------------------------------------------------------
def to_flat(x, t_pad):
    """(B, C, T) -> lane-dense (C, B*t_pad), zero padded at t >= T."""
    b, c, t = x.shape
    xp = jnp.pad(x.astype(F32), ((0, 0), (0, 0), (0, t_pad - t)))
    return jnp.transpose(xp, (1, 0, 2)).reshape(c, b * t_pad)


def from_flat(xf, b, t, t_pad):
    """(C, B*t_pad) -> (B, C, T)."""
    c = xf.shape[0]
    return jnp.transpose(xf.reshape(c, b, t_pad), (1, 0, 2))[:, :, :t]


# ----------------------------------------------------------------------------
# WaveGlow forward (weights already packed once, outside this function).
# ----------------------------------------------------------------------------
def waveglow_forward(packed, cond, audio, *, cfg, layout):
    b = audio.shape[0]
    n_group = cfg['n_group']

    # audio: (B, time) -> (B, n_group, T)
    audio_g = jnp.transpose(audio.reshape(b, -1, n_group), (0, 2, 1)).astype(F32)
    t = audio_g.shape[2]
    frames = cond.shape[2]

    # Minimal per-batch time padding: Tp >= T + halo (circular-roll invariant)
    # and B*Tp a multiple of 128 lanes.
    halo = (2 ** (cfg['wn_layers'] - 1)) * (cfg['wn_kernel'] - 1) // 2
    lane_q = LANE // math.gcd(b, LANE)
    t_pad = -(-(t + halo) // lane_q) * lane_q
    assert t_pad >= t + halo and (b * t_pad) % LANE == 0
    bt = b * t_pad

    tmask = jnp.tile((jnp.arange(t_pad) < t).astype(F32), (b,)).reshape(1, bt)

    # upsample_first=True, mode='nearest'.  The single k=1 cond conv has been
    # folded into every flow's stacked cond projection offline, so the raw
    # upsampled mel feeds the kernel directly (identical math: both are 1x1).
    idx = (jnp.arange(t) * frames // t).astype(jnp.int32)
    cond_up = cond.astype(F32)[:, :, idx]                      # (B, n_mel, T)
    cond_flat = to_flat(cond_up, t_pad)                        # (n_mel, B*Tp)
    audio_flat = to_flat(audio_g, t_pad)                       # (n_group, B*Tp)

    out_flat, ls = waveglow_call(audio_flat, cond_flat, tmask,
                                 packed['w_slab'], packed['b_slab'], cfg, layout)

    out = from_flat(out_flat, b, t, t_pad)                     # (B, n_group, T)
    out = jnp.transpose(out, (0, 2, 1)).reshape(b, -1)         # (B, time)

    ls_bt = ls.reshape(cfg['n_flows'], b, t_pad)[:, :, :t]     # (F, B, T)
    log_det_w = t * packed['slogdets']                         # (F,)
    logdet = jnp.sum(log_det_w) + jnp.sum(ls_bt, axis=(0, 2))  # (B,)
    logdet_w_sum = jnp.sum(log_det_w)
    log_s_sum = jnp.sum(ls_bt, axis=0)                         # (B, T)
    return out, logdet, logdet_w_sum, log_s_sum


# ----------------------------------------------------------------------------
# Deterministic parameter initialization (shapes implied by __init__).
# ----------------------------------------------------------------------------
def init_waveglow_params(key, cfg):
    nc, kk = cfg['wn_channels'], cfg['wn_kernel']
    keys = iter(jax.random.split(key, 512))

    def nrm(shape, scale=0.1):
        return scale * jax.random.normal(next(keys), shape, F32)

    params = {'cond_layers': [(nrm((cfg['cond_out'], cfg['n_mel'])),
                               nrm((cfg['cond_out'],)))],
              'convinv': [], 'WN': []}

    n_remaining = cfg['n_group']
    for k in range(cfg['n_flows']):
        if k % cfg['n_early_every'] == 0 and k > 0:
            n_remaining -= cfg['n_early_size']
        # InvertibleConv1x1 weight: random orthogonal with positive determinant.
        w = jnp.linalg.qr(jax.random.normal(next(keys),
                                            (n_remaining, n_remaining)))[0]
        w = w.at[:, 0].set(w[:, 0] * jnp.sign(jnp.linalg.det(w)))
        params['convinv'].append(w.astype(F32))

        n_half = n_remaining // 2
        wn = {'start_w': nrm((nc, n_half)), 'start_b': nrm((nc,)),
              'end_w': nrm((2 * n_half, nc)), 'end_b': nrm((2 * n_half,)),
              'in_w': [], 'in_b': [], 'cond_w': [], 'cond_b': [],
              'rs_w': [], 'rs_b': []}
        for i in range(cfg['wn_layers']):
            wn['in_w'].append(nrm((2 * nc, nc, kk)))
            wn['in_b'].append(nrm((2 * nc,)))
            wn['cond_w'].append(nrm((2 * nc, cfg['cond_out'])))
            wn['cond_b'].append(nrm((2 * nc,)))
            rs_out = 2 * nc if i < cfg['wn_layers'] - 1 else nc
            wn['rs_w'].append(nrm((rs_out, nc)))
            wn['rs_b'].append(nrm((rs_out,)))
        params['WN'].append(wn)
    return params


# ----------------------------------------------------------------------------
# Driver
# ----------------------------------------------------------------------------
if __name__ == "__main__":
    cfg = dict(n_mel=8, n_flows=3, n_group=8, n_early_every=2, n_early_size=2,
               hop_length=16, cond_out=16, wn_layers=2, wn_channels=32,
               wn_kernel=3)
    assert cfg['hop_length'] % cfg['n_group'] == 0

    key = jax.random.PRNGKey(0)
    kp, kc, ka = jax.random.split(key, 3)
    params = init_waveglow_params(kp, cfg)

    # One-time, load-time packing (NOT re-executed per forward).
    packed, layout = pack_waveglow_weights(params, cfg)

    B, frames = 2, 10
    time = frames * cfg['hop_length']                    # 160 samples
    cond = jax.random.normal(kc, (B, cfg['n_mel'], frames), F32)
    audio = jax.random.normal(ka, (B, time), F32)

    fwd = jax.jit(functools.partial(waveglow_forward, cfg=cfg, layout=layout))
    out, logdet, logdet_w_sum, log_s_sum = fwd(packed, cond, audio)
    jax.block_until_ready((out, logdet, logdet_w_sum, log_s_sum))

    assert out.shape == (B, time)
    assert logdet.shape == (B,)
    assert log_s_sum.shape == (B, time // cfg['n_group'])
    assert bool(jnp.all(jnp.isfinite(out)))
    assert bool(jnp.all(jnp.isfinite(logdet)))
    print("KERNEL_OK")
</pallas_src>

<mosaic_0001>
module attributes {stable_mosaic.version = 11 : i64} {
  func.func @_waveglow_kernel(%arg0: memref<8x128xf32, #tpu.memory_space<vmem>>, %arg1: memref<8x128xf32, #tpu.memory_space<vmem>>, %arg2: memref<1x128xf32, #tpu.memory_space<vmem>>, %arg3: memref<2240x32xbf16, #tpu.memory_space<vmem>>, %arg4: memref<816x1xf32, #tpu.memory_space<vmem>>, %arg5: memref<8x128xf32, #tpu.memory_space<vmem>>, %arg6: memref<3x128xf32, #tpu.memory_space<vmem>>) attributes {dimension_semantics = [], scalar_prefetch = 0 : i64, scratch_operands = 0 : i64, tpu.core_type = #tpu.core_type<tc>} {
    %c0 = arith.constant 0 : index
    %c0_0 = arith.constant 0 : index
    %0 = vector.load %arg2[%c0, %c0_0] : memref<1x128xf32, #tpu.memory_space<vmem>>, vector<1x128xf32>
    %c0_1 = arith.constant 0 : index
    %c0_2 = arith.constant 0 : index
    %1 = vector.load %arg1[%c0_1, %c0_2] : memref<8x128xf32, #tpu.memory_space<vmem>>, vector<8x128xf32>
    %c0_3 = arith.constant 0 : index
    %c0_4 = arith.constant 0 : index
    %2 = vector.load %arg0[%c0_3, %c0_4] : memref<8x128xf32, #tpu.memory_space<vmem>>, vector<8x128xf32>
    %3 = arith.truncf %2 : vector<8x128xf32> to vector<8x128xbf16>
    %c0_5 = arith.constant 0 : index
    %c0_6 = arith.constant 0 : index
    %4 = vector.load %arg3[%c0_5, %c0_6] : memref<2240x32xbf16, #tpu.memory_space<vmem>>, vector<4x8xbf16>
    %cst = arith.constant dense<0.000000e+00> : vector<4x128xf32>
    %5 = tpu.matmul %4, %3, %cst {dimension_numbers = #tpu.dot_dimension_numbers<[1], [0], [0], [1], [0, 0, 1, 1], [], []>} : vector<4x8xbf16>, vector<8x128xbf16>, vector<4x128xf32> -> vector<4x128xf32>
    %c16 = arith.constant 16 : index
    %c0_7 = arith.constant 0 : index
    %6 = vector.load %arg3[%c16, %c0_7] : memref<2240x32xbf16, #tpu.memory_space<vmem>>, vector<4x8xbf16>
    %cst_8 = arith.constant dense<0.000000e+00> : vector<4x128xf32>
    %7 = tpu.matmul %6, %3, %cst_8 {dimension_numbers = #tpu.dot_dimension_numbers<[1], [0], [0], [1], [0, 0, 1, 1], [], []>} : vector<4x8xbf16>, vector<8x128xbf16>, vector<4x128xf32> -> vector<4x128xf32>
    %c64 = arith.constant 64 : index
    %c0_9 = arith.constant 0 : index
    %8 = vector.load %arg3[%c64, %c0_9] : memref<2240x32xbf16, #tpu.memory_space<vmem>>, vector<128x8xbf16>
    %9 = arith.truncf %1 : vector<8x128xf32> to vector<8x128xbf16>
    %cst_10 = arith.constant dense<0.000000e+00> : vector<128x128xf32>
    %10 = tpu.matmul %8, %9, %cst_10 {dimension_numbers = #tpu.dot_dimension_numbers<[1], [0], [0], [1], [0, 0, 1, 1], [], []>} : vector<128x8xbf16>, vector<8x128xbf16>, vector<128x128xf32> -> vector<128x128xf32>
    %c32 = arith.constant 32 : index
    %c0_11 = arith.constant 0 : index
    %11 = vector.load %arg4[%c32, %c0_11] : memref<816x1xf32, #tpu.memory_space<vmem>>, vector<128x1xf32>
    %12 = vector.broadcast %11 : vector<128x1xf32> to vector<128x128xf32>
    %13 = arith.addf %10, %12 : vector<128x128xf32>
    %c32_12 = arith.constant 32 : index
    %c0_13 = arith.constant 0 : index
    %14 = vector.load %arg3[%c32_12, %c0_13] : memref<2240x32xbf16, #tpu.memory_space<vmem>>, vector<32x4xbf16>
    %15 = arith.truncf %5 : vector<4x128xf32> to vector<4x128xbf16>
    %cst_14 = arith.constant dense<0.000000e+00> : vector<32x128xf32>
    %16 = tpu.matmul %14, %15, %cst_14 {dimension_numbers = #tpu.dot_dimension_numbers<[1], [0], [0], [1], [0, 0, 1, 1], [], []>} : vector<32x4xbf16>, vector<4x128xbf16>, vector<32x128xf32> -> vector<32x128xf32>
    %c0_15 = arith.constant 0 : index
    %c0_16 = arith.constant 0 : index
    %17 = vector.load %arg4[%c0_15, %c0_16] : memref<816x1xf32, #tpu.memory_space<vmem>>, vector<32x1xf32>
    %18 = vector.broadcast %17 : vector<32x1xf32> to vector<32x128xf32>
    %19 = arith.addf %16, %18 : vector<32x128xf32>
    %20 = vector.broadcast %0 : vector<1x128xf32> to vector<32x128xf32>
    %21 = arith.mulf %19, %20 : vector<32x128xf32>
    %22 = vector.extract_strided_slice %13 {offsets = [0, 0], sizes = [64, 128], strides = [1, 1]} : vector<128x128xf32> to vector<64x128xf32>
    %c1_i32 = arith.constant 1 : i32
    %23 = tpu.dynamic_rotate %21 by %c1_i32 dim 1 : vector<32x128xf32>, i32 -> vector<32x128xf32>
    %c192 = arith.constant 192 : index
    %c0_17 = arith.constant 0 : index
    %24 = vector.load %arg3[%c192, %c0_17] : memref<2240x32xbf16, #tpu.memory_space<vmem>>, vector<64x32xbf16>
    %25 = arith.truncf %23 : vector<32x128xf32> to vector<32x128xbf16>
    %cst_18 = arith.constant dense<0.000000e+00> : vector<64x128xf32>
    %26 = tpu.matmul %24, %25, %cst_18 {dimension_numbers = #tpu.dot_dimension_numbers<[1], [0], [0], [1], [0, 0, 1, 1], [], []>} : vector<64x32xbf16>, vector<32x128xbf16>, vector<64x128xf32> -> vector<64x128xf32>
    %27 = arith.addf %22, %26 : vector<64x128xf32>
    %c256 = arith.constant 256 : index
    %c0_19 = arith.constant 0 : index
    %28 = vector.load %arg3[%c256, %c0_19] : memref<2240x32xbf16, #tpu.memory_space<vmem>>, vector<64x32xbf16>
    %29 = arith.truncf %21 : vector<32x128xf32> to vector<32x128xbf16>
    %cst_20 = arith.constant dense<0.000000e+00> : vector<64x128xf32>
    %30 = tpu.matmul %28, %29, %cst_20 {dimension_numbers = #tpu.dot_dimension_numbers<[1], [0], [0], [1], [0, 0, 1, 1], [], []>} : vector<64x32xbf16>, vector<32x128xbf16>, vector<64x128xf32> -> vector<64x128xf32>
    %31 = arith.addf %27, %30 : vector<64x128xf32>
    %c127_i32 = arith.constant 127 : i32
    %32 = tpu.dynamic_rotate %21 by %c127_i32 dim 1 : vector<32x128xf32>, i32 -> vector<32x128xf32>
    %c320 = arith.constant 320 : index
    %c0_21 = arith.constant 0 : index
    %33 = vector.load %arg3[%c320, %c0_21] : memref<2240x32xbf16, #tpu.memory_space<vmem>>, vector<64x32xbf16>
    %34 = arith.truncf %32 : vector<32x128xf32> to vector<32x128xbf16>
    %cst_22 = arith.constant dense<0.000000e+00> : vector<64x128xf32>
    %35 = tpu.matmul %33, %34, %cst_22 {dimension_numbers = #tpu.dot_dimension_numbers<[1], [0], [0], [1], [0, 0, 1, 1], [], []>} : vector<64x32xbf16>, vector<32x128xbf16>, vector<64x128xf32> -> vector<64x128xf32>
    %36 = arith.addf %31, %35 : vector<64x128xf32>
    %37 = vector.extract_strided_slice %36 {offsets = [0, 0], sizes = [32, 128], strides = [1, 1]} : vector<64x128xf32> to vector<32x128xf32>
    %38 = math.tanh %37 : vector<32x128xf32>
    %39 = vector.extract_strided_slice %36 {offsets = [32, 0], sizes = [32, 128], strides = [1, 1]} : vector<64x128xf32> to vector<32x128xf32>
    %40 = arith.negf %39 : vector<32x128xf32>
    %41 = math.exp %40 : vector<32x128xf32>
    %cst_23 = arith.constant 1.000000e+00 : f32
    %42 = vector.broadcast %cst_23 : f32 to vector<32x128xf32>
    %43 = arith.addf %42, %41 : vector<32x128xf32>
    %44 = arith.divf %42, %43 : vector<32x128xf32>
    %45 = arith.mulf %38, %44 : vector<32x128xf32>
    %c384 = arith.constant 384 : index
    %c0_24 = arith.constant 0 : index
    %46 = vector.load %arg3[%c384, %c0_24] : memref<2240x32xbf16, #tpu.memory_space<vmem>>, vector<64x32xbf16>
    %47 = arith.truncf %45 : vector<32x128xf32> to vector<32x128xbf16>
    %cst_25 = arith.constant dense<0.000000e+00> : vector<64x128xf32>
    %48 = tpu.matmul %46, %47, %cst_25 {dimension_numbers = #tpu.dot_dimension_numbers<[1], [0], [0], [1], [0, 0, 1, 1], [], []>} : vector<64x32xbf16>, vector<32x128xbf16>, vector<64x128xf32> -> vector<64x128xf32>
    %c160 = arith.constant 160 : index
    %c0_26 = arith.constant 0 : index
    %49 = vector.load %arg4[%c160, %c0_26] : memref<816x1xf32, #tpu.memory_space<vmem>>, vector<64x1xf32>
    %50 = vector.broadcast %49 : vector<64x1xf32> to vector<64x128xf32>
    %51 = arith.addf %48, %50 : vector<64x128xf32>
    %52 = vector.extract_strided_slice %51 {offsets = [0, 0], sizes = [32, 128], strides = [1, 1]} : vector<64x128xf32> to vector<32x128xf32>
    %53 = arith.addf %19, %52 : vector<32x128xf32>
    %54 = vector.extract_strided_slice %51 {offsets = [32, 0], sizes = [32, 128], strides = [1, 1]} : vector<64x128xf32> to vector<32x128xf32>
    %55 = vector.broadcast %0 : vector<1x128xf32> to vector<32x128xf32>
    %56 = arith.mulf %53, %55 : vector<32x128xf32>
    %57 = vector.extract_strided_slice %13 {offsets = [64, 0], sizes = [64, 128], strides = [1, 1]} : vector<128x128xf32> to vector<64x128xf32>
    %c2_i32 = arith.constant 2 : i32
    %58 = tpu.dynamic_rotate %56 by %c2_i32 dim 1 : vector<32x128xf32>, i32 -> vector<32x128xf32>
    %c448 = arith.constant 448 : index
    %c0_27 = arith.constant 0 : index
    %59 = vector.load %arg3[%c448, %c0_27] : memref<2240x32xbf16, #tpu.memory_space<vmem>>, vector<64x32xbf16>
    %60 = arith.truncf %58 : vector<32x128xf32> to vector<32x128xbf16>
    %cst_28 = arith.constant dense<0.000000e+00> : vector<64x128xf32>
    %61 = tpu.matmul %59, %60, %cst_28 {dimension_numbers = #tpu.dot_dimension_numbers<[1], [0], [0], [1], [0, 0, 1, 1], [], []>} : vector<64x32xbf16>, vector<32x128xbf16>, vector<64x128xf32> -> vector<64x128xf32>
    %62 = arith.addf %57, %61 : vector<64x128xf32>
    %c512 = arith.constant 512 : index
    %c0_29 = arith.constant 0 : index
    %63 = vector.load %arg3[%c512, %c0_29] : memref<2240x32xbf16, #tpu.memory_space<vmem>>, vector<64x32xbf16>
    %64 = arith.truncf %56 : vector<32x128xf32> to vector<32x128xbf16>
    %cst_30 = arith.constant dense<0.000000e+00> : vector<64x128xf32>
    %65 = tpu.matmul %63, %64, %cst_30 {dimension_numbers = #tpu.dot_dimension_numbers<[1], [0], [0], [1], [0, 0, 1, 1], [], []>} : vector<64x32xbf16>, vector<32x128xbf16>, vector<64x128xf32> -> vector<64x128xf32>
    %66 = arith.addf %62, %65 : vector<64x128xf32>
    %c126_i32 = arith.constant 126 : i32
    %67 = tpu.dynamic_rotate %56 by %c126_i32 dim 1 : vector<32x128xf32>, i32 -> vector<32x128xf32>
    %c576 = arith.constant 576 : index
    %c0_31 = arith.constant 0 : index
    %68 = vector.load %arg3[%c576, %c0_31] : memref<2240x32xbf16, #tpu.memory_space<vmem>>, vector<64x32xbf16>
    %69 = arith.truncf %67 : vector<32x128xf32> to vector<32x128xbf16>
    %cst_32 = arith.constant dense<0.000000e+00> : vector<64x128xf32>
    %70 = tpu.matmul %68, %69, %cst_32 {dimension_numbers = #tpu.dot_dimension_numbers<[1], [0], [0], [1], [0, 0, 1, 1], [], []>} : vector<64x32xbf16>, vector<32x128xbf16>, vector<64x128xf32> -> vector<64x128xf32>
    %71 = arith.addf %66, %70 : vector<64x128xf32>
    %72 = vector.extract_strided_slice %71 {offsets = [0, 0], sizes = [32, 128], strides = [1, 1]} : vector<64x128xf32> to vector<32x128xf32>
    %73 = math.tanh %72 : vector<32x128xf32>
    %74 = vector.extract_strided_slice %71 {offsets = [32, 0], sizes = [32, 128], strides = [1, 1]} : vector<64x128xf32> to vector<32x128xf32>
    %75 = arith.negf %74 : vector<32x128xf32>
    %76 = math.exp %75 : vector<32x128xf32>
    %cst_33 = arith.constant 1.000000e+00 : f32
    %77 = vector.broadcast %cst_33 : f32 to vector<32x128xf32>
    %78 = arith.addf %77, %76 : vector<32x128xf32>
    %79 = arith.divf %77, %78 : vector<32x128xf32>
    %80 = arith.mulf %73, %79 : vector<32x128xf32>
    %c640 = arith.constant 640 : index
    %c0_34 = arith.constant 0 : index
    %81 = vector.load %arg3[%c640, %c0_34] : memref<2240x32xbf16, #tpu.memory_space<vmem>>, vector<32x32xbf16>
    %82 = arith.truncf %80 : vector<32x128xf32> to vector<32x128xbf16>
    %cst_35 = arith.constant dense<0.000000e+00> : vector<32x128xf32>
    %83 = tpu.matmul %81, %82, %cst_35 {dimension_numbers = #tpu.dot_dimension_numbers<[1], [0], [0], [1], [0, 0, 1, 1], [], []>} : vector<32x32xbf16>, vector<32x128xbf16>, vector<32x128xf32> -> vector<32x128xf32>
    %c224 = arith.constant 224 : index
    %c0_36 = arith.constant 0 : index
    %84 = vector.load %arg4[%c224, %c0_36] : memref<816x1xf32, #tpu.memory_space<vmem>>, vector<32x1xf32>
    %85 = vector.broadcast %84 : vector<32x1xf32> to vector<32x128xf32>
    %86 = arith.addf %83, %85 : vector<32x128xf32>
    %87 = arith.addf %54, %86 : vector<32x128xf32>
    %c672 = arith.constant 672 : index
    %c0_37 = arith.constant 0 : index
    %88 = vector.load %arg3[%c672, %c0_37] : memref<2240x32xbf16, #tpu.memory_space<vmem>>, vector<4x32xbf16>
    %89 = arith.truncf %87 : vector<32x128xf32> to vector<32x128xbf16>
    %cst_38 = arith.constant dense<0.000000e+00> : vector<4x128xf32>
    %90 = tpu.matmul %88, %89, %cst_38 {dimension_numbers = #tpu.dot_dimension_numbers<[1], [0], [0], [1], [0, 0, 1, 1], [], []>} : vector<4x32xbf16>, vector<32x128xbf16>, vector<4x128xf32> -> vector<4x128xf32>
    %c256_39 = arith.constant 256 : index
    %c0_40 = arith.constant 0 : index
    %91 = vector.load %arg4[%c256_39, %c0_40] : memref<816x1xf32, #tpu.memory_space<vmem>>, vector<4x1xf32>
    %92 = vector.broadcast %91 : vector<4x1xf32> to vector<4x128xf32>
    %93 = arith.addf %90, %92 : vector<4x128xf32>
    %c688 = arith.constant 688 : index
    %c0_41 = arith.constant 0 : index
    %94 = vector.load %arg3[%c688, %c0_41] : memref<2240x32xbf16, #tpu.memory_space<vmem>>, vector<4x32xbf16>
    %95 = arith.truncf %87 : vector<32x128xf32> to vector<32x128xbf16>
    %cst_42 = arith.constant dense<0.000000e+00> : vector<4x128xf32>
    %96 = tpu.matmul %94, %95, %cst_42 {dimension_numbers = #tpu.dot_dimension_numbers<[1], [0], [0], [1], [0, 0, 1, 1], [], []>} : vector<4x32xbf16>, vector<32x128xbf16>, vector<4x128xf32> -> vector<4x128xf32>
    %c264 = arith.constant 264 : index
    %c0_43 = arith.constant 0 : index
    %97 = vector.load %arg4[%c264, %c0_43] : memref<816x1xf32, #tpu.memory_space<vmem>>, vector<4x1xf32>
    %98 = vector.broadcast %97 : vector<4x1xf32> to vector<4x128xf32>
    %99 = arith.addf %96, %98 : vector<4x128xf32>
    %100 = vector.broadcast %0 : vector<1x128xf32> to vector<4x128xf32>
    %101 = arith.mulf %99, %100 : vector<4x128xf32>
    %102 = math.exp %101 : vector<4x128xf32>
    %103 = arith.mulf %7, %102 : vector<4x128xf32>
    %104 = arith.addf %103, %93 : vector<4x128xf32>
    %105 = arith.cmpf one, %104, %104 : vector<4x128xf32>
    %cst_44 = arith.constant 0.000000e+00 : f32
    %106 = vector.broadcast %cst_44 : f32 to vector<4x128xf32>
    %107 = arith.select %105, %106, %104 : vector<4x128xi1>, vector<4x128xf32>
    %108 = arith.cmpf one, %5, %5 : vector<4x128xf32>
    %cst_45 = arith.constant 0.000000e+00 : f32
    %109 = vector.broadcast %cst_45 : f32 to vector<4x128xf32>
    %110 = arith.select %108, %109, %5 : vector<4x128xi1>, vector<4x128xf32>
    %cst_46 = arith.constant dense<0.000000e+00> : vector<128xf32>
    %111 = vector.multi_reduction <add>, %101, %cst_46 [0] : vector<4x128xf32> to vector<128xf32>
    %112 = vector.shape_cast %111 : vector<128xf32> to vector<1x128xf32>
    %c0_47 = arith.constant 0 : index
    %c0_48 = arith.constant 0 : index
    %113 = vector.load %arg6[%c0_47, %c0_48] : memref<3x128xf32, #tpu.memory_space<vmem>>, vector<1x128xf32>
    tpu.vector_store %arg6[%c0_47, %c0_48], %112 {strides = array<i32>} : memref<3x128xf32, #tpu.memory_space<vmem>>, vector<1x128xf32>,
    %114 = arith.truncf %110 : vector<4x128xf32> to vector<4x128xbf16>
    %115 = arith.truncf %107 : vector<4x128xf32> to vector<4x128xbf16>
    %c704 = arith.constant 704 : index
    %c0_49 = arith.constant 0 : index
    %116 = vector.load %arg3[%c704, %c0_49] : memref<2240x32xbf16, #tpu.memory_space<vmem>>, vector<2x4xbf16>
    %cst_50 = arith.constant dense<0.000000e+00> : vector<2x128xf32>
    %117 = tpu.matmul %116, %114, %cst_50 {dimension_numbers = #tpu.dot_dimension_numbers<[1], [0], [0], [1], [0, 0, 1, 1], [], []>} : vector<2x4xbf16>, vector<4x128xbf16>, vector<2x128xf32> -> vector<2x128xf32>
    %c720 = arith.constant 720 : index
    %c0_51 = arith.constant 0 : index
    %118 = vector.load %arg3[%c720, %c0_51] : memref<2240x32xbf16, #tpu.memory_space<vmem>>, vector<2x4xbf16>
    %cst_52 = arith.constant dense<0.000000e+00> : vector<2x128xf32>
    %119 = tpu.matmul %118, %115, %cst_52 {dimension_numbers = #tpu.dot_dimension_numbers<[1], [0], [0], [1], [0, 0, 1, 1], [], []>} : vector<2x4xbf16>, vector<4x128xbf16>, vector<2x128xf32> -> vector<2x128xf32>
    %120 = arith.addf %117, %119 : vector<2x128xf32>
    %c736 = arith.constant 736 : index
    %c0_53 = arith.constant 0 : index
    %121 = vector.load %arg3[%c736, %c0_53] : memref<2240x32xbf16, #tpu.memory_space<vmem>>, vector<2x4xbf16>
    %cst_54 = arith.constant dense<0.000000e+00> : vector<2x128xf32>
    %122 = tpu.matmul %121, %114, %cst_54 {dimension_numbers = #tpu.dot_dimension_numbers<[1], [0], [0], [1], [0, 0, 1, 1], [], []>} : vector<2x4xbf16>, vector<4x128xbf16>, vector<2x128xf32> -> vector<2x128xf32>
    %c752 = arith.constant 752 : index
    %c0_55 = arith.constant 0 : index
    %123 = vector.load %arg3[%c752, %c0_55] : memref<2240x32xbf16, #tpu.memory_space<vmem>>, vector<2x4xbf16>
    %cst_56 = arith.constant dense<0.000000e+00> : vector<2x128xf32>
    %124 = tpu.matmul %123, %115, %cst_56 {dimension_numbers = #tpu.dot_dimension_numbers<[1], [0], [0], [1], [0, 0, 1, 1], [], []>} : vector<2x4xbf16>, vector<4x128xbf16>, vector<2x128xf32> -> vector<2x128xf32>
    %125 = arith.addf %122, %124 : vector<2x128xf32>
    %c768 = arith.constant 768 : index
    %c0_57 = arith.constant 0 : index
    %126 = vector.load %arg3[%c768, %c0_57] : memref<2240x32xbf16, #tpu.memory_space<vmem>>, vector<4x4xbf16>
    %cst_58 = arith.constant dense<0.000000e+00> : vector<4x128xf32>
    %127 = tpu.matmul %126, %114, %cst_58 {dimension_numbers = #tpu.dot_dimension_numbers<[1], [0], [0], [1], [0, 0, 1, 1], [], []>} : vector<4x4xbf16>, vector<4x128xbf16>, vector<4x128xf32> -> vector<4x128xf32>
    %c784 = arith.constant 784 : index
    %c0_59 = arith.constant 0 : index
    %128 = vector.load %arg3[%c784, %c0_59] : memref<2240x32xbf16, #tpu.memory_space<vmem>>, vector<4x4xbf16>
    %cst_60 = arith.constant dense<0.000000e+00> : vector<4x128xf32>
    %129 = tpu.matmul %128, %115, %cst_60 {dimension_numbers = #tpu.dot_dimension_numbers<[1], [0], [0], [1], [0, 0, 1, 1], [], []>} : vector<4x4xbf16>, vector<4x128xbf16>, vector<4x128xf32> -> vector<4x128xf32>
    %130 = arith.addf %127, %129 : vector<4x128xf32>
    %c864 = arith.constant 864 : index
    %c0_61 = arith.constant 0 : index
    %131 = vector.load %arg3[%c864, %c0_61] : memref<2240x32xbf16, #tpu.memory_space<vmem>>, vector<128x8xbf16>
    %132 = arith.truncf %1 : vector<8x128xf32> to vector<8x128xbf16>
    %cst_62 = arith.constant dense<0.000000e+00> : vector<128x128xf32>
    %133 = tpu.matmul %131, %132, %cst_62 {dimension_numbers = #tpu.dot_dimension_numbers<[1], [0], [0], [1], [0, 0, 1, 1], [], []>} : vector<128x8xbf16>, vector<8x128xbf16>, vector<128x128xf32> -> vector<128x128xf32>
    %c304 = arith.constant 304 : index
    %c0_63 = arith.constant 0 : index
    %134 = vector.load %arg4[%c304, %c0_63] : memref<816x1xf32, #tpu.memory_space<vmem>>, vector<128x1xf32>
    %135 = vector.broadcast %134 : vector<128x1xf32> to vector<128x128xf32>
    %136 = arith.addf %133, %135 : vector<128x128xf32>
    %c800 = arith.constant 800 : index
    %c0_64 = arith.constant 0 : index
    %137 = vector.load %arg3[%c800, %c0_64] : memref<2240x32xbf16, #tpu.memory_space<vmem>>, vector<32x2xbf16>
    %138 = arith.truncf %120 : vector<2x128xf32> to vector<2x128xbf16>
    %cst_65 = arith.constant dense<0.000000e+00> : vector<32x128xf32>
    %139 = tpu.matmul %137, %138, %cst_65 {dimension_numbers = #tpu.dot_dimension_numbers<[1], [0], [0], [1], [0, 0, 1, 1], [], []>} : vector<32x2xbf16>, vector<2x128xbf16>, vector<32x128xf32> -> vector<32x128xf32>
    %c832 = arith.constant 832 : index
    %c0_66 = arith.constant 0 : index
    %140 = vector.load %arg3[%c832, %c0_66] : memref<2240x32xbf16, #tpu.memory_space<vmem>>, vector<32x2xbf16>
    %141 = arith.truncf %125 : vector<2x128xf32> to vector<2x128xbf16>
    %cst_67 = arith.constant dense<0.000000e+00> : vector<32x128xf32>
    %142 = tpu.matmul %140, %141, %cst_67 {dimension_numbers = #tpu.dot_dimension_numbers<[1], [0], [0], [1], [0, 0, 1, 1], [], []>} : vector<32x2xbf16>, vector<2x128xbf16>, vector<32x128xf32> -> vector<32x128xf32>
    %143 = arith.addf %139, %142 : vector<32x128xf32>
    %c272 = arith.constant 272 : index
    %c0_68 = arith.constant 0 : index
    %144 = vector.load %arg4[%c272, %c0_68] : memref<816x1xf32, #tpu.memory_space<vmem>>, vector<32x1xf32>
    %145 = vector.broadcast %144 : vector<32x1xf32> to vector<32x128xf32>
    %146 = arith.addf %143, %145 : vector<32x128xf32>
    %147 = vector.broadcast %0 : vector<1x128xf32> to vector<32x128xf32>
    %148 = arith.mulf %146, %147 : vector<32x128xf32>
    %149 = vector.extract_strided_slice %136 {offsets = [0, 0], sizes = [64, 128], strides = [1, 1]} : vector<128x128xf32> to vector<64x128xf32>
    %c1_i32_69 = arith.constant 1 : i32
    %150 = tpu.dynamic_rotate %148 by %c1_i32_69 dim 1 : vector<32x128xf32>, i32 -> vector<32x128xf32>
    %c992 = arith.constant 992 : index
    %c0_70 = arith.constant 0 : index
    %151 = vector.load %arg3[%c992, %c0_70] : memref<2240x32xbf16, #tpu.memory_space<vmem>>, vector<64x32xbf16>
    %152 = arith.truncf %150 : vector<32x128xf32> to vector<32x128xbf16>
    %cst_71 = arith.constant dense<0.000000e+00> : vector<64x128xf32>
    %153 = tpu.matmul %151, %152, %cst_71 {dimension_numbers = #tpu.dot_dimension_numbers<[1], [0], [0], [1], [0, 0, 1, 1], [], []>} : vector<64x32xbf16>, vector<32x128xbf16>, vector<64x128xf32> -> vector<64x128xf32>
    %154 = arith.addf %149, %153 : vector<64x128xf32>
    %c1056 = arith.constant 1056 : index
    %c0_72 = arith.constant 0 : index
    %155 = vector.load %arg3[%c1056, %c0_72] : memref<2240x32xbf16, #tpu.memory_space<vmem>>, vector<64x32xbf16>
    %156 = arith.truncf %148 : vector<32x128xf32> to vector<32x128xbf16>
    %cst_73 = arith.constant dense<0.000000e+00> : vector<64x128xf32>
    %157 = tpu.matmul %155, %156, %cst_73 {dimension_numbers = #tpu.dot_dimension_numbers<[1], [0], [0], [1], [0, 0, 1, 1], [], []>} : vector<64x32xbf16>, vector<32x128xbf16>, vector<64x128xf32> -> vector<64x128xf32>
    %158 = arith.addf %154, %157 : vector<64x128xf32>
    %c127_i32_74 = arith.constant 127 : i32
    %159 = tpu.dynamic_rotate %148 by %c127_i32_74 dim 1 : vector<32x128xf32>, i32 -> vector<32x128xf32>
    %c1120 = arith.constant 1120 : index
    %c0_75 = arith.constant 0 : index
    %160 = vector.load %arg3[%c1120, %c0_75] : memref<2240x32xbf16, #tpu.memory_space<vmem>>, vector<64x32xbf16>
    %161 = arith.truncf %159 : vector<32x128xf32> to vector<32x128xbf16>
    %cst_76 = arith.constant dense<0.000000e+00> : vector<64x128xf32>
    %162 = tpu.matmul %160, %161, %cst_76 {dimension_numbers = #tpu.dot_dimension_numbers<[1], [0], [0], [1], [0, 0, 1, 1], [], []>} : vector<64x32xbf16>, vector<32x128xbf16>, vector<64x128xf32> -> vector<64x128xf32>
    %163 = arith.addf %158, %162 : vector<64x128xf32>
    %164 = vector.extract_strided_slice %163 {offsets = [0, 0], sizes = [32, 128], strides = [1, 1]} : vector<64x128xf32> to vector<32x128xf32>
    %165 = math.tanh %164 : vector<32x128xf32>
    %166 = vector.extract_strided_slice %163 {offsets = [32, 0], sizes = [32, 128], strides = [1, 1]} : vector<64x128xf32> to vector<32x128xf32>
    %167 = arith.negf %166 : vector<32x128xf32>
    %168 = math.exp %167 : vector<32x128xf32>
    %cst_77 = arith.constant 1.000000e+00 : f32
    %169 = vector.broadcast %cst_77 : f32 to vector<32x128xf32>
    %170 = arith.addf %169, %168 : vector<32x128xf32>
    %171 = arith.divf %169, %170 : vector<32x128xf32>
    %172 = arith.mulf %165, %171 : vector<32x128xf32>
    %c1184 = arith.constant 1184 : index
    %c0_78 = arith.constant 0 : index
    %173 = vector.load %arg3[%c1184, %c0_78] : memref<2240x32xbf16, #tpu.memory_space<vmem>>, vector<64x32xbf16>
    %174 = arith.truncf %172 : vector<32x128xf32> to vector<32x128xbf16>
    %cst_79 = arith.constant dense<0.000000e+00> : vector<64x128xf32>
    %175 = tpu.matmul %173, %174, %cst_79 {dimension_numbers = #tpu.dot_dimension_numbers<[1], [0], [0], [1], [0, 0, 1, 1], [], []>} : vector<64x32xbf16>, vector<32x128xbf16>, vector<64x128xf32> -> vector<64x128xf32>
    %c432 = arith.constant 432 : index
    %c0_80 = arith.constant 0 : index
    %176 = vector.load %arg4[%c432, %c0_80] : memref<816x1xf32, #tpu.memory_space<vmem>>, vector<64x1xf32>
    %177 = vector.broadcast %176 : vector<64x1xf32> to vector<64x128xf32>
    %178 = arith.addf %175, %177 : vector<64x128xf32>
    %179 = vector.extract_strided_slice %178 {offsets = [0, 0], sizes = [32, 128], strides = [1, 1]} : vector<64x128xf32> to vector<32x128xf32>
    %180 = arith.addf %146, %179 : vector<32x128xf32>
    %181 = vector.extract_strided_slice %178 {offsets = [32, 0], sizes = [32, 128], strides = [1, 1]} : vector<64x128xf32> to vector<32x128xf32>
    %182 = vector.broadcast %0 : vector<1x128xf32> to vector<32x128xf32>
    %183 = arith.mulf %180, %182 : vector<32x128xf32>
    %184 = vector.extract_strided_slice %136 {offsets = [64, 0], sizes = [64, 128], strides = [1, 1]} : vector<128x128xf32> to vector<64x128xf32>
    %c2_i32_81 = arith.constant 2 : i32
    %185 = tpu.dynamic_rotate %183 by %c2_i32_81 dim 1 : vector<32x128xf32>, i32 -> vector<32x128xf32>
    %c1248 = arith.constant 1248 : index
    %c0_82 = arith.constant 0 : index
    %186 = vector.load %arg3[%c1248, %c0_82] : memref<2240x32xbf16, #tpu.memory_space<vmem>>, vector<64x32xbf16>
    %187 = arith.truncf %185 : vector<32x128xf32> to vector<32x128xbf16>
    %cst_83 = arith.constant dense<0.000000e+00> : vector<64x128xf32>
    %188 = tpu.matmul %186, %187, %cst_83 {dimension_numbers = #tpu.dot_dimension_numbers<[1], [0], [0], [1], [0, 0, 1, 1], [], []>} : vector<64x32xbf16>, vector<32x128xbf16>, vector<64x128xf32> -> vector<64x128xf32>
    %189 = arith.addf %184, %188 : vector<64x128xf32>
    %c1312 = arith.constant 1312 : index
    %c0_84 = arith.constant 0 : index
    %190 = vector.load %arg3[%c1312, %c0_84] : memref<2240x32xbf16, #tpu.memory_space<vmem>>, vector<64x32xbf16>
    %191 = arith.truncf %183 : vector<32x128xf32> to vector<32x128xbf16>
    %cst_85 = arith.constant dense<0.000000e+00> : vector<64x128xf32>
    %192 = tpu.matmul %190, %191, %cst_85 {dimension_numbers = #tpu.dot_dimension_numbers<[1], [0], [0], [1], [0, 0, 1, 1], [], []>} : vector<64x32xbf16>, vector<32x128xbf16>, vector<64x128xf32> -> vector<64x128xf32>
    %193 = arith.addf %189, %192 : vector<64x128xf32>
    %c126_i32_86 = arith.constant 126 : i32
    %194 = tpu.dynamic_rotate %183 by %c126_i32_86 dim 1 : vector<32x128xf32>, i32 -> vector<32x128xf32>
    %c1376 = arith.constant 1376 : index
    %c0_87 = arith.constant 0 : index
    %195 = vector.load %arg3[%c1376, %c0_87] : memref<2240x32xbf16, #tpu.memory_space<vmem>>, vector<64x32xbf16>
    %196 = arith.truncf %194 : vector<32x128xf32> to vector<32x128xbf16>
    %cst_88 = arith.constant dense<0.000000e+00> : vector<64x128xf32>
    %197 = tpu.matmul %195, %196, %cst_88 {dimension_numbers = #tpu.dot_dimension_numbers<[1], [0], [0], [1], [0, 0, 1, 1], [], []>} : vector<64x32xbf16>, vector<32x128xbf16>, vector<64x128xf32> -> vector<64x128xf32>
    %198 = arith.addf %193, %197 : vector<64x128xf32>
    %199 = vector.extract_strided_slice %198 {offsets = [0, 0], sizes = [32, 128], strides = [1, 1]} : vector<64x128xf32> to vector<32x128xf32>
    %200 = math.tanh %199 : vector<32x128xf32>
    %201 = vector.extract_strided_slice %198 {offsets = [32, 0], sizes = [32, 128], strides = [1, 1]} : vector<64x128xf32> to vector<32x128xf32>
    %202 = arith.negf %201 : vector<32x128xf32>
    %203 = math.exp %202 : vector<32x128xf32>
    %cst_89 = arith.constant 1.000000e+00 : f32
    %204 = vector.broadcast %cst_89 : f32 to vector<32x128xf32>
    %205 = arith.addf %204, %203 : vector<32x128xf32>
    %206 = arith.divf %204, %205 : vector<32x128xf32>
    %207 = arith.mulf %200, %206 : vector<32x128xf32>
    %c1440 = arith.constant 1440 : index
    %c0_90 = arith.constant 0 : index
    %208 = vector.load %arg3[%c1440, %c0_90] : memref<2240x32xbf16, #tpu.memory_space<vmem>>, vector<32x32xbf16>
    %209 = arith.truncf %207 : vector<32x128xf32> to vector<32x128xbf16>
    %cst_91 = arith.constant dense<0.000000e+00> : vector<32x128xf32>
    %210 = tpu.matmul %208, %209, %cst_91 {dimension_numbers = #tpu.dot_dimension_numbers<[1], [0], [0], [1], [0, 0, 1, 1], [], []>} : vector<32x32xbf16>, vector<32x128xbf16>, vector<32x128xf32> -> vector<32x128xf32>
    %c496 = arith.constant 496 : index
    %c0_92 = arith.constant 0 : index
    %211 = vector.load %arg4[%c496, %c0_92] : memref<816x1xf32, #tpu.memory_space<vmem>>, vector<32x1xf32>
    %212 = vector.broadcast %211 : vector<32x1xf32> to vector<32x128xf32>
    %213 = arith.addf %210, %212 : vector<32x128xf32>
    %214 = arith.addf %181, %213 : vector<32x128xf32>
    %c1472 = arith.constant 1472 : index
    %c0_93 = arith.constant 0 : index
    %215 = vector.load %arg3[%c1472, %c0_93] : memref<2240x32xbf16, #tpu.memory_space<vmem>>, vector<4x32xbf16>
    %216 = arith.truncf %214 : vector<32x128xf32> to vector<32x128xbf16>
    %cst_94 = arith.constant dense<0.000000e+00> : vector<4x128xf32>
    %217 = tpu.matmul %215, %216, %cst_94 {dimension_numbers = #tpu.dot_dimension_numbers<[1], [0], [0], [1], [0, 0, 1, 1], [], []>} : vector<4x32xbf16>, vector<32x128xbf16>, vector<4x128xf32> -> vector<4x128xf32>
    %c528 = arith.constant 528 : index
    %c0_95 = arith.constant 0 : index
    %218 = vector.load %arg4[%c528, %c0_95] : memref<816x1xf32, #tpu.memory_space<vmem>>, vector<4x1xf32>
    %219 = vector.broadcast %218 : vector<4x1xf32> to vector<4x128xf32>
    %220 = arith.addf %217, %219 : vector<4x128xf32>
    %c1488 = arith.constant 1488 : index
    %c0_96 = arith.constant 0 : index
    %221 = vector.load %arg3[%c1488, %c0_96] : memref<2240x32xbf16, #tpu.memory_space<vmem>>, vector<4x32xbf16>
    %222 = arith.truncf %214 : vector<32x128xf32> to vector<32x128xbf16>
    %cst_97 = arith.constant dense<0.000000e+00> : vector<4x128xf32>
    %223 = tpu.matmul %221, %222, %cst_97 {dimension_numbers = #tpu.dot_dimension_numbers<[1], [0], [0], [1], [0, 0, 1, 1], [], []>} : vector<4x32xbf16>, vector<32x128xbf16>, vector<4x128xf32> -> vector<4x128xf32>
    %c536 = arith.constant 536 : index
    %c0_98 = arith.constant 0 : index
    %224 = vector.load %arg4[%c536, %c0_98] : memref<816x1xf32, #tpu.memory_space<vmem>>, vector<4x1xf32>
    %225 = vector.broadcast %224 : vector<4x1xf32> to vector<4x128xf32>
    %226 = arith.addf %223, %225 : vector<4x128xf32>
    %227 = vector.broadcast %0 : vector<1x128xf32> to vector<4x128xf32>
    %228 = arith.mulf %226, %227 : vector<4x128xf32>
    %229 = math.exp %228 : vector<4x128xf32>
    %230 = arith.mulf %130, %229 : vector<4x128xf32>
    %231 = arith.addf %230, %220 : vector<4x128xf32>
    %232 = arith.cmpf one, %231, %231 : vector<4x128xf32>
    %cst_99 = arith.constant 0.000000e+00 : f32
    %233 = vector.broadcast %cst_99 : f32 to vector<4x128xf32>
    %234 = arith.select %232, %233, %231 : vector<4x128xi1>, vector<4x128xf32>
    %235 = arith.cmpf one, %120, %120 : vector<2x128xf32>
    %cst_100 = arith.constant 0.000000e+00 : f32
    %236 = vector.broadcast %cst_100 : f32 to vector<2x128xf32>
    %237 = arith.select %235, %236, %120 : vector<2x128xi1>, vector<2x128xf32>
    %238 = arith.cmpf one, %125, %125 : vector<2x128xf32>
    %cst_101 = arith.constant 0.000000e+00 : f32
    %239 = vector.broadcast %cst_101 : f32 to vector<2x128xf32>
    %240 = arith.select %238, %239, %125 : vector<2x128xi1>, vector<2x128xf32>
    %cst_102 = arith.constant dense<0.000000e+00> : vector<128xf32>
    %241 = vector.multi_reduction <add>, %228, %cst_102 [0] : vector<4x128xf32> to vector<128xf32>
    %242 = vector.shape_cast %241 : vector<128xf32> to vector<1x128xf32>
    %c1 = arith.constant 1 : index
    %c0_103 = arith.constant 0 : index
    %243 = vector.load %arg6[%c1, %c0_103] : memref<3x128xf32, #tpu.memory_space<vmem>>, vector<1x128xf32>
    tpu.vector_store %arg6[%c1, %c0_103], %242 {strides = array<i32>} : memref<3x128xf32, #tpu.memory_space<vmem>>, vector<1x128xf32>,
    %c0_104 = arith.constant 0 : index
    %c0_105 = arith.constant 0 : index
    %244 = vector.load %arg5[%c0_104, %c0_105] : memref<8x128xf32, #tpu.memory_space<vmem>>, vector<2x128xf32>
    tpu.vector_store %arg5[%c0_104, %c0_105], %237 {strides = array<i32>} : memref<8x128xf32, #tpu.memory_space<vmem>>, vector<2x128xf32>,
    %245 = arith.truncf %240 : vector<2x128xf32> to vector<2x128xbf16>
    %246 = arith.truncf %234 : vector<4x128xf32> to vector<4x128xbf16>
    %c1504 = arith.constant 1504 : index
    %c0_106 = arith.constant 0 : index
    %247 = vector.load %arg3[%c1504, %c0_106] : memref<2240x32xbf16, #tpu.memory_space<vmem>>, vector<3x2xbf16>
    %cst_107 = arith.constant dense<0.000000e+00> : vector<3x128xf32>
    %248 = tpu.matmul %247, %245, %cst_107 {dimension_numbers = #tpu.dot_dimension_numbers<[1], [0], [0], [1], [0, 0, 1, 1], [], []>} : vector<3x2xbf16>, vector<2x128xbf16>, vector<3x128xf32> -> vector<3x128xf32>
    %c1520 = arith.constant 1520 : index
    %c0_108 = arith.constant 0 : index
    %249 = vector.load %arg3[%c1520, %c0_108] : memref<2240x32xbf16, #tpu.memory_space<vmem>>, vector<3x4xbf16>
    %cst_109 = arith.constant dense<0.000000e+00> : vector<3x128xf32>
    %250 = tpu.matmul %249, %246, %cst_109 {dimension_numbers = #tpu.dot_dimension_numbers<[1], [0], [0], [1], [0, 0, 1, 1], [], []>} : vector<3x4xbf16>, vector<4x128xbf16>, vector<3x128xf32> -> vector<3x128xf32>
    %251 = arith.addf %248, %250 : vector<3x128xf32>
    %c1536 = arith.constant 1536 : index
    %c0_110 = arith.constant 0 : index
    %252 = vector.load %arg3[%c1536, %c0_110] : memref<2240x32xbf16, #tpu.memory_space<vmem>>, vector<3x2xbf16>
    %cst_111 = arith.constant dense<0.000000e+00> : vector<3x128xf32>
    %253 = tpu.matmul %252, %245, %cst_111 {dimension_numbers = #tpu.dot_dimension_numbers<[1], [0], [0], [1], [0, 0, 1, 1], [], []>} : vector<3x2xbf16>, vector<2x128xbf16>, vector<3x128xf32> -> vector<3x128xf32>
    %c1552 = arith.constant 1552 : index
    %c0_112 = arith.constant 0 : index
    %254 = vector.load %arg3[%c1552, %c0_112] : memref<2240x32xbf16, #tpu.memory_space<vmem>>, vector<3x4xbf16>
    %cst_113 = arith.constant dense<0.000000e+00> : vector<3x128xf32>
    %255 = tpu.matmul %254, %246, %cst_113 {dimension_numbers = #tpu.dot_dimension_numbers<[1], [0], [0], [1], [0, 0, 1, 1], [], []>} : vector<3x4xbf16>, vector<4x128xbf16>, vector<3x128xf32> -> vector<3x128xf32>
    %256 = arith.addf %253, %255 : vector<3x128xf32>
    %c1600 = arith.constant 1600 : index
    %c0_114 = arith.constant 0 : index
    %257 = vector.load %arg3[%c1600, %c0_114] : memref<2240x32xbf16, #tpu.memory_space<vmem>>, vector<128x8xbf16>
    %258 = arith.truncf %1 : vector<8x128xf32> to vector<8x128xbf16>
    %cst_115 = arith.constant dense<0.000000e+00> : vector<128x128xf32>
    %259 = tpu.matmul %257, %258, %cst_115 {dimension_numbers = #tpu.dot_dimension_numbers<[1], [0], [0], [1], [0, 0, 1, 1], [], []>} : vector<128x8xbf16>, vector<8x128xbf16>, vector<128x128xf32> -> vector<128x128xf32>
    %c576_116 = arith.constant 576 : index
    %c0_117 = arith.constant 0 : index
    %260 = vector.load %arg4[%c576_116, %c0_117] : memref<816x1xf32, #tpu.memory_space<vmem>>, vector<128x1xf32>
    %261 = vector.broadcast %260 : vector<128x1xf32> to vector<128x128xf32>
    %262 = arith.addf %259, %261 : vector<128x128xf32>
    %c1568 = arith.constant 1568 : index
    %c0_118 = arith.constant 0 : index
    %263 = vector.load %arg3[%c1568, %c0_118] : memref<2240x32xbf16, #tpu.memory_space<vmem>>, vector<32x3xbf16>
    %264 = arith.truncf %251 : vector<3x128xf32> to vector<3x128xbf16>
    %cst_119 = arith.constant dense<0.000000e+00> : vector<32x128xf32>
    %265 = tpu.matmul %263, %264, %cst_119 {dimension_numbers = #tpu.dot_dimension_numbers<[1], [0], [0], [1], [0, 0, 1, 1], [], []>} : vector<32x3xbf16>, vector<3x128xbf16>, vector<32x128xf32> -> vector<32x128xf32>
    %c544 = arith.constant 544 : index
    %c0_120 = arith.constant 0 : index
    %266 = vector.load %arg4[%c544, %c0_120] : memref<816x1xf32, #tpu.memory_space<vmem>>, vector<32x1xf32>
    %267 = vector.broadcast %266 : vector<32x1xf32> to vector<32x128xf32>
    %268 = arith.addf %265, %267 : vector<32x128xf32>
    %269 = vector.broadcast %0 : vector<1x128xf32> to vector<32x128xf32>
    %270 = arith.mulf %268, %269 : vector<32x128xf32>
    %271 = vector.extract_strided_slice %262 {offsets = [0, 0], sizes = [64, 128], strides = [1, 1]} : vector<128x128xf32> to vector<64x128xf32>
    %c1_i32_121 = arith.constant 1 : i32
    %272 = tpu.dynamic_rotate %270 by %c1_i32_121 dim 1 : vector<32x128xf32>, i32 -> vector<32x128xf32>
    %c1728 = arith.constant 1728 : index
    %c0_122 = arith.constant 0 : index
    %273 = vector.load %arg3[%c1728, %c0_122] : memref<2240x32xbf16, #tpu.memory_space<vmem>>, vector<64x32xbf16>
    %274 = arith.truncf %272 : vector<32x128xf32> to vector<32x128xbf16>
    %cst_123 = arith.constant dense<0.000000e+00> : vector<64x128xf32>
    %275 = tpu.matmul %273, %274, %cst_123 {dimension_numbers = #tpu.dot_dimension_numbers<[1], [0], [0], [1], [0, 0, 1, 1], [], []>} : vector<64x32xbf16>, vector<32x128xbf16>, vector<64x128xf32> -> vector<64x128xf32>
    %276 = arith.addf %271, %275 : vector<64x128xf32>
    %c1792 = arith.constant 1792 : index
    %c0_124 = arith.constant 0 : index
    %277 = vector.load %arg3[%c1792, %c0_124] : memref<2240x32xbf16, #tpu.memory_space<vmem>>, vector<64x32xbf16>
    %278 = arith.truncf %270 : vector<32x128xf32> to vector<32x128xbf16>
    %cst_125 = arith.constant dense<0.000000e+00> : vector<64x128xf32>
    %279 = tpu.matmul %277, %278, %cst_125 {dimension_numbers = #tpu.dot_dimension_numbers<[1], [0], [0], [1], [0, 0, 1, 1], [], []>} : vector<64x32xbf16>, vector<32x128xbf16>, vector<64x128xf32> -> vector<64x128xf32>
    %280 = arith.addf %276, %279 : vector<64x128xf32>
    %c127_i32_126 = arith.constant 127 : i32
    %281 = tpu.dynamic_rotate %270 by %c127_i32_126 dim 1 : vector<32x128xf32>, i32 -> vector<32x128xf32>
    %c1856 = arith.constant 1856 : index
    %c0_127 = arith.constant 0 : index
    %282 = vector.load %arg3[%c1856, %c0_127] : memref<2240x32xbf16, #tpu.memory_space<vmem>>, vector<64x32xbf16>
    %283 = arith.truncf %281 : vector<32x128xf32> to vector<32x128xbf16>
    %cst_128 = arith.constant dense<0.000000e+00> : vector<64x128xf32>
    %284 = tpu.matmul %282, %283, %cst_128 {dimension_numbers = #tpu.dot_dimension_numbers<[1], [0], [0], [1], [0, 0, 1, 1], [], []>} : vector<64x32xbf16>, vector<32x128xbf16>, vector<64x128xf32> -> vector<64x128xf32>
    %285 = arith.addf %280, %284 : vector<64x128xf32>
    %286 = vector.extract_strided_slice %285 {offsets = [0, 0], sizes = [32, 128], strides = [1, 1]} : vector<64x128xf32> to vector<32x128xf32>
    %287 = math.tanh %286 : vector<32x128xf32>
    %288 = vector.extract_strided_slice %285 {offsets = [32, 0], sizes = [32, 128], strides = [1, 1]} : vector<64x128xf32> to vector<32x128xf32>
    %289 = arith.negf %288 : vector<32x128xf32>
    %290 = math.exp %289 : vector<32x128xf32>
    %cst_129 = arith.constant 1.000000e+00 : f32
    %291 = vector.broadcast %cst_129 : f32 to vector<32x128xf32>
    %292 = arith.addf %291, %290 : vector<32x128xf32>
    %293 = arith.divf %291, %292 : vector<32x128xf32>
    %294 = arith.mulf %287, %293 : vector<32x128xf32>
    %c1920 = arith.constant 1920 : index
    %c0_130 = arith.constant 0 : index
    %295 = vector.load %arg3[%c1920, %c0_130] : memref<2240x32xbf16, #tpu.memory_space<vmem>>, vector<64x32xbf16>
    %296 = arith.truncf %294 : vector<32x128xf32> to vector<32x128xbf16>
    %cst_131 = arith.constant dense<0.000000e+00> : vector<64x128xf32>
    %297 = tpu.matmul %295, %296, %cst_131 {dimension_numbers = #tpu.dot_dimension_numbers<[1], [0], [0], [1], [0, 0, 1, 1], [], []>} : vector<64x32xbf16>, vector<32x128xbf16>, vector<64x128xf32> -> vector<64x128xf32>
    %c704_132 = arith.constant 704 : index
    %c0_133 = arith.constant 0 : index
    %298 = vector.load %arg4[%c704_132, %c0_133] : memref<816x1xf32, #tpu.memory_space<vmem>>, vector<64x1xf32>
    %299 = vector.broadcast %298 : vector<64x1xf32> to vector<64x128xf32>
    %300 = arith.addf %297, %299 : vector<64x128xf32>
    %301 = vector.extract_strided_slice %300 {offsets = [0, 0], sizes = [32, 128], strides = [1, 1]} : vector<64x128xf32> to vector<32x128xf32>
    %302 = arith.addf %268, %301 : vector<32x128xf32>
    %303 = vector.extract_strided_slice %300 {offsets = [32, 0], sizes = [32, 128], strides = [1, 1]} : vector<64x128xf32> to vector<32x128xf32>
    %304 = vector.broadcast %0 : vector<1x128xf32> to vector<32x128xf32>
    %305 = arith.mulf %302, %304 : vector<32x128xf32>
    %306 = vector.extract_strided_slice %262 {offsets = [64, 0], sizes = [64, 128], strides = [1, 1]} : vector<128x128xf32> to vector<64x128xf32>
    %c2_i32_134 = arith.constant 2 : i32
    %307 = tpu.dynamic_rotate %305 by %c2_i32_134 dim 1 : vector<32x128xf32>, i32 -> vector<32x128xf32>
    %c1984 = arith.constant 1984 : index
    %c0_135 = arith.constant 0 : index
    %308 = vector.load %arg3[%c1984, %c0_135] : memref<2240x32xbf16, #tpu.memory_space<vmem>>, vector<64x32xbf16>
    %309 = arith.truncf %307 : vector<32x128xf32> to vector<32x128xbf16>
    %cst_136 = arith.constant dense<0.000000e+00> : vector<64x128xf32>
    %310 = tpu.matmul %308, %309, %cst_136 {dimension_numbers = #tpu.dot_dimension_numbers<[1], [0], [0], [1], [0, 0, 1, 1], [], []>} : vector<64x32xbf16>, vector<32x128xbf16>, vector<64x128xf32> -> vector<64x128xf32>
    %311 = arith.addf %306, %310 : vector<64x128xf32>
    %c2048 = arith.constant 2048 : index
    %c0_137 = arith.constant 0 : index
    %312 = vector.load %arg3[%c2048, %c0_137] : memref<2240x32xbf16, #tpu.memory_space<vmem>>, vector<64x32xbf16>
    %313 = arith.truncf %305 : vector<32x128xf32> to vector<32x128xbf16>
    %cst_138 = arith.constant dense<0.000000e+00> : vector<64x128xf32>
    %314 = tpu.matmul %312, %313, %cst_138 {dimension_numbers = #tpu.dot_dimension_numbers<[1], [0], [0], [1], [0, 0, 1, 1], [], []>} : vector<64x32xbf16>, vector<32x128xbf16>, vector<64x128xf32> -> vector<64x128xf32>
    %315 = arith.addf %311, %314 : vector<64x128xf32>
    %c126_i32_139 = arith.constant 126 : i32
    %316 = tpu.dynamic_rotate %305 by %c126_i32_139 dim 1 : vector<32x128xf32>, i32 -> vector<32x128xf32>
    %c2112 = arith.constant 2112 : index
    %c0_140 = arith.constant 0 : index
    %317 = vector.load %arg3[%c2112, %c0_140] : memref<2240x32xbf16, #tpu.memory_space<vmem>>, vector<64x32xbf16>
    %318 = arith.truncf %316 : vector<32x128xf32> to vector<32x128xbf16>
    %cst_141 = arith.constant dense<0.000000e+00> : vector<64x128xf32>
    %319 = tpu.matmul %317, %318, %cst_141 {dimension_numbers = #tpu.dot_dimension_numbers<[1], [0], [0], [1], [0, 0, 1, 1], [], []>} : vector<64x32xbf16>, vector<32x128xbf16>, vector<64x128xf32> -> vector<64x128xf32>
    %320 = arith.addf %315, %319 : vector<64x128xf32>
    %321 = vector.extract_strided_slice %320 {offsets = [0, 0], sizes = [32, 128], strides = [1, 1]} : vector<64x128xf32> to vector<32x128xf32>
    %322 = math.tanh %321 : vector<32x128xf32>
    %323 = vector.extract_strided_slice %320 {offsets = [32, 0], sizes = [32, 128], strides = [1, 1]} : vector<64x128xf32> to vector<32x128xf32>
    %324 = arith.negf %323 : vector<32x128xf32>
    %325 = math.exp %324 : vector<32x128xf32>
    %cst_142 = arith.constant 1.000000e+00 : f32
    %326 = vector.broadcast %cst_142 : f32 to vector<32x128xf32>
    %327 = arith.addf %326, %325 : vector<32x128xf32>
    %328 = arith.divf %326, %327 : vector<32x128xf32>
    %329 = arith.mulf %322, %328 : vector<32x128xf32>
    %c2176 = arith.constant 2176 : index
    %c0_143 = arith.constant 0 : index
    %330 = vector.load %arg3[%c2176, %c0_143] : memref<2240x32xbf16, #tpu.memory_space<vmem>>, vector<32x32xbf16>
    %331 = arith.truncf %329 : vector<32x128xf32> to vector<32x128xbf16>
    %cst_144 = arith.constant dense<0.000000e+00> : vector<32x128xf32>
    %332 = tpu.matmul %330, %331, %cst_144 {dimension_numbers = #tpu.dot_dimension_numbers<[1], [0], [0], [1], [0, 0, 1, 1], [], []>} : vector<32x32xbf16>, vector<32x128xbf16>, vector<32x128xf32> -> vector<32x128xf32>
    %c768_145 = arith.constant 768 : index
    %c0_146 = arith.constant 0 : index
    %333 = vector.load %arg4[%c768_145, %c0_146] : memref<816x1xf32, #tpu.memory_space<vmem>>, vector<32x1xf32>
    %334 = vector.broadcast %333 : vector<32x1xf32> to vector<32x128xf32>
    %335 = arith.addf %332, %334 : vector<32x128xf32>
    %336 = arith.addf %303, %335 : vector<32x128xf32>
    %c2208 = arith.constant 2208 : index
    %c0_147 = arith.constant 0 : index
    %337 = vector.load %arg3[%c2208, %c0_147] : memref<2240x32xbf16, #tpu.memory_space<vmem>>, vector<3x32xbf16>
    %338 = arith.truncf %336 : vector<32x128xf32> to vector<32x128xbf16>
    %cst_148 = arith.constant dense<0.000000e+00> : vector<3x128xf32>
    %339 = tpu.matmul %337, %338, %cst_148 {dimension_numbers = #tpu.dot_dimension_numbers<[1], [0], [0], [1], [0, 0, 1, 1], [], []>} : vector<3x32xbf16>, vector<32x128xbf16>, vector<3x128xf32> -> vector<3x128xf32>
    %c800_149 = arith.constant 800 : index
    %c0_150 = arith.constant 0 : index
    %340 = vector.load %arg4[%c800_149, %c0_150] : memref<816x1xf32, #tpu.memory_space<vmem>>, vector<3x1xf32>
    %341 = vector.broadcast %340 : vector<3x1xf32> to vector<3x128xf32>
    %342 = arith.addf %339, %341 : vector<3x128xf32>
    %c2224 = arith.constant 2224 : index
    %c0_151 = arith.constant 0 : index
    %343 = vector.load %arg3[%c2224, %c0_151] : memref<2240x32xbf16, #tpu.memory_space<vmem>>, vector<3x32xbf16>
    %344 = arith.truncf %336 : vector<32x128xf32> to vector<32x128xbf16>
    %cst_152 = arith.constant dense<0.000000e+00> : vector<3x128xf32>
    %345 = tpu.matmul %343, %344, %cst_152 {dimension_numbers = #tpu.dot_dimension_numbers<[1], [0], [0], [1], [0, 0, 1, 1], [], []>} : vector<3x32xbf16>, vector<32x128xbf16>, vector<3x128xf32> -> vector<3x128xf32>
    %c808 = arith.constant 808 : index
    %c0_153 = arith.constant 0 : index
    %346 = vector.load %arg4[%c808, %c0_153] : memref<816x1xf32, #tpu.memory_space<vmem>>, vector<3x1xf32>
    %347 = vector.broadcast %346 : vector<3x1xf32> to vector<3x128xf32>
    %348 = arith.addf %345, %347 : vector<3x128xf32>
    %349 = vector.broadcast %0 : vector<1x128xf32> to vector<3x128xf32>
    %350 = arith.mulf %348, %349 : vector<3x128xf32>
    %351 = math.exp %350 : vector<3x128xf32>
    %352 = arith.mulf %256, %351 : vector<3x128xf32>
    %353 = arith.addf %352, %342 : vector<3x128xf32>
    %354 = arith.cmpf one, %353, %353 : vector<3x128xf32>
    %cst_154 = arith.constant 0.000000e+00 : f32
    %355 = vector.broadcast %cst_154 : f32 to vector<3x128xf32>
    %356 = arith.select %354, %355, %353 : vector<3x128xi1>, vector<3x128xf32>
    %357 = arith.cmpf one, %251, %251 : vector<3x128xf32>
    %cst_155 = arith.constant 0.000000e+00 : f32
    %358 = vector.broadcast %cst_155 : f32 to vector<3x128xf32>
    %359 = arith.select %357, %358, %251 : vector<3x128xi1>, vector<3x128xf32>
    %cst_156 = arith.constant dense<0.000000e+00> : vector<128xf32>
    %360 = vector.multi_reduction <add>, %350, %cst_156 [0] : vector<3x128xf32> to vector<128xf32>
    %361 = vector.shape_cast %360 : vector<128xf32> to vector<1x128xf32>
    %c2 = arith.constant 2 : index
    %c0_157 = arith.constant 0 : index
    %362 = vector.load %arg6[%c2, %c0_157] : memref<3x128xf32, #tpu.memory_space<vmem>>, vector<1x128xf32>
    tpu.vector_store %arg6[%c2, %c0_157], %361 {strides = array<i32>} : memref<3x128xf32, #tpu.memory_space<vmem>>, vector<1x128xf32>,
    %c2_158 = arith.constant 2 : index
    %c0_159 = arith.constant 0 : index
    %363 = vector.load %arg5[%c2_158, %c0_159] : memref<8x128xf32, #tpu.memory_space<vmem>>, vector<3x128xf32>
    tpu.vector_store %arg5[%c2_158, %c0_159], %359 {strides = array<i32>} : memref<8x128xf32, #tpu.memory_space<vmem>>, vector<3x128xf32>,
    %c5 = arith.constant 5 : index
    %c0_160 = arith.constant 0 : index
    %364 = vector.load %arg5[%c5, %c0_160] : memref<8x128xf32, #tpu.memory_space<vmem>>, vector<3x128xf32>
    tpu.vector_store %arg5[%c5, %c0_160], %356 {strides = array<i32>} : memref<8x128xf32, #tpu.memory_space<vmem>>, vector<3x128xf32>,
    return
  }
}

</mosaic_0001>

<llo_original>
// kernel: tile.8
$region0: #{tile.8}
  #allocation0 [shape = 's32[1]{0}', space=sflag, size = 0x4, scoped, tag = 'scoped memory for tile.8']
  %s0 = inlined_call_operand.vmem [shape: f32[64], index: 0, kind: input, shape index: {}]
  %s1 = inlined_call_operand.vmem [shape: f32[2,64], index: 1, kind: output, shape index: {}]
  // Predicated region
  $region2: #{tile.8} parent=0 // pred_check
    _
  $region3: #{tile.8} parent=0 // pred_check_branch
    %3 = sbr.rel (0) target = $region5
  $region4: #{tile.8} parent=0 // pred_region
    _
  $region5: #{tile.8} parent=0 // pred_fallthru
    _
  %v4 = vld [vmem:[%s0] ss:$0 sm:$0xff]
  %5 = vst [vmem:[%s1] sm:$0x3] %v4

// kernel: tile.9
$region0: #{tile.9}
  %s0 = inlined_call_operand.vmem [shape: f32[2,64], index: 0, kind: input, shape index: {}]
  %s1 = inlined_call_operand.vmem [shape: f32[1,128], index: 1, kind: output, shape index: {}]
  $region1: #{tile.9} parent=0
    #allocation0 [shape = 'u8[4096]{0}', space=vmem, size = 0x1000, scoped, tag = 'scoped mem for output reshape']
    #allocation1 [shape = 'u8[4096]{0}', space=vmem, size = 0x1000, scoped, tag = 'scoped mem for input reshape']
    %s3 = sshllo.u32 0, 2
    %v4 = vld [vmem:[%s0] sm:%s3]
    %5 = vst [vmem:[#allocation1] sm:%s3] %v4
    %v6 = vld [vmem:[#allocation1] sm:$0x1]
    %vm7 = vcmask 523264
    %8 = vst.msk [vmem:[#allocation0] sm:$0x1] %vm7, %v6
    %s9 = scalar_lea.vmem [#allocation1], 1
    %v10 = vld [vmem:[%s9] sm:$0x1]
    %11 = vrot.lane.b32.xlu0 %v10, 64
    %v12 = vpop.permute.xlu0 %11
    %vm13 = vcmask 1048064
    %14 = vst.msk [vmem:[#allocation0] sm:$0x1] %vm13, %v12
    %s16 = sshllo.u32 0, 1
    %v18 = vld [vmem:[#allocation0] sm:%s16]
    %s19 = sshllo.u32 0, 1
    %20 = vst [vmem:[%s1] sm:%s19] %v18

// kernel: waveglow_forward.1
$region0: #{waveglow_forward.1}
  #allocation0 [shape = 'u32[]', space=smem, size = 0x4, offset = 0x4, fixed_abs, tag = 'smem constant byte address 0x4 - core index']
  #allocation1 [shape = 'u32[144,128]{1,0:T(1,128)}', space=vmem, size = 0x12000, scoped, tag = 'internal scratch']
  %s0 = inlined_call_operand.vmem [shape: f32[8,128], index: 0, kind: input, shape index: {}]
  %s1 = inlined_call_operand.vmem [shape: f32[8,128], index: 1, kind: input, shape index: {}]
  %s2 = inlined_call_operand.vmem [shape: f32[1,128], index: 2, kind: input, shape index: {}]
  %s3 = inlined_call_operand.vmem [shape: bf16[2240,32], index: 3, kind: input, shape index: {}]
  %s4 = inlined_call_operand.vmem [shape: f32[816,1], index: 4, kind: input, shape index: {}]
  %s5 = inlined_call_operand.vmem [shape: f32[8,128], index: 5, kind: output, shape index: {0}]
  %s6 = inlined_call_operand.vmem [shape: f32[3,128], index: 6, kind: output, shape index: {1}]
  %7 = xla_tuple %s5, %s6
  %s8 = sld [smem:[#allocation0]]
  $region38: #{waveglow_forward.1} parent=0
    _
  %s10 = ssub.s32 1, %s8
  %s11 = scalar_select 0, %s10, %s8
  // Predicated region
  $region2: #{waveglow_forward.1} parent=0 // pred_check
    _
  $region3: #{waveglow_forward.1} parent=0 // pred_check_branch
    %13 = sbr.rel (0) target = $region5
  $region4: #{waveglow_forward.1} parent=0 // pred_region
    _
  $region5: #{waveglow_forward.1} parent=0 // pred_fallthru
    _
  // Predicated region
  $region6: #{waveglow_forward.1} parent=0 // pred_check
    _
  $region7: #{waveglow_forward.1} parent=0 // pred_check_branch
    %15 = sbr.rel (0) target = $region9
  $region8: #{waveglow_forward.1} parent=0 // pred_region
    _
  $region9: #{waveglow_forward.1} parent=0 // pred_fallthru
    _
  // Predicated region
  $region10: #{waveglow_forward.1} parent=0 // pred_check
    _
  $region11: #{waveglow_forward.1} parent=0 // pred_check_branch
    %17 = sbr.rel (0) target = $region13
  $region12: #{waveglow_forward.1} parent=0 // pred_region
    _
  $region13: #{waveglow_forward.1} parent=0 // pred_fallthru
    _
  // Predicated region
  $region14: #{waveglow_forward.1} parent=0 // pred_check
    _
  $region15: #{waveglow_forward.1} parent=0 // pred_check_branch
    %19 = sbr.rel (0) target = $region17
  $region16: #{waveglow_forward.1} parent=0 // pred_region
    _
  $region17: #{waveglow_forward.1} parent=0 // pred_fallthru
    _
  // Predicated region
  $region18: #{waveglow_forward.1} parent=0 // pred_check
    _
  $region19: #{waveglow_forward.1} parent=0 // pred_check_branch
    %21 = sbr.rel (0) target = $region21
  $region20: #{waveglow_forward.1} parent=0 // pred_region
    _
  $region21: #{waveglow_forward.1} parent=0 // pred_fallthru
    _
  %v23 = vld [vmem:[%s2] sm:$0x1]
  %v24 = vld [vmem:[%s1] sm:$0xff]
  %v25 = vld [vmem:[%s0] sm:$0xff]
  %v26 = vpack.c.bf16 %v25, %v25
  %v27 = vld [vmem:[%s3] sm:$0x3]
  %vm28 = vcmask 64512
  %v30 = vsel %vm28, %v27, 0
  %vm32 = vcmask 1043456
  %v34 = vsel %vm32, %v26, 0
  %36 = vmatprep.subr.bf16.mxu0 0
  %37 = vmatpush1.bf16.msra.mxu0 %v34
  %38 = vmatprep.subr.bf16.mxu0 0
  %39 = vmatpush1.bf16.msra.mxu0 0
  %40 = vmatprep.subr.bf16.mxu0 0
  %41 = vmatpush1.bf16.msra.mxu0 0
  %42 = vmatprep.subr.bf16.mxu0 0
  %43 = vmatpush1.bf16.msra.mxu0 0
  %44 = vmatprep.subr.bf16.mxu0 0
  %45 = vmatpush1.bf16.msra.mxu0 0
  %46 = vmatprep.subr.bf16.mxu0 0
  %47 = vmatpush1.bf16.msra.mxu0 0
  %48 = vmatprep.subr.bf16.mxu0 0
  %49 = vmatpush1.bf16.msra.mxu0 0
  %50 = vmatprep.subr.bf16.mxu0 0
  %51 = vmatpush1.bf16.msra.mxu0 0
  %52 = vmatprep.subr.bf16.mxu0 0
  %53 = vmatpush1.bf16.msra.mxu0 0
  %54 = vmatprep.subr.bf16.mxu0 0
  %55 = vmatpush1.bf16.msra.mxu0 0
  %56 = vmatprep.subr.bf16.mxu0 0
  %57 = vmatpush1.bf16.msra.mxu0 0
  %58 = vmatprep.subr.bf16.mxu0 0
  %59 = vmatpush1.bf16.msra.mxu0 0
  %60 = vmatprep.subr.bf16.mxu0 0
  %61 = vmatpush1.bf16.msra.mxu0 0
  %62 = vmatprep.subr.bf16.mxu0 0
  %63 = vmatpush1.bf16.msra.mxu0 0
  %64 = vmatprep.subr.bf16.mxu0 0
  %65 = vmatpush1.bf16.msra.mxu0 0
  %66 = vmatprep.subr.bf16.mxu0 0
  %67 = vmatpush1.bf16.msra.mxu0 0
  %68 = vmatprep.mubr.bf16.mxu0 0
  %69 = vmatmul.mubr.bf16.gmra.mrb[0].mxu0 %v30
  %v70 = vpop.f32.mrb[0].mxu0
  %v71 = vadd.f32 0.0, %v70
  %v72 = vpop.f32.mrb[0].mxu0
  %v73 = vpop.f32.mrb[0].mxu0
  %v74 = vpop.f32.mrb[0].mxu0
  %75 = vdwg.mxu0
  %v76 = vld [vmem:[%s3 + $0x8] sm:$0x3]
  %v78 = vsel %vm28, %v76, 0
  %80 = vmatprep.subr.bf16.mxu0 0
  %81 = vmatpush1.bf16.msra.mxu0 %v34
  %82 = vmatprep.subr.bf16.mxu0 0
  %83 = vmatpush1.bf16.msra.mxu0 0
  %84 = vmatprep.subr.bf16.mxu0 0
  %85 = vmatpush1.bf16.msra.mxu0 0
  %86 = vmatprep.subr.bf16.mxu0 0
  %87 = vmatpush1.bf16.msra.mxu0 0
  %88 = vmatprep.subr.bf16.mxu0 0
  %89 = vmatpush1.bf16.msra.mxu0 0
  %90 = vmatprep.subr.bf16.mxu0 0
  %91 = vmatpush1.bf16.msra.mxu0 0
  %92 = vmatprep.subr.bf16.mxu0 0
  %93 = vmatpush1.bf16.msra.mxu0 0
  %94 = vmatprep.subr.bf16.mxu0 0
  %95 = vmatpush1.bf16.msra.mxu0 0
  %96 = vmatprep.subr.bf16.mxu0 0
  %97 = vmatpush1.bf16.msra.mxu0 0
  %98 = vmatprep.subr.bf16.mxu0 0
  %99 = vmatpush1.bf16.msra.mxu0 0
  %100 = vmatprep.subr.bf16.mxu0 0
  %101 = vmatpush1.bf16.msra.mxu0 0
  %102 = vmatprep.subr.bf16.mxu0 0
  %103 = vmatpush1.bf16.msra.mxu0 0
  %104 = vmatprep.subr.bf16.mxu0 0
  %105 = vmatpush1.bf16.msra.mxu0 0
  %106 = vmatprep.subr.bf16.mxu0 0
  %107 = vmatpush1.bf16.msra.mxu0 0
  %108 = vmatprep.subr.bf16.mxu0 0
  %109 = vmatpush1.bf16.msra.mxu0 0
  %110 = vmatprep.subr.bf16.mxu0 0
  %111 = vmatpush1.bf16.msra.mxu0 0
  %112 = vmatprep.mubr.bf16.mxu0 0
  %113 = vmatmul.mubr.bf16.gmra.mrb[0].mxu0 %v78
  %v114 = vpop.f32.mrb[0].mxu0
  %v115 = vadd.f32 0.0, %v114
  %v116 = vpop.f32.mrb[0].mxu0
  %v117 = vpop.f32.mrb[0].mxu0
  %v118 = vpop.f32.mrb[0].mxu0
  %119 = vdwg.mxu0
  %v120 = vld [vmem:[%s3 + $0x20] sm:$0xf]
  %v121 = vld [vmem:[%s3 + $0x24] sm:$0xf]
  %v122 = vld [vmem:[%s3 + $0x28] sm:$0xf]
  %v123 = vld [vmem:[%s3 + $0x2c] sm:$0xf]
  %v124 = vld [vmem:[%s3 + $0x30] sm:$0xf]
  %v125 = vld [vmem:[%s3 + $0x34] sm:$0xf]
  %v126 = vld [vmem:[%s3 + $0x38] sm:$0xf]
  %v127 = vld [vmem:[%s3 + $0x3c] sm:$0xf]
  %v128 = vld [vmem:[%s3 + $0x40] sm:$0xf]
  %v129 = vld [vmem:[%s3 + $0x44] sm:$0xf]
  %v130 = vld [vmem:[%s3 + $0x48] sm:$0xf]
  %v131 = vld [vmem:[%s3 + $0x4c] sm:$0xf]
  %v132 = vld [vmem:[%s3 + $0x50] sm:$0xf]
  %v133 = vld [vmem:[%s3 + $0x54] sm:$0xf]
  %v134 = vld [vmem:[%s3 + $0x58] sm:$0xf]
  %v135 = vld [vmem:[%s3 + $0x5c] sm:$0xf]
  %v136 = vpack.c.bf16 %v24, %v24
  %v137 = vld [vmem:[%s4 + $0x20] sm:$0xff]
  %v138 = vld [vmem:[%s4 + $0x28] sm:$0xff]
  %v139 = vld [vmem:[%s4 + $0x30] sm:$0xff]
  %v140 = vld [vmem:[%s4 + $0x38] sm:$0xff]
  %v141 = vld [vmem:[%s4 + $0x40] sm:$0xff]
  %v142 = vld [vmem:[%s4 + $0x48] sm:$0xff]
  %v143 = vld [vmem:[%s4 + $0x50] sm:$0xff]
  %v144 = vld [vmem:[%s4 + $0x58] sm:$0xff]
  %v145 = vld [vmem:[%s4 + $0x60] sm:$0xff]
  %v146 = vld [vmem:[%s4 + $0x68] sm:$0xff]
  %v147 = vld [vmem:[%s4 + $0x70] sm:$0xff]
  %v148 = vld [vmem:[%s4 + $0x78] sm:$0xff]
  %v149 = vld [vmem:[%s4 + $0x80] sm:$0xff]
  %v150 = vld [vmem:[%s4 + $0x88] sm:$0xff]
  %v151 = vld [vmem:[%s4 + $0x90] sm:$0xff]
  %v152 = vld [vmem:[%s4 + $0x98] sm:$0xff]
  %154 = vset.pattern.permute.xlu0 0
  %155 = vperm.xlu0 %154, %v137
  %v156 = vpop.permute.xlu0 %155
  %159 = vset.pattern.permute.xlu0 0
  %160 = vperm.xlu0 %159, %v138
  %v161 = vpop.permute.xlu0 %160
  %164 = vset.pattern.permute.xlu0 0
  %165 = vperm.xlu0 %164, %v139
  %v166 = vpop.permute.xlu0 %165
  %169 = vset.pattern.permute.xlu0 0
  %170 = vperm.xlu0 %169, %v140
  %v171 = vpop.permute.xlu0 %170
  %174 = vset.pattern.permute.xlu0 0
  %175 = vperm.xlu0 %174, %v141
  %v176 = vpop.permute.xlu0 %175
  %179 = vset.pattern.permute.xlu0 0
  %180 = vperm.xlu0 %179, %v142
  %v181 = vpop.permute.xlu0 %180
  %184 = vset.pattern.permute.xlu0 0
  %185 = vperm.xlu0 %184, %v143
  %v186 = vpop.permute.xlu0 %185
  %189 = vset.pattern.permute.xlu0 0
  %190 = vperm.xlu0 %189, %v144
  %v191 = vpop.permute.xlu0 %190
  %194 = vset.pattern.permute.xlu0 0
  %195 = vperm.xlu0 %194, %v145
  %v196 = vpop.permute.xlu0 %195
  %199 = vset.pattern.permute.xlu0 0
  %200 = vperm.xlu0 %199, %v146
  %v201 = vpop.permute.xlu0 %200
  %204 = vset.pattern.permute.xlu0 0
  %205 = vperm.xlu0 %204, %v147
  %v206 = vpop.permute.xlu0 %205
  %209 = vset.pattern.permute.xlu0 0
  %210 = vperm.xlu0 %209, %v148
  %v211 = vpop.permute.xlu0 %210
  %214 = vset.pattern.permute.xlu0 0
  %215 = vperm.xlu0 %214, %v149
  %v216 = vpop.permute.xlu0 %215
  %219 = vset.pattern.permute.xlu0 0
  %220 = vperm.xlu0 %219, %v150
  %v221 = vpop.permute.xlu0 %220
  %224 = vset.pattern.permute.xlu0 0
  %225 = vperm.xlu0 %224, %v151
  %v226 = vpop.permute.xlu0 %225
  %229 = vset.pattern.permute.xlu0 0
  %230 = vperm.xlu0 %229, %v152
  %v231 = vpop.permute.xlu0 %230
  %v249 = vunpack.c.l.b16 %v120
  %v250 = vunpack.c.l.b16 %v121
  %v251 = vunpack.c.l.b16 %v122
  %v252 = vunpack.c.l.b16 %v123
  %v253 = vunpack.c.l.b16 %v124
  %v254 = vunpack.c.l.b16 %v125
  %v255 = vunpack.c.l.b16 %v126
  %v256 = vunpack.c.l.b16 %v127
  %v257 = vunpack.c.l.b16 %v128
  %v258 = vunpack.c.l.b16 %v129
  %v259 = vunpack.c.l.b16 %v130
  %v260 = vunpack.c.l.b16 %v131
  %v261 = vunpack.c.l.b16 %v132
  %v262 = vunpack.c.l.b16 %v133
  %v263 = vunpack.c.l.b16 %v134
  %v264 = vunpack.c.l.b16 %v135
  %v265 = vpack.c.b16 %v250, %v249
  %v266 = vpack.c.b16 %v252, %v251
  %v267 = vpack.c.b16 %v254, %v253
  %v268 = vpack.c.b16 %v256, %v255
  %v269 = vpack.c.b16 %v258, %v257
  %v270 = vpack.c.b16 %v260, %v259
  %v271 = vpack.c.b16 %v262, %v261
  %v272 = vpack.c.b16 %v264, %v263
  %v274 = vsel %vm28, %v265, 0
  %v277 = vsel %vm28, %v266, 0
  %v280 = vsel %vm28, %v267, 0
  %v283 = vsel %vm28, %v268, 0
  %v286 = vsel %vm28, %v269, 0
  %v289 = vsel %vm28, %v270, 0
  %v292 = vsel %vm28, %v271, 0
  %v295 = vsel %vm28, %v272, 0
  %v298 = vsel %vm32, %v136, 0
  %300 = vmatprep.subr.bf16.mxu0 0
  %301 = vmatpush1.bf16.msra.mxu0 %v298
  %302 = vmatprep.subr.bf16.mxu0 0
  %303 = vmatpush1.bf16.msra.mxu0 0
  %304 = vmatprep.subr.bf16.mxu0 0
  %305 = vmatpush1.bf16.msra.mxu0 0
  %306 = vmatprep.subr.bf16.mxu0 0
  %307 = vmatpush1.bf16.msra.mxu0 0
  %308 = vmatprep.subr.bf16.mxu0 0
  %309 = vmatpush1.bf16.msra.mxu0 0
  %310 = vmatprep.subr.bf16.mxu0 0
  %311 = vmatpush1.bf16.msra.mxu0 0
  %312 = vmatprep.subr.bf16.mxu0 0
  %313 = vmatpush1.bf16.msra.mxu0 0
  %314 = vmatprep.subr.bf16.mxu0 0
  %315 = vmatpush1.bf16.msra.mxu0 0
  %316 = vmatprep.subr.bf16.mxu0 0
  %317 = vmatpush1.bf16.msra.mxu0 0
  %318 = vmatprep.subr.bf16.mxu0 0
  %319 = vmatpush1.bf16.msra.mxu0 0
  %320 = vmatprep.subr.bf16.mxu0 0
  %321 = vmatpush1.bf16.msra.mxu0 0
  %322 = vmatprep.subr.bf16.mxu0 0
  %323 = vmatpush1.bf16.msra.mxu0 0
  %324 = vmatprep.subr.bf16.mxu0 0
  %325 = vmatpush1.bf16.msra.mxu0 0
  %326 = vmatprep.subr.bf16.mxu0 0
  %327 = vmatpush1.bf16.msra.mxu0 0
  %328 = vmatprep.subr.bf16.mxu0 0
  %329 = vmatpush1.bf16.msra.mxu0 0
  %330 = vmatprep.subr.bf16.mxu0 0
  %331 = vmatpush1.bf16.msra.mxu0 0
  %332 = vmatprep.mubr.bf16.mxu0 0
  %333 = vmatmul.mubr.bf16.gmra.mrb[0].mxu0 %v274
  %v334 = vpop.f32.mrb[0].mxu0
  %v335 = vadd.f32 %v156, %v334
  %v336 = vpop.f32.mrb[0].mxu0
  %v337 = vpop.f32.mrb[0].mxu0
  %v338 = vadd.f32 %v161, %v337
  %v339 = vpop.f32.mrb[0].mxu0
  %340 = vmatprep.mubr.bf16.mxu0 0
  %341 = vmatmul.mubr.bf16.gmra.mrb[0].mxu0 %v277
  %v342 = vpop.f32.mrb[0].mxu0
  %v343 = vadd.f32 %v166, %v342
  %v344 = vpop.f32.mrb[0].mxu0
  %v345 = vpop.f32.mrb[0].mxu0
  %v346 = vadd.f32 %v171, %v345
  %v347 = vpop.f32.mrb[0].mxu0
  %348 = vmatprep.mubr.bf16.mxu0 0
  %349 = vmatmul.mubr.bf16.gmra.mrb[0].mxu0 %v280
  %v350 = vpop.f32.mrb[0].mxu0
  %v351 = vadd.f32 %v176, %v350
  %v352 = vpop.f32.mrb[0].mxu0
  %v353 = vpop.f32.mrb[0].mxu0
  %v354 = vadd.f32 %v181, %v353
  %v355 = vpop.f32.mrb[0].mxu0
  %356 = vmatprep.mubr.bf16.mxu0 0
  %357 = vmatmul.mubr.bf16.gmra.mrb[0].mxu0 %v283
  %v358 = vpop.f32.mrb[0].mxu0
  %v359 = vadd.f32 %v186, %v358
  %v360 = vpop.f32.mrb[0].mxu0
  %v361 = vpop.f32.mrb[0].mxu0
  %v362 = vadd.f32 %v191, %v361
  %v363 = vpop.f32.mrb[0].mxu0
  %364 = vmatprep.mubr.bf16.mxu0 0
  %365 = vmatmul.mubr.bf16.gmra.mrb[0].mxu0 %v286
  %v366 = vpop.f32.mrb[0].mxu0
  %v367 = vadd.f32 %v196, %v366
  %v368 = vpop.f32.mrb[0].mxu0
  %v369 = vpop.f32.mrb[0].mxu0
  %v370 = vadd.f32 %v201, %v369
  %v371 = vpop.f32.mrb[0].mxu0
  %372 = vmatprep.mubr.bf16.mxu0 0
  %373 = vmatmul.mubr.bf16.gmra.mrb[0].mxu0 %v289
  %v374 = vpop.f32.mrb[0].mxu0
  %v375 = vadd.f32 %v206, %v374
  %v376 = vpop.f32.mrb[0].mxu0
  %v377 = vpop.f32.mrb[0].mxu0
  %v378 = vadd.f32 %v211, %v377
  %v379 = vpop.f32.mrb[0].mxu0
  %380 = vmatprep.mubr.bf16.mxu0 0
  %381 = vmatmul.mubr.bf16.gmra.mrb[0].mxu0 %v292
  %v382 = vpop.f32.mrb[0].mxu0
  %v383 = vadd.f32 %v216, %v382
  %v384 = vpop.f32.mrb[0].mxu0
  %v385 = vpop.f32.mrb[0].mxu0
  %v386 = vadd.f32 %v221, %v385
  %v387 = vpop.f32.mrb[0].mxu0
  %388 = vmatprep.mubr.bf16.mxu0 0
  %389 = vmatmul.mubr.bf16.gmra.mrb[0].mxu0 %v295
  %v390 = vpop.f32.mrb[0].mxu0
  %v391 = vadd.f32 %v226, %v390
  %v392 = vpop.f32.mrb[0].mxu0
  %v393 = vpop.f32.mrb[0].mxu0
  %v394 = vadd.f32 %v231, %v393
  %v395 = vpop.f32.mrb[0].mxu0
  %396 = vdwg.mxu0
  %v397 = vld [vmem:[%s3 + $0x10] sm:$0xf]
  %v398 = vld [vmem:[%s3 + $0x14] sm:$0xf]
  %v399 = vld [vmem:[%s3 + $0x18] sm:$0xf]
  %v400 = vld [vmem:[%s3 + $0x1c] sm:$0xf]
  %v401 = vpack.c.bf16 %v71, %v71
  %v402 = vld [vmem:[%s4] sm:$0xff]
  %v403 = vld [vmem:[%s4 + $0x8] sm:$0xff]
  %v404 = vld [vmem:[%s4 + $0x10] sm:$0xff]
  %v405 = vld [vmem:[%s4 + $0x18] sm:$0xff]
  %407 = vset.pattern.permute.xlu0 0
  %408 = vperm.xlu0 %407, %v402
  %v409 = vpop.permute.xlu0 %408
  %412 = vset.pattern.permute.xlu0 0
  %413 = vperm.xlu0 %412, %v403
  %v414 = vpop.permute.xlu0 %413
  %417 = vset.pattern.permute.xlu0 0
  %418 = vperm.xlu0 %417, %v404
  %v419 = vpop.permute.xlu0 %418
  %422 = vset.pattern.permute.xlu0 0
  %423 = vperm.xlu0 %422, %v405
  %v424 = vpop.permute.xlu0 %423
  %v430 = vunpack.c.l.b16 %v397
  %v431 = vunpack.c.l.b16 %v398
  %v432 = vunpack.c.l.b16 %v399
  %v433 = vunpack.c.l.b16 %v400
  %v434 = vpack.c.b16 %v431, %v430
  %v435 = vpack.c.b16 %v433, %v432
  %vm436 = vcmask 31744
  %v438 = vsel %vm436, %v434, 0
  %v441 = vsel %vm436, %v435, 0
  %vm443 = vcmask 1041408
  %v445 = vsel %vm443, %v401, 0
  %447 = vmatprep.subr.bf16.mxu0 0
  %448 = vmatpush1.bf16.msra.mxu0 %v445
  %449 = vmatprep.subr.bf16.mxu0 0
  %450 = vmatpush1.bf16.msra.mxu0 0
  %451 = vmatprep.subr.bf16.mxu0 0
  %452 = vmatpush1.bf16.msra.mxu0 0
  %453 = vmatprep.subr.bf16.mxu0 0
  %454 = vmatpush1.bf16.msra.mxu0 0
  %455 = vmatprep.subr.bf16.mxu0 0
  %456 = vmatpush1.bf16.msra.mxu0 0
  %457 = vmatprep.subr.bf16.mxu0 0
  %458 = vmatpush1.bf16.msra.mxu0 0
  %459 = vmatprep.subr.bf16.mxu0 0
  %460 = vmatpush1.bf16.msra.mxu0 0
  %461 = vmatprep.subr.bf16.mxu0 0
  %462 = vmatpush1.bf16.msra.mxu0 0
  %463 = vmatprep.subr.bf16.mxu0 0
  %464 = vmatpush1.bf16.msra.mxu0 0
  %465 = vmatprep.subr.bf16.mxu0 0
  %466 = vmatpush1.bf16.msra.mxu0 0
  %467 = vmatprep.subr.bf16.mxu0 0
  %468 = vmatpush1.bf16.msra.mxu0 0
  %469 = vmatprep.subr.bf16.mxu0 0
  %470 = vmatpush1.bf16.msra.mxu0 0
  %471 = vmatprep.subr.bf16.mxu0 0
  %472 = vmatpush1.bf16.msra.mxu0 0
  %473 = vmatprep.subr.bf16.mxu0 0
  %474 = vmatpush1.bf16.msra.mxu0 0
  %475 = vmatprep.subr.bf16.mxu0 0
  %476 = vmatpush1.bf16.msra.mxu0 0
  %477 = vmatprep.subr.bf16.mxu0 0
  %478 = vmatpush1.bf16.msra.mxu0 0
  %479 = vmatprep.mubr.bf16.mxu0 0
  %480 = vmatmul.mubr.bf16.gmra.mrb[0].mxu0 %v438
  %v481 = vpop.f32.mrb[0].mxu0
  %v482 = vadd.f32 %v409, %v481
  %v483 = vpop.f32.mrb[0].mxu0
  %v484 = vpop.f32.mrb[0].mxu0
  %v485 = vadd.f32 %v414, %v484
  %v486 = vpop.f32.mrb[0].mxu0
  %487 = vmatprep.mubr.bf16.mxu0 0
  %488 = vmatmul.mubr.bf16.gmra.mrb[0].mxu0 %v441
  %v489 = vpop.f32.mrb[0].mxu0
  %v490 = vadd.f32 %v419, %v489
  %v491 = vpop.f32.mrb[0].mxu0
  %v492 = vpop.f32.mrb[0].mxu0
  %v493 = vadd.f32 %v424, %v492
  %v494 = vpop.f32.mrb[0].mxu0
  %495 = vdwg.mxu0
  %v497 = vlaneseq
  %v498 = vshrl.u32 %v497, 7
  %v499 = vsub.s32 0, %v498
  %v500 = vrot.slane %v23, %v499
  %v502 = vmul.f32 %v482, %v500
  %v503 = vmul.f32 %v485, %v500
  %v504 = vmul.f32 %v490, %v500
  %v505 = vmul.f32 %v493, %v500
  %506 = vrot.lane.b32.xlu0 %v502, 1
  %v507 = vpop.permute.xlu0 %506
  %508 = vrot.lane.b32.xlu0 %v503, 1
  %v509 = vpop.permute.xlu0 %508
  %510 = vrot.lane.b32.xlu0 %v504, 1
  %v511 = vpop.permute.xlu0 %510
  %512 = vrot.lane.b32.xlu0 %v505, 1
  %v513 = vpop.permute.xlu0 %512
  %v514 = vld [vmem:[%s3 + $0x60] sm:$0xf]
  %v515 = vld [vmem:[%s3 + $0x64] sm:$0xf]
  %v516 = vld [vmem:[%s3 + $0x68] sm:$0xf]
  %v517 = vld [vmem:[%s3 + $0x6c] sm:$0xf]
  %v518 = vld [vmem:[%s3 + $0x70] sm:$0xf]
  %v519 = vld [vmem:[%s3 + $0x74] sm:$0xf]
  %v520 = vld [vmem:[%s3 + $0x78] sm:$0xf]
  %v521 = vld [vmem:[%s3 + $0x7c] sm:$0xf]
  %v522 = vpack.c.bf16 %v509, %v507
  %v523 = vpack.c.bf16 %v513, %v511
  %v532 = vunpack.c.l.b16 %v514
  %v533 = vunpack.c.l.b16 %v515
  %v534 = vunpack.c.l.b16 %v516
  %v535 = vunpack.c.l.b16 %v517
  %v536 = vunpack.c.l.b16 %v518
  %v537 = vunpack.c.l.b16 %v519
  %v538 = vunpack.c.l.b16 %v520
  %v539 = vunpack.c.l.b16 %v521
  %v540 = vpack.c.b16 %v533, %v532
  %v541 = vpack.c.b16 %v535, %v534
  %v542 = vpack.c.b16 %v537, %v536
  %v543 = vpack.c.b16 %v539, %v538
  %vm544 = vcmask 261120
  %v546 = vsel %vm544, %v540, 0
  %v549 = vsel %vm544, %v541, 0
  %v552 = vsel %vm544, %v542, 0
  %v555 = vsel %vm544, %v543, 0
  %557 = vmatprep.subr.bf16.mxu0 0
  %558 = vmatpush1.bf16.msra.mxu0 %v522
  %559 = vmatprep.subr.bf16.mxu0 0
  %560 = vmatpush1.bf16.msra.mxu0 %v523
  %561 = vmatprep.subr.bf16.mxu0 0
  %562 = vmatpush1.bf16.msra.mxu0 0
  %563 = vmatprep.subr.bf16.mxu0 0
  %564 = vmatpush1.bf16.msra.mxu0 0
  %565 = vmatprep.subr.bf16.mxu0 0
  %566 = vmatpush1.bf16.msra.mxu0 0
  %567 = vmatprep.subr.bf16.mxu0 0
  %568 = vmatpush1.bf16.msra.mxu0 0
  %569 = vmatprep.subr.bf16.mxu0 0
  %570 = vmatpush1.bf16.msra.mxu0 0
  %571 = vmatprep.subr.bf16.mxu0 0
  %572 = vmatpush1.bf16.msra.mxu0 0
  %573 = vmatprep.subr.bf16.mxu0 0
  %574 = vmatpush1.bf16.msra.mxu0 0
  %575 = vmatprep.subr.bf16.mxu0 0
  %576 = vmatpush1.bf16.msra.mxu0 0
  %577 = vmatprep.subr.bf16.mxu0 0
  %578 = vmatpush1.bf16.msra.mxu0 0
  %579 = vmatprep.subr.bf16.mxu0 0
  %580 = vmatpush1.bf16.msra.mxu0 0
  %581 = vmatprep.subr.bf16.mxu0 0
  %582 = vmatpush1.bf16.msra.mxu0 0
  %583 = vmatprep.subr.bf16.mxu0 0
  %584 = vmatpush1.bf16.msra.mxu0 0
  %585 = vmatprep.subr.bf16.mxu0 0
  %586 = vmatpush1.bf16.msra.mxu0 0
  %587 = vmatprep.subr.bf16.mxu0 0
  %588 = vmatpush1.bf16.msra.mxu0 0
  %589 = vmatprep.mubr.bf16.mxu0 0
  %590 = vmatmul.mubr.bf16.gmra.mrb[0].mxu0 %v546
  %v591 = vpop.f32.mrb[0].mxu0
  %v592 = vadd.f32 0.0, %v591
  %v593 = vpop.f32.mrb[0].mxu0
  %v594 = vpop.f32.mrb[0].mxu0
  %v595 = vadd.f32 0.0, %v594
  %v596 = vpop.f32.mrb[0].mxu0
  %597 = vmatprep.mubr.bf16.mxu0 0
  %598 = vmatmul.mubr.bf16.gmra.mrb[0].mxu0 %v549
  %v599 = vpop.f32.mrb[0].mxu0
  %v600 = vadd.f32 0.0, %v599
  %v601 = vpop.f32.mrb[0].mxu0
  %v602 = vpop.f32.mrb[0].mxu0
  %v603 = vadd.f32 0.0, %v602
  %v604 = vpop.f32.mrb[0].mxu0
  %605 = vmatprep.mubr.bf16.mxu0 0
  %606 = vmatmul.mubr.bf16.gmra.mrb[0].mxu0 %v552
  %v607 = vpop.f32.mrb[0].mxu0
  %v608 = vadd.f32 0.0, %v607
  %v609 = vpop.f32.mrb[0].mxu0
  %v610 = vpop.f32.mrb[0].mxu0
  %v611 = vadd.f32 0.0, %v610
  %v612 = vpop.f32.mrb[0].mxu0
  %613 = vmatprep.mubr.bf16.mxu0 0
  %614 = vmatmul.mubr.bf16.gmra.mrb[0].mxu0 %v555
  %v615 = vpop.f32.mrb[0].mxu0
  %v616 = vadd.f32 0.0, %v615
  %v617 = vpop.f32.mrb[0].mxu0
  %v618 = vpop.f32.mrb[0].mxu0
  %v619 = vadd.f32 0.0, %v618
  %v620 = vpop.f32.mrb[0].mxu0
  %621 = vdwg.mxu0
  %v622 = vadd.f32 %v335, %v592
  %v623 = vadd.f32 %v338, %v595
  %v624 = vadd.f32 %v343, %v600
  %v625 = vadd.f32 %v346, %v603
  %v626 = vadd.f32 %v351, %v608
  %v627 = vadd.f32 %v354, %v611
  %v628 = vadd.f32 %v359, %v616
  %v629 = vadd.f32 %v362, %v619
  %v630 = vld [vmem:[%s3 + $0x80] sm:$0xf]
  %v631 = vld [vmem:[%s3 + $0x84] sm:$0xf]
  %v632 = vld [vmem:[%s3 + $0x88] sm:$0xf]
  %v633 = vld [vmem:[%s3 + $0x8c] sm:$0xf]
  %v634 = vld [vmem:[%s3 + $0x90] sm:$0xf]
  %v635 = vld [vmem:[%s3 + $0x94] sm:$0xf]
  %v636 = vld [vmem:[%s3 + $0x98] sm:$0xf]
  %v637 = vld [vmem:[%s3 + $0x9c] sm:$0xf]
  %v638 = vpack.c.bf16 %v503, %v502
  %v639 = vpack.c.bf16 %v505, %v504
  %v648 = vunpack.c.l.b16 %v630
  %v649 = vunpack.c.l.b16 %v631
  %v650 = vunpack.c.l.b16 %v632
  %v651 = vunpack.c.l.b16 %v633
  %v652 = vunpack.c.l.b16 %v634
  %v653 = vunpack.c.l.b16 %v635
  %v654 = vunpack.c.l.b16 %v636
  %v655 = vunpack.c.l.b16 %v637
  %v656 = vpack.c.b16 %v649, %v648
  %v657 = vpack.c.b16 %v651, %v650
  %v658 = vpack.c.b16 %v653, %v652
  %v659 = vpack.c.b16 %v655, %v654
  %v661 = vsel %vm544, %v656, 0
  %v664 = vsel %vm544, %v657, 0
  %v667 = vsel %vm544, %v658, 0
  %v670 = vsel %vm544, %v659, 0
  %672 = vmatprep.subr.bf16.mxu0 0
  %673 = vmatpush1.bf16.msra.mxu0 %v638
  %674 = vmatprep.subr.bf16.mxu0 0
  %675 = vmatpush1.bf16.msra.mxu0 %v639
  %676 = vmatprep.subr.bf16.mxu0 0
  %677 = vmatpush1.bf16.msra.mxu0 0
  %678 = vmatprep.subr.bf16.mxu0 0
  %679 = vmatpush1.bf16.msra.mxu0 0
  %680 = vmatprep.subr.bf16.mxu0 0
  %681 = vmatpush1.bf16.msra.mxu0 0
  %682 = vmatprep.subr.bf16.mxu0 0
  %683 = vmatpush1.bf16.msra.mxu0 0
  %684 = vmatprep.subr.bf16.mxu0 0
  %685 = vmatpush1.bf16.msra.mxu0 0
  %686 = vmatprep.subr.bf16.mxu0 0
  %687 = vmatpush1.bf16.msra.mxu0 0
  %688 = vmatprep.subr.bf16.mxu0 0
  %689 = vmatpush1.bf16.msra.mxu0 0
  %690 = vmatprep.subr.bf16.mxu0 0
  %691 = vmatpush1.bf16.msra.mxu0 0
  %692 = vmatprep.subr.bf16.mxu0 0
  %693 = vmatpush1.bf16.msra.mxu0 0
  %694 = vmatprep.subr.bf16.mxu0 0
  %695 = vmatpush1.bf16.msra.mxu0 0
  %696 = vmatprep.subr.bf16.mxu0 0
  %697 = vmatpush1.bf16.msra.mxu0 0
  %698 = vmatprep.subr.bf16.mxu0 0
  %699 = vmatpush1.bf16.msra.mxu0 0
  %700 = vmatprep.subr.bf16.mxu0 0
  %701 = vmatpush1.bf16.msra.mxu0 0
  %702 = vmatprep.subr.bf16.mxu0 0
  %703 = vmatpush1.bf16.msra.mxu0 0
  %704 = vmatprep.mubr.bf16.mxu0 0
  %705 = vmatmul.mubr.bf16.gmra.mrb[0].mxu0 %v661
  %v706 = vpop.f32.mrb[0].mxu0
  %v707 = vadd.f32 0.0, %v706
  %v708 = vpop.f32.mrb[0].mxu0
  %v709 = vpop.f32.mrb[0].mxu0
  %v710 = vadd.f32 0.0, %v709
  %v711 = vpop.f32.mrb[0].mxu0
  %712 = vmatprep.mubr.bf16.mxu0 0
  %713 = vmatmul.mubr.bf16.gmra.mrb[0].mxu0 %v664
  %v714 = vpop.f32.mrb[0].mxu0
  %v715 = vadd.f32 0.0, %v714
  %v716 = vpop.f32.mrb[0].mxu0
  %v717 = vpop.f32.mrb[0].mxu0
  %v718 = vadd.f32 0.0, %v717
  %v719 = vpop.f32.mrb[0].mxu0
  %720 = vmatprep.mubr.bf16.mxu0 0
  %721 = vmatmul.mubr.bf16.gmra.mrb[0].mxu0 %v667
  %v722 = vpop.f32.mrb[0].mxu0
  %v723 = vadd.f32 0.0, %v722
  %v724 = vpop.f32.mrb[0].mxu0
  %v725 = vpop.f32.mrb[0].mxu0
  %v726 = vadd.f32 0.0, %v725
  %v727 = vpop.f32.mrb[0].mxu0
  %728 = vmatprep.mubr.bf16.mxu0 0
  %729 = vmatmul.mubr.bf16.gmra.mrb[0].mxu0 %v670
  %v730 = vpop.f32.mrb[0].mxu0
  %v731 = vadd.f32 0.0, %v730
  %v732 = vpop.f32.mrb[0].mxu0
  %v733 = vpop.f32.mrb[0].mxu0
  %v734 = vadd.f32 0.0, %v733
  %v735 = vpop.f32.mrb[0].mxu0
  %736 = vdwg.mxu0
  %v737 = vadd.f32 %v622, %v707
  %v738 = vadd.f32 %v623, %v710
  %v739 = vadd.f32 %v624, %v715
  %v740 = vadd.f32 %v625, %v718
  %v741 = vadd.f32 %v626, %v723
  %v742 = vadd.f32 %v627, %v726
  %v743 = vadd.f32 %v628, %v731
  %v744 = vadd.f32 %v629, %v734
  %745 = vrot.lane.b32.xlu0 %v502, 127
  %v746 = vpop.permute.xlu0 %745
  %747 = vrot.lane.b32.xlu0 %v503, 127
  %v748 = vpop.permute.xlu0 %747
  %749 = vrot.lane.b32.xlu0 %v504, 127
  %v750 = vpop.permute.xlu0 %749
  %751 = vrot.lane.b32.xlu0 %v505, 127
  %v752 = vpop.permute.xlu0 %751
  %v753 = vld [vmem:[%s3 + $0xa0] sm:$0xf]
  %v754 = vld [vmem:[%s3 + $0xa4] sm:$0xf]
  %v755 = vld [vmem:[%s3 + $0xa8] sm:$0xf]
  %v756 = vld [vmem:[%s3 + $0xac] sm:$0xf]
  %v757 = vld [vmem:[%s3 + $0xb0] sm:$0xf]
  %v758 = vld [vmem:[%s3 + $0xb4] sm:$0xf]
  %v759 = vld [vmem:[%s3 + $0xb8] sm:$0xf]
  %v760 = vld [vmem:[%s3 + $0xbc] sm:$0xf]
  %v761 = vpack.c.bf16 %v748, %v746
  %v762 = vpack.c.bf16 %v752, %v750
  %v771 = vunpack.c.l.b16 %v753
  %v772 = vunpack.c.l.b16 %v754
  %v773 = vunpack.c.l.b16 %v755
  %v774 = vunpack.c.l.b16 %v756
  %v775 = vunpack.c.l.b16 %v757
  %v776 = vunpack.c.l.b16 %v758
  %v777 = vunpack.c.l.b16 %v759
  %v778 = vunpack.c.l.b16 %v760
  %v779 = vpack.c.b16 %v772, %v771
  %v780 = vpack.c.b16 %v774, %v773
  %v781 = vpack.c.b16 %v776, %v775
  %v782 = vpack.c.b16 %v778, %v777
  %v784 = vsel %vm544, %v779, 0
  %v787 = vsel %vm544, %v780, 0
  %v790 = vsel %vm544, %v781, 0
  %v793 = vsel %vm544, %v782, 0
  %795 = vmatprep.subr.bf16.mxu0 0
  %796 = vmatpush1.bf16.msra.mxu0 %v761
  %797 = vmatprep.subr.bf16.mxu0 0
  %798 = vmatpush1.bf16.msra.mxu0 %v762
  %799 = vmatprep.subr.bf16.mxu0 0
  %800 = vmatpush1.bf16.msra.mxu0 0
  %801 = vmatprep.subr.bf16.mxu0 0
  %802 = vmatpush1.bf16.msra.mxu0 0
  %803 = vmatprep.subr.bf16.mxu0 0
  %804 = vmatpush1.bf16.msra.mxu0 0
  %805 = vmatprep.subr.bf16.mxu0 0
  %806 = vmatpush1.bf16.msra.mxu0 0
  %807 = vmatprep.subr.bf16.mxu0 0
  %808 = vmatpush1.bf16.msra.mxu0 0
  %809 = vmatprep.subr.bf16.mxu0 0
  %810 = vmatpush1.bf16.msra.mxu0 0
  %811 = vmatprep.subr.bf16.mxu0 0
  %812 = vmatpush1.bf16.msra.mxu0 0
  %813 = vmatprep.subr.bf16.mxu0 0
  %814 = vmatpush1.bf16.msra.mxu0 0
  %815 = vmatprep.subr.bf16.mxu0 0
  %816 = vmatpush1.bf16.msra.mxu0 0
  %817 = vmatprep.subr.bf16.mxu0 0
  %818 = vmatpush1.bf16.msra.mxu0 0
  %819 = vmatprep.subr.bf16.mxu0 0
  %820 = vmatpush1.bf16.msra.mxu0 0
  %821 = vmatprep.subr.bf16.mxu0 0
  %822 = vmatpush1.bf16.msra.mxu0 0
  %823 = vmatprep.subr.bf16.mxu0 0
  %824 = vmatpush1.bf16.msra.mxu0 0
  %825 = vmatprep.subr.bf16.mxu0 0
  %826 = vmatpush1.bf16.msra.mxu0 0
  %827 = vmatprep.mubr.bf16.mxu0 0
  %828 = vmatmul.mubr.bf16.gmra.mrb[0].mxu0 %v784
  %v829 = vpop.f32.mrb[0].mxu0
  %v830 = vadd.f32 0.0, %v829
  %v831 = vpop.f32.mrb[0].mxu0
  %v832 = vpop.f32.mrb[0].mxu0
  %v833 = vadd.f32 0.0, %v832
  %v834 = vpop.f32.mrb[0].mxu0
  %835 = vmatprep.mubr.bf16.mxu0 0
  %836 = vmatmul.mubr.bf16.gmra.mrb[0].mxu0 %v787
  %v837 = vpop.f32.mrb[0].mxu0
  %v838 = vadd.f32 0.0, %v837
  %v839 = vpop.f32.mrb[0].mxu0
  %v840 = vpop.f32.mrb[0].mxu0
  %v841 = vadd.f32 0.0, %v840
  %v842 = vpop.f32.mrb[0].mxu0
  %843 = vmatprep.mubr.bf16.mxu0 0
  %844 = vmatmul.mubr.bf16.gmra.mrb[0].mxu0 %v790
  %v845 = vpop.f32.mrb[0].mxu0
  %v846 = vadd.f32 0.0, %v845
  %v847 = vpop.f32.mrb[0].mxu0
  %v848 = vpop.f32.mrb[0].mxu0
  %v849 = vadd.f32 0.0, %v848
  %v850 = vpop.f32.mrb[0].mxu0
  %851 = vmatprep.mubr.bf16.mxu0 0
  %852 = vmatmul.mubr.bf16.gmra.mrb[0].mxu0 %v793
  %v853 = vpop.f32.mrb[0].mxu0
  %v854 = vadd.f32 0.0, %v853
  %v855 = vpop.f32.mrb[0].mxu0
  %v856 = vpop.f32.mrb[0].mxu0
  %v857 = vadd.f32 0.0, %v856
  %v858 = vpop.f32.mrb[0].mxu0
  %859 = vdwg.mxu0
  %v860 = vadd.f32 %v737, %v830
  %v861 = vadd.f32 %v738, %v833
  %v862 = vadd.f32 %v739, %v838
  %v863 = vadd.f32 %v740, %v841
  %v864 = vadd.f32 %v741, %v846
  %v865 = vadd.f32 %v742, %v849
  %v866 = vadd.f32 %v743, %v854
  %v867 = vadd.f32 %v744, %v857
  %v868 = vtanh.pop %v860
  %v869 = vtanh.pop %v861
  %v870 = vtanh.pop %v862
  %v871 = vtanh.pop %v863
  %v872 = vxor.u32 %v864, 2147483648
  %v873 = vxor.u32 %v865, 2147483648
  %v874 = vxor.u32 %v866, 2147483648
  %v875 = vxor.u32 %v867, 2147483648
  %v876 = vmul.f32 %v872, 1.442695
  %v877 = vpow.pop %v876
  %v878 = vmul.f32 %v873, 1.442695
  %v879 = vpow.pop %v878
  %v880 = vmul.f32 %v874, 1.442695
  %v881 = vpow.pop %v880
  %v882 = vmul.f32 %v875, 1.442695
  %v883 = vpow.pop %v882
  %v884 = vadd.f32 %v877, 1.0
  %v885 = vadd.f32 %v879, 1.0
  %v886 = vadd.f32 %v881, 1.0
  %v887 = vadd.f32 %v883, 1.0
  %v888 = vrcp.pop %v884
  %v889 = vmul.f32 1.0, %v888
  %v890 = vrcp.pop %v885
  %v891 = vmul.f32 1.0, %v890
  %v892 = vrcp.pop %v886
  %v893 = vmul.f32 1.0, %v892
  %v894 = vrcp.pop %v887
  %v895 = vmul.f32 1.0, %v894
  %v896 = vmul.f32 %v868, %v889
  %v897 = vmul.f32 %v869, %v891
  %v898 = vmul.f32 %v870, %v893
  %v899 = vmul.f32 %v871, %v895
  %v900 = vld [vmem:[%s3 + $0xc0] sm:$0xf]
  %v901 = vld [vmem:[%s3 + $0xc4] sm:$0xf]
  %v902 = vld [vmem:[%s3 + $0xc8] sm:$0xf]
  %v903 = vld [vmem:[%s3 + $0xcc] sm:$0xf]
  %v904 = vld [vmem:[%s3 + $0xd0] sm:$0xf]
  %v905 = vld [vmem:[%s3 + $0xd4] sm:$0xf]
  %v906 = vld [vmem:[%s3 + $0xd8] sm:$0xf]
  %v907 = vld [vmem:[%s3 + $0xdc] sm:$0xf]
  %v908 = vpack.c.bf16 %v897, %v896
  %v909 = vpack.c.bf16 %v899, %v898
  %v910 = vld [vmem:[%s4 + $0xa0] sm:$0xff]
  %v911 = vld [vmem:[%s4 + $0xa8] sm:$0xff]
  %v912 = vld [vmem:[%s4 + $0xb0] sm:$0xff]
  %v913 = vld [vmem:[%s4 + $0xb8] sm:$0xff]
  %v914 = vld [vmem:[%s4 + $0xc0] sm:$0xff]
  %v915 = vld [vmem:[%s4 + $0xc8] sm:$0xff]
  %v916 = vld [vmem:[%s4 + $0xd0] sm:$0xff]
  %v917 = vld [vmem:[%s4 + $0xd8] sm:$0xff]
  %919 = vset.pattern.permute.xlu0 0
  %920 = vperm.xlu0 %919, %v910
  %v921 = vpop.permute.xlu0 %920
  %924 = vset.pattern.permute.xlu0 0
  %925 = vperm.xlu0 %924, %v911
  %v926 = vpop.permute.xlu0 %925
  %929 = vset.pattern.permute.xlu0 0
  %930 = vperm.xlu0 %929, %v912
  %v931 = vpop.permute.xlu0 %930
  %934 = vset.pattern.permute.xlu0 0
  %935 = vperm.xlu0 %934, %v913
  %v936 = vpop.permute.xlu0 %935
  %939 = vset.pattern.permute.xlu0 0
  %940 = vperm.xlu0 %939, %v914
  %v941 = vpop.permute.xlu0 %940
  %944 = vset.pattern.permute.xlu0 0
  %945 = vperm.xlu0 %944, %v915
  %v946 = vpop.permute.xlu0 %945
  %949 = vset.pattern.permute.xlu0 0
  %950 = vperm.xlu0 %949, %v916
  %v951 = vpop.permute.xlu0 %950
  %954 = vset.pattern.permute.xlu0 0
  %955 = vperm.xlu0 %954, %v917
  %v956 = vpop.permute.xlu0 %955
  %v966 = vunpack.c.l.b16 %v900
  %v967 = vunpack.c.l.b16 %v901
  %v968 = vunpack.c.l.b16 %v902
  %v969 = vunpack.c.l.b16 %v903
  %v970 = vunpack.c.l.b16 %v904
  %v971 = vunpack.c.l.b16 %v905
  %v972 = vunpack.c.l.b16 %v906
  %v973 = vunpack.c.l.b16 %v907
  %v974 = vpack.c.b16 %v967, %v966
  %v975 = vpack.c.b16 %v969, %v968
  %v976 = vpack.c.b16 %v971, %v970
  %v977 = vpack.c.b16 %v973, %v972
  %v979 = vsel %vm544, %v974, 0
  %v982 = vsel %vm544, %v975, 0
  %v985 = vsel %vm544, %v976, 0
  %v988 = vsel %vm544, %v977, 0
  %990 = vmatprep.subr.bf16.mxu0 0
  %991 = vmatpush1.bf16.msra.mxu0 %v908
  %992 = vmatprep.subr.bf16.mxu0 0
  %993 = vmatpush1.bf16.msra.mxu0 %v909
  %994 = vmatprep.subr.bf16.mxu0 0
  %995 = vmatpush1.bf16.msra.mxu0 0
  %996 = vmatprep.subr.bf16.mxu0 0
  %997 = vmatpush1.bf16.msra.mxu0 0
  %998 = vmatprep.subr.bf16.mxu0 0
  %999 = vmatpush1.bf16.msra.mxu0 0
  %1000 = vmatprep.subr.bf16.mxu0 0
  %1001 = vmatpush1.bf16.msra.mxu0 0
  %1002 = vmatprep.subr.bf16.mxu0 0
  %1003 = vmatpush1.bf16.msra.mxu0 0
  %1004 = vmatprep.subr.bf16.mxu0 0
  %1005 = vmatpush1.bf16.msra.mxu0 0
  %1006 = vmatprep.subr.bf16.mxu0 0
  %1007 = vmatpush1.bf16.msra.mxu0 0
  %1008 = vmatprep.subr.bf16.mxu0 0
  %1009 = vmatpush1.bf16.msra.mxu0 0
  %1010 = vmatprep.subr.bf16.mxu0 0
  %1011 = vmatpush1.bf16.msra.mxu0 0
  %1012 = vmatprep.subr.bf16.mxu0 0
  %1013 = vmatpush1.bf16.msra.mxu0 0
  %1014 = vmatprep.subr.bf16.mxu0 0
  %1015 = vmatpush1.bf16.msra.mxu0 0
  %1016 = vmatprep.subr.bf16.mxu0 0
  %1017 = vmatpush1.bf16.msra.mxu0 0
  %1018 = vmatprep.subr.bf16.mxu0 0
  %1019 = vmatpush1.bf16.msra.mxu0 0
  %1020 = vmatprep.subr.bf16.mxu0 0
  %1021 = vmatpush1.bf16.msra.mxu0 0
  %1022 = vmatprep.mubr.bf16.mxu0 0
  %1023 = vmatmul.mubr.bf16.gmra.mrb[0].mxu0 %v979
  %v1024 = vpop.f32.mrb[0].mxu0
  %v1025 = vadd.f32 %v921, %v1024
  %v1026 = vpop.f32.mrb[0].mxu0
  %v1027 = vpop.f32.mrb[0].mxu0
  %v1028 = vadd.f32 %v926, %v1027
  %v1029 = vpop.f32.mrb[0].mxu0
  %1030 = vmatprep.mubr.bf16.mxu0 0
  %1031 = vmatmul.mubr.bf16.gmra.mrb[0].mxu0 %v982
  %v1032 = vpop.f32.mrb[0].mxu0
  %v1033 = vadd.f32 %v931, %v1032
  %v1034 = vpop.f32.mrb[0].mxu0
  %v1035 = vpop.f32.mrb[0].mxu0
  %v1036 = vadd.f32 %v936, %v1035
  %v1037 = vpop.f32.mrb[0].mxu0
  %1038 = vmatprep.mubr.bf16.mxu0 0
  %1039 = vmatmul.mubr.bf16.gmra.mrb[0].mxu0 %v985
  %v1040 = vpop.f32.mrb[0].mxu0
  %v1041 = vadd.f32 %v941, %v1040
  %v1042 = vpop.f32.mrb[0].mxu0
  %v1043 = vpop.f32.mrb[0].mxu0
  %v1044 = vadd.f32 %v946, %v1043
  %v1045 = vpop.f32.mrb[0].mxu0
  %1046 = vmatprep.mubr.bf16.mxu0 0
  %1047 = vmatmul.mubr.bf16.gmra.mrb[0].mxu0 %v988
  %v1048 = vpop.f32.mrb[0].mxu0
  %v1049 = vadd.f32 %v951, %v1048
  %v1050 = vpop.f32.mrb[0].mxu0
  %v1051 = vpop.f32.mrb[0].mxu0
  %v1052 = vadd.f32 %v956, %v1051
  %v1053 = vpop.f32.mrb[0].mxu0
  %1054 = vdwg.mxu0
  %v1055 = vadd.f32 %v482, %v1025
  %v1056 = vadd.f32 %v485, %v1028
  %v1057 = vadd.f32 %v490, %v1033
  %v1058 = vadd.f32 %v493, %v1036
  %v1059 = vmul.f32 %v1055, %v500
  %v1060 = vmul.f32 %v1056, %v500
  %v1061 = vmul.f32 %v1057, %v500
  %v1062 = vmul.f32 %v1058, %v500
  %1063 = vrot.lane.b32.xlu0 %v1059, 2
  %v1064 = vpop.permute.xlu0 %1063
  %1065 = vrot.lane.b32.xlu0 %v1060, 2
  %v1066 = vpop.permute.xlu0 %1065
  %1067 = vrot.lane.b32.xlu0 %v1061, 2
  %v1068 = vpop.permute.xlu0 %1067
  %1069 = vrot.lane.b32.xlu0 %v1062, 2
  %v1070 = vpop.permute.xlu0 %1069
  %v1071 = vld [vmem:[%s3 + $0xe0] sm:$0xf]
  %v1072 = vld [vmem:[%s3 + $0xe4] sm:$0xf]
  %v1073 = vld [vmem:[%s3 + $0xe8] sm:$0xf]
  %v1074 = vld [vmem:[%s3 + $0xec] sm:$0xf]
  %v1075 = vld [vmem:[%s3 + $0xf0] sm:$0xf]
  %v1076 = vld [vmem:[%s3 + $0xf4] sm:$0xf]
  %v1077 = vld [vmem:[%s3 + $0xf8] sm:$0xf]
  %v1078 = vld [vmem:[%s3 + $0xfc] sm:$0xf]
  %v1079 = vpack.c.bf16 %v1066, %v1064
  %v1080 = vpack.c.bf16 %v1070, %v1068
  %v1089 = vunpack.c.l.b16 %v1071
  %v1090 = vunpack.c.l.b16 %v1072
  %v1091 = vunpack.c.l.b16 %v1073
  %v1092 = vunpack.c.l.b16 %v1074
  %v1093 = vunpack.c.l.b16 %v1075
  %v1094 = vunpack.c.l.b16 %v1076
  %v1095 = vunpack.c.l.b16 %v1077
  %v1096 = vunpack.c.l.b16 %v1078
  %v1097 = vpack.c.b16 %v1090, %v1089
  %v1098 = vpack.c.b16 %v1092, %v1091
  %v1099 = vpack.c.b16 %v1094, %v1093
  %v1100 = vpack.c.b16 %v1096, %v1095
  %v1102 = vsel %vm544, %v1097, 0
  %v1105 = vsel %vm544, %v1098, 0
  %v1108 = vsel %vm544, %v1099, 0
  %v1111 = vsel %vm544, %v1100, 0
  %1113 = vmatprep.subr.bf16.mxu0 0
  %1114 = vmatpush1.bf16.msra.mxu0 %v1079
  %1115 = vmatprep.subr.bf16.mxu0 0
  %1116 = vmatpush1.bf16.msra.mxu0 %v1080
  %1117 = vmatprep.subr.bf16.mxu0 0
  %1118 = vmatpush1.bf16.msra.mxu0 0
  %1119 = vmatprep.subr.bf16.mxu0 0
  %1120 = vmatpush1.bf16.msra.mxu0 0
  %1121 = vmatprep.subr.bf16.mxu0 0
  %1122 = vmatpush1.bf16.msra.mxu0 0
  %1123 = vmatprep.subr.bf16.mxu0 0
  %1124 = vmatpush1.bf16.msra.mxu0 0
  %1125 = vmatprep.subr.bf16.mxu0 0
  %1126 = vmatpush1.bf16.msra.mxu0 0
  %1127 = vmatprep.subr.bf16.mxu0 0
  %1128 = vmatpush1.bf16.msra.mxu0 0
  %1129 = vmatprep.subr.bf16.mxu0 0
  %1130 = vmatpush1.bf16.msra.mxu0 0
  %1131 = vmatprep.subr.bf16.mxu0 0
  %1132 = vmatpush1.bf16.msra.mxu0 0
  %1133 = vmatprep.subr.bf16.mxu0 0
  %1134 = vmatpush1.bf16.msra.mxu0 0
  %1135 = vmatprep.subr.bf16.mxu0 0
  %1136 = vmatpush1.bf16.msra.mxu0 0
  %1137 = vmatprep.subr.bf16.mxu0 0
  %1138 = vmatpush1.bf16.msra.mxu0 0
  %1139 = vmatprep.subr.bf16.mxu0 0
  %1140 = vmatpush1.bf16.msra.mxu0 0
  %1141 = vmatprep.subr.bf16.mxu0 0
  %1142 = vmatpush1.bf16.msra.mxu0 0
  %1143 = vmatprep.subr.bf16.mxu0 0
  %1144 = vmatpush1.bf16.msra.mxu0 0
  %1145 = vmatprep.mubr.bf16.mxu0 0
  %1146 = vmatmul.mubr.bf16.gmra.mrb[0].mxu0 %v1102
  %v1147 = vpop.f32.mrb[0].mxu0
  %v1148 = vadd.f32 0.0, %v1147
  %v1149 = vpop.f32.mrb[0].mxu0
  %v1150 = vpop.f32.mrb[0].mxu0
  %v1151 = vadd.f32 0.0, %v1150
  %v1152 = vpop.f32.mrb[0].mxu0
  %1153 = vmatprep.mubr.bf16.mxu0 0
  %1154 = vmatmul.mubr.bf16.gmra.mrb[0].mxu0 %v1105
  %v1155 = vpop.f32.mrb[0].mxu0
  %v1156 = vadd.f32 0.0, %v1155
  %v1157 = vpop.f32.mrb[0].mxu0
  %v1158 = vpop.f32.mrb[0].mxu0
  %v1159 = vadd.f32 0.0, %v1158
  %v1160 = vpop.f32.mrb[0].mxu0
  %1161 = vmatprep.mubr.bf16.mxu0 0
  %1162 = vmatmul.mubr.bf16.gmra.mrb[0].mxu0 %v1108
  %v1163 = vpop.f32.mrb[0].mxu0
  %v1164 = vadd.f32 0.0, %v1163
  %v1165 = vpop.f32.mrb[0].mxu0
  %v1166 = vpop.f32.mrb[0].mxu0
  %v1167 = vadd.f32 0.0, %v1166
  %v1168 = vpop.f32.mrb[0].mxu0
  %1169 = vmatprep.mubr.bf16.mxu0 0
  %1170 = vmatmul.mubr.bf16.gmra.mrb[0].mxu0 %v1111
  %v1171 = vpop.f32.mrb[0].mxu0
  %v1172 = vadd.f32 0.0, %v1171
  %v1173 = vpop.f32.mrb[0].mxu0
  %v1174 = vpop.f32.mrb[0].mxu0
  %v1175 = vadd.f32 0.0, %v1174
  %v1176 = vpop.f32.mrb[0].mxu0
  %1177 = vdwg.mxu0
  %v1178 = vadd.f32 %v367, %v1148
  %v1179 = vadd.f32 %v370, %v1151
  %v1180 = vadd.f32 %v375, %v1156
  %v1181 = vadd.f32 %v378, %v1159
  %v1182 = vadd.f32 %v383, %v1164
  %v1183 = vadd.f32 %v386, %v1167
  %v1184 = vadd.f32 %v391, %v1172
  %v1185 = vadd.f32 %v394, %v1175
  %v1186 = vld [vmem:[%s3 + $0x100] sm:$0xf]
  %v1187 = vld [vmem:[%s3 + $0x104] sm:$0xf]
  %v1188 = vld [vmem:[%s3 + $0x108] sm:$0xf]
  %v1189 = vld [vmem:[%s3 + $0x10c] sm:$0xf]
  %v1190 = vld [vmem:[%s3 + $0x110] sm:$0xf]
  %v1191 = vld [vmem:[%s3 + $0x114] sm:$0xf]
  %v1192 = vld [vmem:[%s3 + $0x118] sm:$0xf]
  %v1193 = vld [vmem:[%s3 + $0x11c] sm:$0xf]
  %v1194 = vpack.c.bf16 %v1060, %v1059
  %v1195 = vpack.c.bf16 %v1062, %v1061
  %v1204 = vunpack.c.l.b16 %v1186
  %v1205 = vunpack.c.l.b16 %v1187
  %v1206 = vunpack.c.l.b16 %v1188
  %v1207 = vunpack.c.l.b16 %v1189
  %v1208 = vunpack.c.l.b16 %v1190
  %v1209 = vunpack.c.l.b16 %v1191
  %v1210 = vunpack.c.l.b16 %v1192
  %v1211 = vunpack.c.l.b16 %v1193
  %v1212 = vpack.c.b16 %v1205, %v1204
  %v1213 = vpack.c.b16 %v1207, %v1206
  %v1214 = vpack.c.b16 %v1209, %v1208
  %v1215 = vpack.c.b16 %v1211, %v1210
  %v1217 = vsel %vm544, %v1212, 0
  %v1220 = vsel %vm544, %v1213, 0
  %v1223 = vsel %vm544, %v1214, 0
  %v1226 = vsel %vm544, %v1215, 0
  %1228 = vmatprep.subr.bf16.mxu0 0
  %1229 = vmatpush1.bf16.msra.mxu0 %v1194
  %1230 = vmatprep.subr.bf16.mxu0 0
  %1231 = vmatpush1.bf16.msra.mxu0 %v1195
  %1232 = vmatprep.subr.bf16.mxu0 0
  %1233 = vmatpush1.bf16.msra.mxu0 0
  %1234 = vmatprep.subr.bf16.mxu0 0
  %1235 = vmatpush1.bf16.msra.mxu0 0
  %1236 = vmatprep.subr.bf16.mxu0 0
  %1237 = vmatpush1.bf16.msra.mxu0 0
  %1238 = vmatprep.subr.bf16.mxu0 0
  %1239 = vmatpush1.bf16.msra.mxu0 0
  %1240 = vmatprep.subr.bf16.mxu0 0
  %1241 = vmatpush1.bf16.msra.mxu0 0
  %1242 = vmatprep.subr.bf16.mxu0 0
  %1243 = vmatpush1.bf16.msra.mxu0 0
  %1244 = vmatprep.subr.bf16.mxu0 0
  %1245 = vmatpush1.bf16.msra.mxu0 0
  %1246 = vmatprep.subr.bf16.mxu0 0
  %1247 = vmatpush1.bf16.msra.mxu0 0
  %1248 = vmatprep.subr.bf16.mxu0 0
  %1249 = vmatpush1.bf16.msra.mxu0 0
  %1250 = vmatprep.subr.bf16.mxu0 0
  %1251 = vmatpush1.bf16.msra.mxu0 0
  %1252 = vmatprep.subr.bf16.mxu0 0
  %1253 = vmatpush1.bf16.msra.mxu0 0
  %1254 = vmatprep.subr.bf16.mxu0 0
  %1255 = vmatpush1.bf16.msra.mxu0 0
  %1256 = vmatprep.subr.bf16.mxu0 0
  %1257 = vmatpush1.bf16.msra.mxu0 0
  %1258 = vmatprep.subr.bf16.mxu0 0
  %1259 = vmatpush1.bf16.msra.mxu0 0
  %1260 = vmatprep.mubr.bf16.mxu0 0
  %1261 = vmatmul.mubr.bf16.gmra.mrb[0].mxu0 %v1217
  %v1262 = vpop.f32.mrb[0].mxu0
  %v1263 = vadd.f32 0.0, %v1262
  %v1264 = vpop.f32.mrb[0].mxu0
  %v1265 = vpop.f32.mrb[0].mxu0
  %v1266 = vadd.f32 0.0, %v1265
  %v1267 = vpop.f32.mrb[0].mxu0
  %1268 = vmatprep.mubr.bf16.mxu0 0
  %1269 = vmatmul.mubr.bf16.gmra.mrb[0].mxu0 %v1220
  %v1270 = vpop.f32.mrb[0].mxu0
  %v1271 = vadd.f32 0.0, %v1270
  %v1272 = vpop.f32.mrb[0].mxu0
  %v1273 = vpop.f32.mrb[0].mxu0
  %v1274 = vadd.f32 0.0, %v1273
  %v1275 = vpop.f32.mrb[0].mxu0
  %1276 = vmatprep.mubr.bf16.mxu0 0
  %1277 = vmatmul.mubr.bf16.gmra.mrb[0].mxu0 %v1223
  %v1278 = vpop.f32.mrb[0].mxu0
  %v1279 = vadd.f32 0.0, %v1278
  %v1280 = vpop.f32.mrb[0].mxu0
  %v1281 = vpop.f32.mrb[0].mxu0
  %v1282 = vadd.f32 0.0, %v1281
  %v1283 = vpop.f32.mrb[0].mxu0
  %1284 = vmatprep.mubr.bf16.mxu0 0
  %1285 = vmatmul.mubr.bf16.gmra.mrb[0].mxu0 %v1226
  %v1286 = vpop.f32.mrb[0].mxu0
  %v1287 = vadd.f32 0.0, %v1286
  %v1288 = vpop.f32.mrb[0].mxu0
  %v1289 = vpop.f32.mrb[0].mxu0
  %v1290 = vadd.f32 0.0, %v1289
  %v1291 = vpop.f32.mrb[0].mxu0
  %1292 = vdwg.mxu0
  %v1293 = vadd.f32 %v1178, %v1263
  %v1294 = vadd.f32 %v1179, %v1266
  %v1295 = vadd.f32 %v1180, %v1271
  %v1296 = vadd.f32 %v1181, %v1274
  %v1297 = vadd.f32 %v1182, %v1279
  %v1298 = vadd.f32 %v1183, %v1282
  %v1299 = vadd.f32 %v1184, %v1287
  %v1300 = vadd.f32 %v1185, %v1290
  %1301 = vrot.lane.b32.xlu0 %v1059, 126
  %v1302 = vpop.permute.xlu0 %1301
  %1303 = vrot.lane.b32.xlu0 %v1060, 126
  %v1304 = vpop.permute.xlu0 %1303
  %1305 = vrot.lane.b32.xlu0 %v1061, 126
  %v1306 = vpop.permute.xlu0 %1305
  %1307 = vrot.lane.b32.xlu0 %v1062, 126
  %v1308 = vpop.permute.xlu0 %1307
  %v1309 = vld [vmem:[%s3 + $0x120] sm:$0xf]
  %v1310 = vld [vmem:[%s3 + $0x124] sm:$0xf]
  %v1311 = vld [vmem:[%s3 + $0x128] sm:$0xf]
  %v1312 = vld [vmem:[%s3 + $0x12c] sm:$0xf]
  %v1313 = vld [vmem:[%s3 + $0x130] sm:$0xf]
  %v1314 = vld [vmem:[%s3 + $0x134] sm:$0xf]
  %v1315 = vld [vmem:[%s3 + $0x138] sm:$0xf]
  %v1316 = vld [vmem:[%s3 + $0x13c] sm:$0xf]
  %v1317 = vpack.c.bf16 %v1304, %v1302
  %v1318 = vpack.c.bf16 %v1308, %v1306
  %v1327 = vunpack.c.l.b16 %v1309
  %v1328 = vunpack.c.l.b16 %v1310
  %v1329 = vunpack.c.l.b16 %v1311
  %v1330 = vunpack.c.l.b16 %v1312
  %v1331 = vunpack.c.l.b16 %v1313
  %v1332 = vunpack.c.l.b16 %v1314
  %v1333 = vunpack.c.l.b16 %v1315
  %v1334 = vunpack.c.l.b16 %v1316
  %v1335 = vpack.c.b16 %v1328, %v1327
  %v1336 = vpack.c.b16 %v1330, %v1329
  %v1337 = vpack.c.b16 %v1332, %v1331
  %v1338 = vpack.c.b16 %v1334, %v1333
  %v1340 = vsel %vm544, %v1335, 0
  %v1343 = vsel %vm544, %v1336, 0
  %v1346 = vsel %vm544, %v1337, 0
  %v1349 = vsel %vm544, %v1338, 0
  %1351 = vmatprep.subr.bf16.mxu0 0
  %1352 = vmatpush1.bf16.msra.mxu0 %v1317
  %1353 = vmatprep.subr.bf16.mxu0 0
  %1354 = vmatpush1.bf16.msra.mxu0 %v1318
  %1355 = vmatprep.subr.bf16.mxu0 0
  %1356 = vmatpush1.bf16.msra.mxu0 0
  %1357 = vmatprep.subr.bf16.mxu0 0
  %1358 = vmatpush1.bf16.msra.mxu0 0
  %1359 = vmatprep.subr.bf16.mxu0 0
  %1360 = vmatpush1.bf16.msra.mxu0 0
  %1361 = vmatprep.subr.bf16.mxu0 0
  %1362 = vmatpush1.bf16.msra.mxu0 0
  %1363 = vmatprep.subr.bf16.mxu0 0
  %1364 = vmatpush1.bf16.msra.mxu0 0
  %1365 = vmatprep.subr.bf16.mxu0 0
  %1366 = vmatpush1.bf16.msra.mxu0 0
  %1367 = vmatprep.subr.bf16.mxu0 0
  %1368 = vmatpush1.bf16.msra.mxu0 0
  %1369 = vmatprep.subr.bf16.mxu0 0
  %1370 = vmatpush1.bf16.msra.mxu0 0
  %1371 = vmatprep.subr.bf16.mxu0 0
  %1372 = vmatpush1.bf16.msra.mxu0 0
  %1373 = vmatprep.subr.bf16.mxu0 0
  %1374 = vmatpush1.bf16.msra.mxu0 0
  %1375 = vmatprep.subr.bf16.mxu0 0
  %1376 = vmatpush1.bf16.msra.mxu0 0
  %1377 = vmatprep.subr.bf16.mxu0 0
  %1378 = vmatpush1.bf16.msra.mxu0 0
  %1379 = vmatprep.subr.bf16.mxu0 0
  %1380 = vmatpush1.bf16.msra.mxu0 0
  %1381 = vmatprep.subr.bf16.mxu0 0
  %1382 = vmatpush1.bf16.msra.mxu0 0
  %1383 = vmatprep.mubr.bf16.mxu0 0
  %1384 = vmatmul.mubr.bf16.gmra.mrb[0].mxu0 %v1340
  %v1385 = vpop.f32.mrb[0].mxu0
  %v1386 = vadd.f32 0.0, %v1385
  %v1387 = vpop.f32.mrb[0].mxu0
  %v1388 = vpop.f32.mrb[0].mxu0
  %v1389 = vadd.f32 0.0, %v1388
  %v1390 = vpop.f32.mrb[0].mxu0
  %1391 = vmatprep.mubr.bf16.mxu0 0
  %1392 = vmatmul.mubr.bf16.gmra.mrb[0].mxu0 %v1343
  %v1393 = vpop.f32.mrb[0].mxu0
  %v1394 = vadd.f32 0.0, %v1393
  %v1395 = vpop.f32.mrb[0].mxu0
  %v1396 = vpop.f32.mrb[0].mxu0
  %v1397 = vadd.f32 0.0, %v1396
  %v1398 = vpop.f32.mrb[0].mxu0
  %1399 = vmatprep.mubr.bf16.mxu0 0
  %1400 = vmatmul.mubr.bf16.gmra.mrb[0].mxu0 %v1346
  %v1401 = vpop.f32.mrb[0].mxu0
  %v1402 = vadd.f32 0.0, %v1401
  %v1403 = vpop.f32.mrb[0].mxu0
  %v1404 = vpop.f32.mrb[0].mxu0
  %v1405 = vadd.f32 0.0, %v1404
  %v1406 = vpop.f32.mrb[0].mxu0
  %1407 = vmatprep.mubr.bf16.mxu0 0
  %1408 = vmatmul.mubr.bf16.gmra.mrb[0].mxu0 %v1349
  %v1409 = vpop.f32.mrb[0].mxu0
  %v1410 = vadd.f32 0.0, %v1409
  %v1411 = vpop.f32.mrb[0].mxu0
  %v1412 = vpop.f32.mrb[0].mxu0
  %v1413 = vadd.f32 0.0, %v1412
  %v1414 = vpop.f32.mrb[0].mxu0
  %1415 = vdwg.mxu0
  %v1416 = vadd.f32 %v1293, %v1386
  %v1417 = vadd.f32 %v1294, %v1389
  %v1418 = vadd.f32 %v1295, %v1394
  %v1419 = vadd.f32 %v1296, %v1397
  %v1420 = vadd.f32 %v1297, %v1402
  %v1421 = vadd.f32 %v1298, %v1405
  %v1422 = vadd.f32 %v1299, %v1410
  %v1423 = vadd.f32 %v1300, %v1413
  %v1424 = vtanh.pop %v1416
  %v1425 = vtanh.pop %v1417
  %v1426 = vtanh.pop %v1418
  %v1427 = vtanh.pop %v1419
  %v1428 = vxor.u32 %v1420, 2147483648
  %v1429 = vxor.u32 %v1421, 2147483648
  %v1430 = vxor.u32 %v1422, 2147483648
  %v1431 = vxor.u32 %v1423, 2147483648
  %v1432 = vmul.f32 %v1428, 1.442695
  %v1433 = vpow.pop %v1432
  %v1434 = vmul.f32 %v1429, 1.442695
  %v1435 = vpow.pop %v1434
  %v1436 = vmul.f32 %v1430, 1.442695
  %v1437 = vpow.pop %v1436
  %v1438 = vmul.f32 %v1431, 1.442695
  %v1439 = vpow.pop %v1438
  %v1440 = vadd.f32 %v1433, 1.0
  %v1441 = vadd.f32 %v1435, 1.0
  %v1442 = vadd.f32 %v1437, 1.0
  %v1443 = vadd.f32 %v1439, 1.0
  %v1444 = vrcp.pop %v1440
  %v1445 = vmul.f32 1.0, %v1444
  %v1446 = vrcp.pop %v1441
  %v1447 = vmul.f32 1.0, %v1446
  %v1448 = vrcp.pop %v1442
  %v1449 = vmul.f32 1.0, %v1448
  %v1450 = vrcp.pop %v1443
  %v1451 = vmul.f32 1.0, %v1450
  %v1452 = vmul.f32 %v1424, %v1445
  %v1453 = vmul.f32 %v1425, %v1447
  %v1454 = vmul.f32 %v1426, %v1449
  %v1455 = vmul.f32 %v1427, %v1451
  %v1456 = vld [vmem:[%s3 + $0x140] sm:$0xf]
  %v1457 = vld [vmem:[%s3 + $0x144] sm:$0xf]
  %v1458 = vld [vmem:[%s3 + $0x148] sm:$0xf]
  %v1459 = vld [vmem:[%s3 + $0x14c] sm:$0xf]
  %v1460 = vpack.c.bf16 %v1453, %v1452
  %v1461 = vpack.c.bf16 %v1455, %v1454
  %v1462 = vld [vmem:[%s4 + $0xe0] sm:$0xff]
  %v1463 = vld [vmem:[%s4 + $0xe8] sm:$0xff]
  %v1464 = vld [vmem:[%s4 + $0xf0] sm:$0xff]
  %v1465 = vld [vmem:[%s4 + $0xf8] sm:$0xff]
  %1467 = vset.pattern.permute.xlu0 0
  %1468 = vperm.xlu0 %1467, %v1462
  %v1469 = vpop.permute.xlu0 %1468
  %1472 = vset.pattern.permute.xlu0 0
  %1473 = vperm.xlu0 %1472, %v1463
  %v1474 = vpop.permute.xlu0 %1473
  %1477 = vset.pattern.permute.xlu0 0
  %1478 = vperm.xlu0 %1477, %v1464
  %v1479 = vpop.permute.xlu0 %1478
  %1482 = vset.pattern.permute.xlu0 0
  %1483 = vperm.xlu0 %1482, %v1465
  %v1484 = vpop.permute.xlu0 %1483
  %v1490 = vunpack.c.l.b16 %v1456
  %v1491 = vunpack.c.l.b16 %v1457
  %v1492 = vunpack.c.l.b16 %v1458
  %v1493 = vunpack.c.l.b16 %v1459
  %v1494 = vpack.c.b16 %v1491, %v1490
  %v1495 = vpack.c.b16 %v1493, %v1492
  %v1497 = vsel %vm544, %v1494, 0
  %v1500 = vsel %vm544, %v1495, 0
  %1502 = vmatprep.subr.bf16.mxu0 0
  %1503 = vmatpush1.bf16.msra.mxu0 %v1460
  %1504 = vmatprep.subr.bf16.mxu0 0
  %1505 = vmatpush1.bf16.msra.mxu0 %v1461
  %1506 = vmatprep.subr.bf16.mxu0 0
  %1507 = vmatpush1.bf16.msra.mxu0 0
  %1508 = vmatprep.subr.bf16.mxu0 0
  %1509 = vmatpush1.bf16.msra.mxu0 0
  %1510 = vmatprep.subr.bf16.mxu0 0
  %1511 = vmatpush1.bf16.msra.mxu0 0
  %1512 = vmatprep.subr.bf16.mxu0 0
  %1513 = vmatpush1.bf16.msra.mxu0 0
  %1514 = vmatprep.subr.bf16.mxu0 0
  %1515 = vmatpush1.bf16.msra.mxu0 0
  %1516 = vmatprep.subr.bf16.mxu0 0
  %1517 = vmatpush1.bf16.msra.mxu0 0
  %1518 = vmatprep.subr.bf16.mxu0 0
  %1519 = vmatpush1.bf16.msra.mxu0 0
  %1520 = vmatprep.subr.bf16.mxu0 0
  %1521 = vmatpush1.bf16.msra.mxu0 0
  %1522 = vmatprep.subr.bf16.mxu0 0
  %1523 = vmatpush1.bf16.msra.mxu0 0
  %1524 = vmatprep.subr.bf16.mxu0 0
  %1525 = vmatpush1.bf16.msra.mxu0 0
  %1526 = vmatprep.subr.bf16.mxu0 0
  %1527 = vmatpush1.bf16.msra.mxu0 0
  %1528 = vmatprep.subr.bf16.mxu0 0
  %1529 = vmatpush1.bf16.msra.mxu0 0
  %1530 = vmatprep.subr.bf16.mxu0 0
  %1531 = vmatpush1.bf16.msra.mxu0 0
  %1532 = vmatprep.subr.bf16.mxu0 0
  %1533 = vmatpush1.bf16.msra.mxu0 0
  %1534 = vmatprep.mubr.bf16.mxu0 0
  %1535 = vmatmul.mubr.bf16.gmra.mrb[0].mxu0 %v1497
  %v1536 = vpop.f32.mrb[0].mxu0
  %v1537 = vadd.f32 %v1469, %v1536
  %v1538 = vpop.f32.mrb[0].mxu0
  %v1539 = vpop.f32.mrb[0].mxu0
  %v1540 = vadd.f32 %v1474, %v1539
  %v1541 = vpop.f32.mrb[0].mxu0
  %1542 = vmatprep.mubr.bf16.mxu0 0
  %1543 = vmatmul.mubr.bf16.gmra.mrb[0].mxu0 %v1500
  %v1544 = vpop.f32.mrb[0].mxu0
  %v1545 = vadd.f32 %v1479, %v1544
  %v1546 = vpop.f32.mrb[0].mxu0
  %v1547 = vpop.f32.mrb[0].mxu0
  %v1548 = vadd.f32 %v1484, %v1547
  %v1549 = vpop.f32.mrb[0].mxu0
  %1550 = vdwg.mxu0
  %v1551 = vadd.f32 %v1041, %v1537
  %v1552 = vadd.f32 %v1044, %v1540
  %v1553 = vadd.f32 %v1049, %v1545
  %v1554 = vadd.f32 %v1052, %v1548
  %v1555 = vld [vmem:[%s3 + $0x150] sm:$0x3]
  %v1556 = vpack.c.bf16 %v1552, %v1551
  %v1557 = vpack.c.bf16 %v1554, %v1553
  %v1558 = vld [vmem:[%s4 + $0x100] sm:$0xf]
  %1560 = vset.pattern.permute.xlu0 0
  %1561 = vperm.xlu0 %1560, %v1558
  %v1562 = vpop.permute.xlu0 %1561
  %v1565 = vsel %vm544, %v1555, 0
  %1567 = vmatprep.subr.bf16.mxu0 0
  %1568 = vmatpush1.bf16.msra.mxu0 %v1556
  %1569 = vmatprep.subr.bf16.mxu0 0
  %1570 = vmatpush1.bf16.msra.mxu0 %v1557
  %1571 = vmatprep.subr.bf16.mxu0 0
  %1572 = vmatpush1.bf16.msra.mxu0 0
  %1573 = vmatprep.subr.bf16.mxu0 0
  %1574 = vmatpush1.bf16.msra.mxu0 0
  %1575 = vmatprep.subr.bf16.mxu0 0
  %1576 = vmatpush1.bf16.msra.mxu0 0
  %1577 = vmatprep.subr.bf16.mxu0 0
  %1578 = vmatpush1.bf16.msra.mxu0 0
  %1579 = vmatprep.subr.bf16.mxu0 0
  %1580 = vmatpush1.bf16.msra.mxu0 0
  %1581 = vmatprep.subr.bf16.mxu0 0
  %1582 = vmatpush1.bf16.msra.mxu0 0
  %1583 = vmatprep.subr.bf16.mxu0 0
  %1584 = vmatpush1.bf16.msra.mxu0 0
  %1585 = vmatprep.subr.bf16.mxu0 0
  %1586 = vmatpush1.bf16.msra.mxu0 0
  %1587 = vmatprep.subr.bf16.mxu0 0
  %1588 = vmatpush1.bf16.msra.mxu0 0
  %1589 = vmatprep.subr.bf16.mxu0 0
  %1590 = vmatpush1.bf16.msra.mxu0 0
  %1591 = vmatprep.subr.bf16.mxu0 0
  %1592 = vmatpush1.bf16.msra.mxu0 0
  %1593 = vmatprep.subr.bf16.mxu0 0
  %1594 = vmatpush1.bf16.msra.mxu0 0
  %1595 = vmatprep.subr.bf16.mxu0 0
  %1596 = vmatpush1.bf16.msra.mxu0 0
  %1597 = vmatprep.subr.bf16.mxu0 0
  %1598 = vmatpush1.bf16.msra.mxu0 0
  %1599 = vmatprep.mubr.bf16.mxu0 0
  %1600 = vmatmul.mubr.bf16.gmra.mrb[0].mxu0 %v1565
  %v1601 = vpop.f32.mrb[0].mxu0
  %v1602 = vadd.f32 %v1562, %v1601
  %v1603 = vpop.f32.mrb[0].mxu0
  %v1604 = vpop.f32.mrb[0].mxu0
  %v1605 = vpop.f32.mrb[0].mxu0
  %1606 = vdwg.mxu0
  %v1607 = vld [vmem:[%s3 + $0x158] sm:$0x3]
  %v1608 = vld [vmem:[%s4 + $0x108] sm:$0xf]
  %1610 = vset.pattern.permute.xlu0 0
  %1611 = vperm.xlu0 %1610, %v1608
  %v1612 = vpop.permute.xlu0 %1611
  %v1615 = vsel %vm544, %v1607, 0
  %1617 = vmatprep.subr.bf16.mxu0 0
  %1618 = vmatpush1.bf16.msra.mxu0 %v1556
  %1619 = vmatprep.subr.bf16.mxu0 0
  %1620 = vmatpush1.bf16.msra.mxu0 %v1557
  %1621 = vmatprep.subr.bf16.mxu0 0
  %1622 = vmatpush1.bf16.msra.mxu0 0
  %1623 = vmatprep.subr.bf16.mxu0 0
  %1624 = vmatpush1.bf16.msra.mxu0 0
  %1625 = vmatprep.subr.bf16.mxu0 0
  %1626 = vmatpush1.bf16.msra.mxu0 0
  %1627 = vmatprep.subr.bf16.mxu0 0
  %1628 = vmatpush1.bf16.msra.mxu0 0
  %1629 = vmatprep.subr.bf16.mxu0 0
  %1630 = vmatpush1.bf16.msra.mxu0 0
  %1631 = vmatprep.subr.bf16.mxu0 0
  %1632 = vmatpush1.bf16.msra.mxu0 0
  %1633 = vmatprep.subr.bf16.mxu0 0
  %1634 = vmatpush1.bf16.msra.mxu0 0
  %1635 = vmatprep.subr.bf16.mxu0 0
  %1636 = vmatpush1.bf16.msra.mxu0 0
  %1637 = vmatprep.subr.bf16.mxu0 0
  %1638 = vmatpush1.bf16.msra.mxu0 0
  %1639 = vmatprep.subr.bf16.mxu0 0
  %1640 = vmatpush1.bf16.msra.mxu0 0
  %1641 = vmatprep.subr.bf16.mxu0 0
  %1642 = vmatpush1.bf16.msra.mxu0 0
  %1643 = vmatprep.subr.bf16.mxu0 0
  %1644 = vmatpush1.bf16.msra.mxu0 0
  %1645 = vmatprep.subr.bf16.mxu0 0
  %1646 = vmatpush1.bf16.msra.mxu0 0
  %1647 = vmatprep.subr.bf16.mxu0 0
  %1648 = vmatpush1.bf16.msra.mxu0 0
  %1649 = vmatprep.mubr.bf16.mxu0 0
  %1650 = vmatmul.mubr.bf16.gmra.mrb[0].mxu0 %v1615
  %v1651 = vpop.f32.mrb[0].mxu0
  %v1652 = vadd.f32 %v1612, %v1651
  %v1653 = vpop.f32.mrb[0].mxu0
  %v1654 = vpop.f32.mrb[0].mxu0
  %v1655 = vpop.f32.mrb[0].mxu0
  %1656 = vdwg.mxu0
  %v1657 = vmul.f32 %v1652, %v500
  %v1658 = vmul.f32 %v1657, 1.442695
  %v1659 = vpow.pop %v1658
  %v1660 = vmul.f32 %v115, %v1659
  %v1661 = vadd.f32 %v1660, %v1602
  %vm1662 = vcmp.ne.f32.partialorder %v1661, %v1661
  %v1663 = vsel %vm1662, 0.0, %v1661
  %vm1664 = vcmp.ne.f32.partialorder %v71, %v71
  %v1665 = vsel %vm1664, 0.0, %v71
  %v1666 = vsel %vm32, %v1657, 0.0
  %v1667 = vrot.slane %v1666, 4
  %v1668 = vadd.f32 %v1666, %v1667
  %v1669 = vrot.slane %v1668, 2
  %v1670 = vadd.f32 %v1668, %v1669
  %v1671 = vrot.slane %v1670, 1
  %v1672 = vadd.f32 %v1670, %v1671
  %1673 = vst [vmem:[%s6] sm:$0x1] %v1672
  %v1674 = vpack.c.bf16 %v1665, %v1665
  %v1675 = vpack.c.bf16 %v1663, %v1663
  %v1676 = vld [vmem:[%s3 + $0x160] sm:$0x1]
  %v1677 = vld [vmem:[%s3 + $0x168] sm:$0x1]
  %v1679 = vsel %vm436, %v1677, 0
  %v1682 = vsel %vm443, %v1675, 0
  %1684 = vmatprep.subr.bf16.mxu0 0
  %1685 = vmatpush1.bf16.msra.mxu0 %v1682
  %1686 = vmatprep.subr.bf16.mxu0 0
  %1687 = vmatpush1.bf16.msra.mxu0 0
  %1688 = vmatprep.subr.bf16.mxu0 0
  %1689 = vmatpush1.bf16.msra.mxu0 0
  %1690 = vmatprep.subr.bf16.mxu0 0
  %1691 = vmatpush1.bf16.msra.mxu0 0
  %1692 = vmatprep.subr.bf16.mxu0 0
  %1693 = vmatpush1.bf16.msra.mxu0 0
  %1694 = vmatprep.subr.bf16.mxu0 0
  %1695 = vmatpush1.bf16.msra.mxu0 0
  %1696 = vmatprep.subr.bf16.mxu0 0
  %1697 = vmatpush1.bf16.msra.mxu0 0
  %1698 = vmatprep.subr.bf16.mxu0 0
  %1699 = vmatpush1.bf16.msra.mxu0 0
  %1700 = vmatprep.subr.bf16.mxu0 0
  %1701 = vmatpush1.bf16.msra.mxu0 0
  %1702 = vmatprep.subr.bf16.mxu0 0
  %1703 = vmatpush1.bf16.msra.mxu0 0
  %1704 = vmatprep.subr.bf16.mxu0 0
  %1705 = vmatpush1.bf16.msra.mxu0 0
  %1706 = vmatprep.subr.bf16.mxu0 0
  %1707 = vmatpush1.bf16.msra.mxu0 0
  %1708 = vmatprep.subr.bf16.mxu0 0
  %1709 = vmatpush1.bf16.msra.mxu0 0
  %1710 = vmatprep.subr.bf16.mxu0 0
  %1711 = vmatpush1.bf16.msra.mxu0 0
  %1712 = vmatprep.subr.bf16.mxu0 0
  %1713 = vmatpush1.bf16.msra.mxu0 0
  %1714 = vmatprep.subr.bf16.mxu0 0
  %1715 = vmatpush1.bf16.msra.mxu0 0
  %1716 = vmatprep.mubr.bf16.mxu0 0
  %1717 = vmatmul.mubr.bf16.gmra.mrb[0].mxu0 %v1679
  %v1718 = vpop.f32.mrb[0].mxu0
  %v1719 = vadd.f32 0.0, %v1718
  %v1720 = vpop.f32.mrb[0].mxu0
  %v1721 = vpop.f32.mrb[0].mxu0
  %v1722 = vpop.f32.mrb[0].mxu0
  %1723 = vdwg.mxu0
  %v1725 = vsel %vm436, %v1676, 0
  %v1728 = vsel %vm443, %v1674, 0
  %1730 = vmatprep.subr.bf16.mxu0 0
  %1731 = vmatpush1.bf16.msra.mxu0 %v1728
  %1732 = vmatprep.subr.bf16.mxu0 0
  %1733 = vmatpush1.bf16.msra.mxu0 0
  %1734 = vmatprep.subr.bf16.mxu0 0
  %1735 = vmatpush1.bf16.msra.mxu0 0
  %1736 = vmatprep.subr.bf16.mxu0 0
  %1737 = vmatpush1.bf16.msra.mxu0 0
  %1738 = vmatprep.subr.bf16.mxu0 0
  %1739 = vmatpush1.bf16.msra.mxu0 0
  %1740 = vmatprep.subr.bf16.mxu0 0
  %1741 = vmatpush1.bf16.msra.mxu0 0
  %1742 = vmatprep.subr.bf16.mxu0 0
  %1743 = vmatpush1.bf16.msra.mxu0 0
  %1744 = vmatprep.subr.bf16.mxu0 0
  %1745 = vmatpush1.bf16.msra.mxu0 0
  %1746 = vmatprep.subr.bf16.mxu0 0
  %1747 = vmatpush1.bf16.msra.mxu0 0
  %1748 = vmatprep.subr.bf16.mxu0 0
  %1749 = vmatpush1.bf16.msra.mxu0 0
  %1750 = vmatprep.subr.bf16.mxu0 0
  %1751 = vmatpush1.bf16.msra.mxu0 0
  %1752 = vmatprep.subr.bf16.mxu0 0
  %1753 = vmatpush1.bf16.msra.mxu0 0
  %1754 = vmatprep.subr.bf16.mxu0 0
  %1755 = vmatpush1.bf16.msra.mxu0 0
  %1756 = vmatprep.subr.bf16.mxu0 0
  %1757 = vmatpush1.bf16.msra.mxu0 0
  %1758 = vmatprep.subr.bf16.mxu0 0
  %1759 = vmatpush1.bf16.msra.mxu0 0
  %1760 = vmatprep.subr.bf16.mxu0 0
  %1761 = vmatpush1.bf16.msra.mxu0 0
  %1762 = vmatprep.mubr.bf16.mxu0 0
  %1763 = vmatmul.mubr.bf16.gmra.mrb[0].mxu0 %v1725
  %v1764 = vpop.f32.mrb[0].mxu0
  %v1765 = vadd.f32 %v1719, %v1764
  %v1766 = vpop.f32.mrb[0].mxu0
  %v1767 = vpop.f32.mrb[0].mxu0
  %v1768 = vpop.f32.mrb[0].mxu0
  %1769 = vdwg.mxu0
  %v1770 = vld [vmem:[%s3 + $0x170] sm:$0x1]
  %v1771 = vld [vmem:[%s3 + $0x178] sm:$0x1]
  %v1773 = vsel %vm436, %v1771, 0
  %1775 = vmatprep.subr.bf16.mxu0 0
  %1776 = vmatpush1.bf16.msra.mxu0 %v1682
  %1777 = vmatprep.subr.bf16.mxu0 0
  %1778 = vmatpush1.bf16.msra.mxu0 0
  %1779 = vmatprep.subr.bf16.mxu0 0
  %1780 = vmatpush1.bf16.msra.mxu0 0
  %1781 = vmatprep.subr.bf16.mxu0 0
  %1782 = vmatpush1.bf16.msra.mxu0 0
  %1783 = vmatprep.subr.bf16.mxu0 0
  %1784 = vmatpush1.bf16.msra.mxu0 0
  %1785 = vmatprep.subr.bf16.mxu0 0
  %1786 = vmatpush1.bf16.msra.mxu0 0
  %1787 = vmatprep.subr.bf16.mxu0 0
  %1788 = vmatpush1.bf16.msra.mxu0 0
  %1789 = vmatprep.subr.bf16.mxu0 0
  %1790 = vmatpush1.bf16.msra.mxu0 0
  %1791 = vmatprep.subr.bf16.mxu0 0
  %1792 = vmatpush1.bf16.msra.mxu0 0
  %1793 = vmatprep.subr.bf16.mxu0 0
  %1794 = vmatpush1.bf16.msra.mxu0 0
  %1795 = vmatprep.subr.bf16.mxu0 0
  %1796 = vmatpush1.bf16.msra.mxu0 0
  %1797 = vmatprep.subr.bf16.mxu0 0
  %1798 = vmatpush1.bf16.msra.mxu0 0
  %1799 = vmatprep.subr.bf16.mxu0 0
  %1800 = vmatpush1.bf16.msra.mxu0 0
  %1801 = vmatprep.subr.bf16.mxu0 0
  %1802 = vmatpush1.bf16.msra.mxu0 0
  %1803 = vmatprep.subr.bf16.mxu0 0
  %1804 = vmatpush1.bf16.msra.mxu0 0
  %1805 = vmatprep.subr.bf16.mxu0 0
  %1806 = vmatpush1.bf16.msra.mxu0 0
  %1807 = vmatprep.mubr.bf16.mxu0 0
  %1808 = vmatmul.mubr.bf16.gmra.mrb[0].mxu0 %v1773
  %v1809 = vpop.f32.mrb[0].mxu0
  %v1810 = vadd.f32 0.0, %v1809
  %v1811 = vpop.f32.mrb[0].mxu0
  %v1812 = vpop.f32.mrb[0].mxu0
  %v1813 = vpop.f32.mrb[0].mxu0
  %1814 = vdwg.mxu0
  %v1816 = vsel %vm436, %v1770, 0
  %1818 = vmatprep.subr.bf16.mxu0 0
  %1819 = vmatpush1.bf16.msra.mxu0 %v1728
  %1820 = vmatprep.subr.bf16.mxu0 0
  %1821 = vmatpush1.bf16.msra.mxu0 0
  %1822 = vmatprep.subr.bf16.mxu0 0
  %1823 = vmatpush1.bf16.msra.mxu0 0
  %1824 = vmatprep.subr.bf16.mxu0 0
  %1825 = vmatpush1.bf16.msra.mxu0 0
  %1826 = vmatprep.subr.bf16.mxu0 0
  %1827 = vmatpush1.bf16.msra.mxu0 0
  %1828 = vmatprep.subr.bf16.mxu0 0
  %1829 = vmatpush1.bf16.msra.mxu0 0
  %1830 = vmatprep.subr.bf16.mxu0 0
  %1831 = vmatpush1.bf16.msra.mxu0 0
  %1832 = vmatprep.subr.bf16.mxu0 0
  %1833 = vmatpush1.bf16.msra.mxu0 0
  %1834 = vmatprep.subr.bf16.mxu0 0
  %1835 = vmatpush1.bf16.msra.mxu0 0
  %1836 = vmatprep.subr.bf16.mxu0 0
  %1837 = vmatpush1.bf16.msra.mxu0 0
  %1838 = vmatprep.subr.bf16.mxu0 0
  %1839 = vmatpush1.bf16.msra.mxu0 0
  %1840 = vmatprep.subr.bf16.mxu0 0
  %1841 = vmatpush1.bf16.msra.mxu0 0
  %1842 = vmatprep.subr.bf16.mxu0 0
  %1843 = vmatpush1.bf16.msra.mxu0 0
  %1844 = vmatprep.subr.bf16.mxu0 0
  %1845 = vmatpush1.bf16.msra.mxu0 0
  %1846 = vmatprep.subr.bf16.mxu0 0
  %1847 = vmatpush1.bf16.msra.mxu0 0
  %1848 = vmatprep.subr.bf16.mxu0 0
  %1849 = vmatpush1.bf16.msra.mxu0 0
  %1850 = vmatprep.mubr.bf16.mxu0 0
  %1851 = vmatmul.mubr.bf16.gmra.mrb[0].mxu0 %v1816
  %v1852 = vpop.f32.mrb[0].mxu0
  %v1853 = vadd.f32 %v1810, %v1852
  %v1854 = vpop.f32.mrb[0].mxu0
  %v1855 = vpop.f32.mrb[0].mxu0
  %v1856 = vpop.f32.mrb[0].mxu0
  %1857 = vdwg.mxu0
  %v1858 = vld [vmem:[%s3 + $0x180] sm:$0x3]
  %v1859 = vld [vmem:[%s3 + $0x188] sm:$0x3]
  %v1861 = vsel %vm436, %v1859, 0
  %1863 = vmatprep.subr.bf16.mxu0 0
  %1864 = vmatpush1.bf16.msra.mxu0 %v1682
  %1865 = vmatprep.subr.bf16.mxu0 0
  %1866 = vmatpush1.bf16.msra.mxu0 0
  %1867 = vmatprep.subr.bf16.mxu0 0
  %1868 = vmatpush1.bf16.msra.mxu0 0
  %1869 = vmatprep.subr.bf16.mxu0 0
  %1870 = vmatpush1.bf16.msra.mxu0 0
  %1871 = vmatprep.subr.bf16.mxu0 0
  %1872 = vmatpush1.bf16.msra.mxu0 0
  %1873 = vmatprep.subr.bf16.mxu0 0
  %1874 = vmatpush1.bf16.msra.mxu0 0
  %1875 = vmatprep.subr.bf16.mxu0 0
  %1876 = vmatpush1.bf16.msra.mxu0 0
  %1877 = vmatprep.subr.bf16.mxu0 0
  %1878 = vmatpush1.bf16.msra.mxu0 0
  %1879 = vmatprep.subr.bf16.mxu0 0
  %1880 = vmatpush1.bf16.msra.mxu0 0
  %1881 = vmatprep.subr.bf16.mxu0 0
  %1882 = vmatpush1.bf16.msra.mxu0 0
  %1883 = vmatprep.subr.bf16.mxu0 0
  %1884 = vmatpush1.bf16.msra.mxu0 0
  %1885 = vmatprep.subr.bf16.mxu0 0
  %1886 = vmatpush1.bf16.msra.mxu0 0
  %1887 = vmatprep.subr.bf16.mxu0 0
  %1888 = vmatpush1.bf16.msra.mxu0 0
  %1889 = vmatprep.subr.bf16.mxu0 0
  %1890 = vmatpush1.bf16.msra.mxu0 0
  %1891 = vmatprep.subr.bf16.mxu0 0
  %1892 = vmatpush1.bf16.msra.mxu0 0
  %1893 = vmatprep.subr.bf16.mxu0 0
  %1894 = vmatpush1.bf16.msra.mxu0 0
  %1895 = vmatprep.mubr.bf16.mxu0 0
  %1896 = vmatmul.mubr.bf16.gmra.mrb[0].mxu0 %v1861
  %v1897 = vpop.f32.mrb[0].mxu0
  %v1898 = vadd.f32 0.0, %v1897
  %v1899 = vpop.f32.mrb[0].mxu0
  %v1900 = vpop.f32.mrb[0].mxu0
  %v1901 = vpop.f32.mrb[0].mxu0
  %1902 = vdwg.mxu0
  %v1904 = vsel %vm436, %v1858, 0
  %1906 = vmatprep.subr.bf16.mxu0 0
  %1907 = vmatpush1.bf16.msra.mxu0 %v1728
  %1908 = vmatprep.subr.bf16.mxu0 0
  %1909 = vmatpush1.bf16.msra.mxu0 0
  %1910 = vmatprep.subr.bf16.mxu0 0
  %1911 = vmatpush1.bf16.msra.mxu0 0
  %1912 = vmatprep.subr.bf16.mxu0 0
  %1913 = vmatpush1.bf16.msra.mxu0 0
  %1914 = vmatprep.subr.bf16.mxu0 0
  %1915 = vmatpush1.bf16.msra.mxu0 0
  %1916 = vmatprep.subr.bf16.mxu0 0
  %1917 = vmatpush1.bf16.msra.mxu0 0
  %1918 = vmatprep.subr.bf16.mxu0 0
  %1919 = vmatpush1.bf16.msra.mxu0 0
  %1920 = vmatprep.subr.bf16.mxu0 0
  %1921 = vmatpush1.bf16.msra.mxu0 0
  %1922 = vmatprep.subr.bf16.mxu0 0
  %1923 = vmatpush1.bf16.msra.mxu0 0
  %1924 = vmatprep.subr.bf16.mxu0 0
  %1925 = vmatpush1.bf16.msra.mxu0 0
  %1926 = vmatprep.subr.bf16.mxu0 0
  %1927 = vmatpush1.bf16.msra.mxu0 0
  %1928 = vmatprep.subr.bf16.mxu0 0
  %1929 = vmatpush1.bf16.msra.mxu0 0
  %1930 = vmatprep.subr.bf16.mxu0 0
  %1931 = vmatpush1.bf16.msra.mxu0 0
  %1932 = vmatprep.subr.bf16.mxu0 0
  %1933 = vmatpush1.bf16.msra.mxu0 0
  %1934 = vmatprep.subr.bf16.mxu0 0
  %1935 = vmatpush1.bf16.msra.mxu0 0
  %1936 = vmatprep.subr.bf16.mxu0 0
  %1937 = vmatpush1.bf16.msra.mxu0 0
  %1938 = vmatprep.mubr.bf16.mxu0 0
  %1939 = vmatmul.mubr.bf16.gmra.mrb[0].mxu0 %v1904
  %v1940 = vpop.f32.mrb[0].mxu0
  %v1941 = vadd.f32 %v1898, %v1940
  %v1942 = vpop.f32.mrb[0].mxu0
  %v1943 = vpop.f32.mrb[0].mxu0
  %v1944 = vpop.f32.mrb[0].mxu0
  %1945 = vdwg.mxu0
  %v1946 = vld [vmem:[%s3 + $0x1b0] sm:$0xf]
  %v1947 = vld [vmem:[%s3 + $0x1b4] sm:$0xf]
  %v1948 = vld [vmem:[%s3 + $0x1b8] sm:$0xf]
  %v1949 = vld [vmem:[%s3 + $0x1bc] sm:$0xf]
  %v1950 = vld [vmem:[%s3 + $0x1c0] sm:$0xf]
  %v1951 = vld [vmem:[%s3 + $0x1c4] sm:$0xf]
  %v1952 = vld [vmem:[%s3 + $0x1c8] sm:$0xf]
  %v1953 = vld [vmem:[%s3 + $0x1cc] sm:$0xf]
  %v1954 = vld [vmem:[%s3 + $0x1d0] sm:$0xf]
  %v1955 = vld [vmem:[%s3 + $0x1d4] sm:$0xf]
  %v1956 = vld [vmem:[%s3 + $0x1d8] sm:$0xf]
  %v1957 = vld [vmem:[%s3 + $0x1dc] sm:$0xf]
  %v1958 = vld [vmem:[%s3 + $0x1e0] sm:$0xf]
  %v1959 = vld [vmem:[%s3 + $0x1e4] sm:$0xf]
  %v1960 = vld [vmem:[%s3 + $0x1e8] sm:$0xf]
  %v1961 = vld [vmem:[%s3 + $0x1ec] sm:$0xf]
  %v1962 = vld [vmem:[%s4 + $0x130] sm:$0xff]
  %v1963 = vld [vmem:[%s4 + $0x138] sm:$0xff]
  %v1964 = vld [vmem:[%s4 + $0x140] sm:$0xff]
  %v1965 = vld [vmem:[%s4 + $0x148] sm:$0xff]
  %v1966 = vld [vmem:[%s4 + $0x150] sm:$0xff]
  %v1967 = vld [vmem:[%s4 + $0x158] sm:$0xff]
  %v1968 = vld [vmem:[%s4 + $0x160] sm:$0xff]
  %v1969 = vld [vmem:[%s4 + $0x168] sm:$0xff]
  %v1970 = vld [vmem:[%s4 + $0x170] sm:$0xff]
  %v1971 = vld [vmem:[%s4 + $0x178] sm:$0xff]
  %v1972 = vld [vmem:[%s4 + $0x180] sm:$0xff]
  %v1973 = vld [vmem:[%s4 + $0x188] sm:$0xff]
  %v1974 = vld [vmem:[%s4 + $0x190] sm:$0xff]
  %v1975 = vld [vmem:[%s4 + $0x198] sm:$0xff]
  %v1976 = vld [vmem:[%s4 + $0x1a0] sm:$0xff]
  %v1977 = vld [vmem:[%s4 + $0x1a8] sm:$0xff]
  %1979 = vset.pattern.permute.xlu0 0
  %1980 = vperm.xlu0 %1979, %v1962
  %v1981 = vpop.permute.xlu0 %1980
  %1984 = vset.pattern.permute.xlu0 0
  %1985 = vperm.xlu0 %1984, %v1963
  %v1986 = vpop.permute.xlu0 %1985
  %1989 = vset.pattern.permute.xlu0 0
  %1990 = vperm.xlu0 %1989, %v1964
  %v1991 = vpop.permute.xlu0 %1990
  %1994 = vset.pattern.permute.xlu0 0
  %1995 = vperm.xlu0 %1994, %v1965
  %v1996 = vpop.permute.xlu0 %1995
  %1999 = vset.pattern.permute.xlu0 0
  %2000 = vperm.xlu0 %1999, %v1966
  %v2001 = vpop.permute.xlu0 %2000
  %2004 = vset.pattern.permute.xlu0 0
  %2005 = vperm.xlu0 %2004, %v1967
  %v2006 = vpop.permute.xlu0 %2005
  %2009 = vset.pattern.permute.xlu0 0
  %2010 = vperm.xlu0 %2009, %v1968
  %v2011 = vpop.permute.xlu0 %2010
  %2014 = vset.pattern.permute.xlu0 0
  %2015 = vperm.xlu0 %2014, %v1969
  %v2016 = vpop.permute.xlu0 %2015
  %2019 = vset.pattern.permute.xlu0 0
  %2020 = vperm.xlu0 %2019, %v1970
  %v2021 = vpop.permute.xlu0 %2020
  %2024 = vset.pattern.permute.xlu0 0
  %2025 = vperm.xlu0 %2024, %v1971
  %v2026 = vpop.permute.xlu0 %2025
  %2029 = vset.pattern.permute.xlu0 0
  %2030 = vperm.xlu0 %2029, %v1972
  %v2031 = vpop.permute.xlu0 %2030
  %2034 = vset.pattern.permute.xlu0 0
  %2035 = vperm.xlu0 %2034, %v1973
  %v2036 = vpop.permute.xlu0 %2035
  %2039 = vset.pattern.permute.xlu0 0
  %2040 = vperm.xlu0 %2039, %v1974
  %v2041 = vpop.permute.xlu0 %2040
  %2044 = vset.pattern.permute.xlu0 0
  %2045 = vperm.xlu0 %2044, %v1975
  %v2046 = vpop.permute.xlu0 %2045
  %2049 = vset.pattern.permute.xlu0 0
  %2050 = vperm.xlu0 %2049, %v1976
  %v2051 = vpop.permute.xlu0 %2050
  %2054 = vset.pattern.permute.xlu0 0
  %2055 = vperm.xlu0 %2054, %v1977
  %v2056 = vpop.permute.xlu0 %2055
  %v2074 = vunpack.c.l.b16 %v1946
  %v2075 = vunpack.c.l.b16 %v1947
  %v2076 = vunpack.c.l.b16 %v1948
  %v2077 = vunpack.c.l.b16 %v1949
  %v2078 = vunpack.c.l.b16 %v1950
  %v2079 = vunpack.c.l.b16 %v1951
  %v2080 = vunpack.c.l.b16 %v1952
  %v2081 = vunpack.c.l.b16 %v1953
  %v2082 = vunpack.c.l.b16 %v1954
  %v2083 = vunpack.c.l.b16 %v1955
  %v2084 = vunpack.c.l.b16 %v1956
  %v2085 = vunpack.c.l.b16 %v1957
  %v2086 = vunpack.c.l.b16 %v1958
  %v2087 = vunpack.c.l.b16 %v1959
  %v2088 = vunpack.c.l.b16 %v1960
  %v2089 = vunpack.c.l.b16 %v1961
  %v2090 = vpack.c.b16 %v2075, %v2074
  %v2091 = vpack.c.b16 %v2077, %v2076
  %v2092 = vpack.c.b16 %v2079, %v2078
  %v2093 = vpack.c.b16 %v2081, %v2080
  %v2094 = vpack.c.b16 %v2083, %v2082
  %v2095 = vpack.c.b16 %v2085, %v2084
  %v2096 = vpack.c.b16 %v2087, %v2086
  %v2097 = vpack.c.b16 %v2089, %v2088
  %v2099 = vsel %vm28, %v2090, 0
  %v2102 = vsel %vm28, %v2091, 0
  %v2105 = vsel %vm28, %v2092, 0
  %v2108 = vsel %vm28, %v2093, 0
  %v2111 = vsel %vm28, %v2094, 0
  %v2114 = vsel %vm28, %v2095, 0
  %v2117 = vsel %vm28, %v2096, 0
  %v2120 = vsel %vm28, %v2097, 0
  %2122 = vmatprep.subr.bf16.mxu0 0
  %2123 = vmatpush1.bf16.msra.mxu0 %v298
  %2124 = vmatprep.subr.bf16.mxu0 0
  %2125 = vmatpush1.bf16.msra.mxu0 0
  %2126 = vmatprep.subr.bf16.mxu0 0
  %2127 = vmatpush1.bf16.msra.mxu0 0
  %2128 = vmatprep.subr.bf16.mxu0 0
  %2129 = vmatpush1.bf16.msra.mxu0 0
  %2130 = vmatprep.subr.bf16.mxu0 0
  %2131 = vmatpush1.bf16.msra.mxu0 0
  %2132 = vmatprep.subr.bf16.mxu0 0
  %2133 = vmatpush1.bf16.msra.mxu0 0
  %2134 = vmatprep.subr.bf16.mxu0 0
  %2135 = vmatpush1.bf16.msra.mxu0 0
  %2136 = vmatprep.subr.bf16.mxu0 0
  %2137 = vmatpush1.bf16.msra.mxu0 0
  %2138 = vmatprep.subr.bf16.mxu0 0
  %2139 = vmatpush1.bf16.msra.mxu0 0
  %2140 = vmatprep.subr.bf16.mxu0 0
  %2141 = vmatpush1.bf16.msra.mxu0 0
  %2142 = vmatprep.subr.bf16.mxu0 0
  %2143 = vmatpush1.bf16.msra.mxu0 0
  %2144 = vmatprep.subr.bf16.mxu0 0
  %2145 = vmatpush1.bf16.msra.mxu0 0
  %2146 = vmatprep.subr.bf16.mxu0 0
  %2147 = vmatpush1.bf16.msra.mxu0 0
  %2148 = vmatprep.subr.bf16.mxu0 0
  %2149 = vmatpush1.bf16.msra.mxu0 0
  %2150 = vmatprep.subr.bf16.mxu0 0
  %2151 = vmatpush1.bf16.msra.mxu0 0
  %2152 = vmatprep.subr.bf16.mxu0 0
  %2153 = vmatpush1.bf16.msra.mxu0 0
  %2154 = vmatprep.mubr.bf16.mxu0 0
  %2155 = vmatmul.mubr.bf16.gmra.mrb[0].mxu0 %v2099
  %v2156 = vpop.f32.mrb[0].mxu0
  %v2157 = vadd.f32 %v1981, %v2156
  %v2158 = vpop.f32.mrb[0].mxu0
  %v2159 = vpop.f32.mrb[0].mxu0
  %v2160 = vadd.f32 %v1986, %v2159
  %v2161 = vpop.f32.mrb[0].mxu0
  %2162 = vmatprep.mubr.bf16.mxu0 0
  %2163 = vmatmul.mubr.bf16.gmra.mrb[0].mxu0 %v2102
  %v2164 = vpop.f32.mrb[0].mxu0
  %v2165 = vadd.f32 %v1991, %v2164
  %v2166 = vpop.f32.mrb[0].mxu0
  %v2167 = vpop.f32.mrb[0].mxu0
  %v2168 = vadd.f32 %v1996, %v2167
  %v2169 = vpop.f32.mrb[0].mxu0
  %2170 = vmatprep.mubr.bf16.mxu0 0
  %2171 = vmatmul.mubr.bf16.gmra.mrb[0].mxu0 %v2105
  %v2172 = vpop.f32.mrb[0].mxu0
  %v2173 = vadd.f32 %v2001, %v2172
  %v2174 = vpop.f32.mrb[0].mxu0
  %v2175 = vpop.f32.mrb[0].mxu0
  %v2176 = vadd.f32 %v2006, %v2175
  %v2177 = vpop.f32.mrb[0].mxu0
  %2178 = vmatprep.mubr.bf16.mxu0 0
  %2179 = vmatmul.mubr.bf16.gmra.mrb[0].mxu0 %v2108
  %v2180 = vpop.f32.mrb[0].mxu0
  %v2181 = vadd.f32 %v2011, %v2180
  %v2182 = vpop.f32.mrb[0].mxu0
  %v2183 = vpop.f32.mrb[0].mxu0
  %v2184 = vadd.f32 %v2016, %v2183
  %v2185 = vpop.f32.mrb[0].mxu0
  %2186 = vmatprep.mubr.bf16.mxu0 0
  %2187 = vmatmul.mubr.bf16.gmra.mrb[0].mxu0 %v2111
  %v2188 = vpop.f32.mrb[0].mxu0
  %v2189 = vadd.f32 %v2021, %v2188
  %v2190 = vpop.f32.mrb[0].mxu0
  %v2191 = vpop.f32.mrb[0].mxu0
  %v2192 = vadd.f32 %v2026, %v2191
  %v2193 = vpop.f32.mrb[0].mxu0
  %2194 = vmatprep.mubr.bf16.mxu0 0
  %2195 = vmatmul.mubr.bf16.gmra.mrb[0].mxu0 %v2114
  %v2196 = vpop.f32.mrb[0].mxu0
  %v2197 = vadd.f32 %v2031, %v2196
  %v2198 = vpop.f32.mrb[0].mxu0
  %v2199 = vpop.f32.mrb[0].mxu0
  %v2200 = vadd.f32 %v2036, %v2199
  %v2201 = vpop.f32.mrb[0].mxu0
  %2202 = vmatprep.mubr.bf16.mxu0 0
  %2203 = vmatmul.mubr.bf16.gmra.mrb[0].mxu0 %v2117
  %v2204 = vpop.f32.mrb[0].mxu0
  %v2205 = vadd.f32 %v2041, %v2204
  %v2206 = vpop.f32.mrb[0].mxu0
  %v2207 = vpop.f32.mrb[0].mxu0
  %v2208 = vadd.f32 %v2046, %v2207
  %v2209 = vpop.f32.mrb[0].mxu0
  %2210 = vmatprep.mubr.bf16.mxu0 0
  %2211 = vmatmul.mubr.bf16.gmra.mrb[0].mxu0 %v2120
  %v2212 = vpop.f32.mrb[0].mxu0
  %v2213 = vadd.f32 %v2051, %v2212
  %v2214 = vpop.f32.mrb[0].mxu0
  %v2215 = vpop.f32.mrb[0].mxu0
  %v2216 = vadd.f32 %v2056, %v2215
  %v2217 = vpop.f32.mrb[0].mxu0
  %2218 = vdwg.mxu0
  %v2219 = vld [vmem:[%s3 + $0x190] sm:$0xf]
  %v2220 = vld [vmem:[%s3 + $0x194] sm:$0xf]
  %v2221 = vld [vmem:[%s3 + $0x198] sm:$0xf]
  %v2222 = vld [vmem:[%s3 + $0x19c] sm:$0xf]
  %v2223 = vpack.c.bf16 %v1765, %v1765
  %v2224 = vld [vmem:[%s3 + $0x1a0] sm:$0xf]
  %v2225 = vld [vmem:[%s3 + $0x1a4] sm:$0xf]
  %v2226 = vld [vmem:[%s3 + $0x1a8] sm:$0xf]
  %v2227 = vld [vmem:[%s3 + $0x1ac] sm:$0xf]
  %v2228 = vpack.c.bf16 %v1853, %v1853
  %v2233 = vunpack.c.l.b16 %v2224
  %v2234 = vunpack.c.l.b16 %v2225
  %v2235 = vunpack.c.l.b16 %v2226
  %v2236 = vunpack.c.l.b16 %v2227
  %v2237 = vpack.c.b16 %v2234, %v2233
  %v2238 = vpack.c.b16 %v2236, %v2235
  %vm2239 = vcmask 15360
  %v2241 = vsel %vm2239, %v2237, 0
  %v2244 = vsel %vm2239, %v2238, 0
  %vm2246 = vcmask 1040384
  %v2248 = vsel %vm2246, %v2228, 0
  %2250 = vmatprep.subr.bf16.mxu0 0
  %2251 = vmatpush1.bf16.msra.mxu0 %v2248
  %2252 = vmatprep.subr.bf16.mxu0 0
  %2253 = vmatpush1.bf16.msra.mxu0 0
  %2254 = vmatprep.subr.bf16.mxu0 0
  %2255 = vmatpush1.bf16.msra.mxu0 0
  %2256 = vmatprep.subr.bf16.mxu0 0
  %2257 = vmatpush1.bf16.msra.mxu0 0
  %2258 = vmatprep.subr.bf16.mxu0 0
  %2259 = vmatpush1.bf16.msra.mxu0 0
  %2260 = vmatprep.subr.bf16.mxu0 0
  %2261 = vmatpush1.bf16.msra.mxu0 0
  %2262 = vmatprep.subr.bf16.mxu0 0
  %2263 = vmatpush1.bf16.msra.mxu0 0
  %2264 = vmatprep.subr.bf16.mxu0 0
  %2265 = vmatpush1.bf16.msra.mxu0 0
  %2266 = vmatprep.subr.bf16.mxu0 0
  %2267 = vmatpush1.bf16.msra.mxu0 0
  %2268 = vmatprep.subr.bf16.mxu0 0
  %2269 = vmatpush1.bf16.msra.mxu0 0
  %2270 = vmatprep.subr.bf16.mxu0 0
  %2271 = vmatpush1.bf16.msra.mxu0 0
  %2272 = vmatprep.subr.bf16.mxu0 0
  %2273 = vmatpush1.bf16.msra.mxu0 0
  %2274 = vmatprep.subr.bf16.mxu0 0
  %2275 = vmatpush1.bf16.msra.mxu0 0
  %2276 = vmatprep.subr.bf16.mxu0 0
  %2277 = vmatpush1.bf16.msra.mxu0 0
  %2278 = vmatprep.subr.bf16.mxu0 0
  %2279 = vmatpush1.bf16.msra.mxu0 0
  %2280 = vmatprep.subr.bf16.mxu0 0
  %2281 = vmatpush1.bf16.msra.mxu0 0
  %2282 = vmatprep.mubr.bf16.mxu0 0
  %2283 = vmatmul.mubr.bf16.gmra.mrb[0].mxu0 %v2241
  %v2284 = vpop.f32.mrb[0].mxu0
  %v2285 = vadd.f32 0.0, %v2284
  %v2286 = vpop.f32.mrb[0].mxu0
  %v2287 = vpop.f32.mrb[0].mxu0
  %v2288 = vadd.f32 0.0, %v2287
  %v2289 = vpop.f32.mrb[0].mxu0
  %2290 = vmatprep.mubr.bf16.mxu0 0
  %2291 = vmatmul.mubr.bf16.gmra.mrb[0].mxu0 %v2244
  %v2292 = vpop.f32.mrb[0].mxu0
  %v2293 = vadd.f32 0.0, %v2292
  %v2294 = vpop.f32.mrb[0].mxu0
  %v2295 = vpop.f32.mrb[0].mxu0
  %v2296 = vadd.f32 0.0, %v2295
  %v2297 = vpop.f32.mrb[0].mxu0
  %2298 = vdwg.mxu0
  %v2303 = vunpack.c.l.b16 %v2219
  %v2304 = vunpack.c.l.b16 %v2220
  %v2305 = vunpack.c.l.b16 %v2221
  %v2306 = vunpack.c.l.b16 %v2222
  %v2307 = vpack.c.b16 %v2304, %v2303
  %v2308 = vpack.c.b16 %v2306, %v2305
  %v2310 = vsel %vm2239, %v2307, 0
  %v2313 = vsel %vm2239, %v2308, 0
  %v2316 = vsel %vm2246, %v2223, 0
  %2318 = vmatprep.subr.bf16.mxu0 0
  %2319 = vmatpush1.bf16.msra.mxu0 %v2316
  %2320 = vmatprep.subr.bf16.mxu0 0
  %2321 = vmatpush1.bf16.msra.mxu0 0
  %2322 = vmatprep.subr.bf16.mxu0 0
  %2323 = vmatpush1.bf16.msra.mxu0 0
  %2324 = vmatprep.subr.bf16.mxu0 0
  %2325 = vmatpush1.bf16.msra.mxu0 0
  %2326 = vmatprep.subr.bf16.mxu0 0
  %2327 = vmatpush1.bf16.msra.mxu0 0
  %2328 = vmatprep.subr.bf16.mxu0 0
  %2329 = vmatpush1.bf16.msra.mxu0 0
  %2330 = vmatprep.subr.bf16.mxu0 0
  %2331 = vmatpush1.bf16.msra.mxu0 0
  %2332 = vmatprep.subr.bf16.mxu0 0
  %2333 = vmatpush1.bf16.msra.mxu0 0
  %2334 = vmatprep.subr.bf16.mxu0 0
  %2335 = vmatpush1.bf16.msra.mxu0 0
  %2336 = vmatprep.subr.bf16.mxu0 0
  %2337 = vmatpush1.bf16.msra.mxu0 0
  %2338 = vmatprep.subr.bf16.mxu0 0
  %2339 = vmatpush1.bf16.msra.mxu0 0
  %2340 = vmatprep.subr.bf16.mxu0 0
  %2341 = vmatpush1.bf16.msra.mxu0 0
  %2342 = vmatprep.subr.bf16.mxu0 0
  %2343 = vmatpush1.bf16.msra.mxu0 0
  %2344 = vmatprep.subr.bf16.mxu0 0
  %2345 = vmatpush1.bf16.msra.mxu0 0
  %2346 = vmatprep.subr.bf16.mxu0 0
  %2347 = vmatpush1.bf16.msra.mxu0 0
  %2348 = vmatprep.subr.bf16.mxu0 0
  %2349 = vmatpush1.bf16.msra.mxu0 0
  %2350 = vmatprep.mubr.bf16.mxu0 0
  %2351 = vmatmul.mubr.bf16.gmra.mrb[0].mxu0 %v2310
  %v2352 = vpop.f32.mrb[0].mxu0
  %v2353 = vadd.f32 %v2285, %v2352
  %v2354 = vpop.f32.mrb[0].mxu0
  %v2355 = vpop.f32.mrb[0].mxu0
  %v2356 = vadd.f32 %v2288, %v2355
  %v2357 = vpop.f32.mrb[0].mxu0
  %2358 = vmatprep.mubr.bf16.mxu0 0
  %2359 = vmatmul.mubr.bf16.gmra.mrb[0].mxu0 %v2313
  %v2360 = vpop.f32.mrb[0].mxu0
  %v2361 = vadd.f32 %v2293, %v2360
  %v2362 = vpop.f32.mrb[0].mxu0
  %v2363 = vpop.f32.mrb[0].mxu0
  %v2364 = vadd.f32 %v2296, %v2363
  %v2365 = vpop.f32.mrb[0].mxu0
  %2366 = vdwg.mxu0
  %v2367 = vld [vmem:[%s4 + $0x110] sm:$0xff]
  %v2368 = vld [vmem:[%s4 + $0x118] sm:$0xff]
  %v2369 = vld [vmem:[%s4 + $0x120] sm:$0xff]
  %v2370 = vld [vmem:[%s4 + $0x128] sm:$0xff]
  %2372 = vset.pattern.permute.xlu0 0
  %2373 = vperm.xlu0 %2372, %v2367
  %v2374 = vpop.permute.xlu0 %2373
  %2377 = vset.pattern.permute.xlu0 0
  %2378 = vperm.xlu0 %2377, %v2368
  %v2379 = vpop.permute.xlu0 %2378
  %2382 = vset.pattern.permute.xlu0 0
  %2383 = vperm.xlu0 %2382, %v2369
  %v2384 = vpop.permute.xlu0 %2383
  %2387 = vset.pattern.permute.xlu0 0
  %2388 = vperm.xlu0 %2387, %v2370
  %v2389 = vpop.permute.xlu0 %2388
  %v2391 = vadd.f32 %v2353, %v2374
  %v2392 = vadd.f32 %v2356, %v2379
  %v2393 = vadd.f32 %v2361, %v2384
  %v2394 = vadd.f32 %v2364, %v2389
  %v2395 = vmul.f32 %v2391, %v500
  %v2396 = vmul.f32 %v2392, %v500
  %v2397 = vmul.f32 %v2393, %v500
  %v2398 = vmul.f32 %v2394, %v500
  %2399 = vrot.lane.b32.xlu0 %v2395, 1
  %v2400 = vpop.permute.xlu0 %2399
  %2401 = vrot.lane.b32.xlu0 %v2396, 1
  %v2402 = vpop.permute.xlu0 %2401
  %2403 = vrot.lane.b32.xlu0 %v2397, 1
  %v2404 = vpop.permute.xlu0 %2403
  %2405 = vrot.lane.b32.xlu0 %v2398, 1
  %v2406 = vpop.permute.xlu0 %2405
  %v2407 = vld [vmem:[%s3 + $0x1f0] sm:$0xf]
  %v2408 = vld [vmem:[%s3 + $0x1f4] sm:$0xf]
  %v2409 = vld [vmem:[%s3 + $0x1f8] sm:$0xf]
  %v2410 = vld [vmem:[%s3 + $0x1fc] sm:$0xf]
  %v2411 = vld [vmem:[%s3 + $0x200] sm:$0xf]
  %v2412 = vld [vmem:[%s3 + $0x204] sm:$0xf]
  %v2413 = vld [vmem:[%s3 + $0x208] sm:$0xf]
  %v2414 = vld [vmem:[%s3 + $0x20c] sm:$0xf]
  %v2415 = vpack.c.bf16 %v2402, %v2400
  %v2416 = vpack.c.bf16 %v2406, %v2404
  %v2425 = vunpack.c.l.b16 %v2407
  %v2426 = vunpack.c.l.b16 %v2408
  %v2427 = vunpack.c.l.b16 %v2409
  %v2428 = vunpack.c.l.b16 %v2410
  %v2429 = vunpack.c.l.b16 %v2411
  %v2430 = vunpack.c.l.b16 %v2412
  %v2431 = vunpack.c.l.b16 %v2413
  %v2432 = vunpack.c.l.b16 %v2414
  %v2433 = vpack.c.b16 %v2426, %v2425
  %v2434 = vpack.c.b16 %v2428, %v2427
  %v2435 = vpack.c.b16 %v2430, %v2429
  %v2436 = vpack.c.b16 %v2432, %v2431
  %v2438 = vsel %vm544, %v2433, 0
  %v2441 = vsel %vm544, %v2434, 0
  %v2444 = vsel %vm544, %v2435, 0
  %v2447 = vsel %vm544, %v2436, 0
  %2449 = vmatprep.subr.bf16.mxu0 0
  %2450 = vmatpush1.bf16.msra.mxu0 %v2415
  %2451 = vmatprep.subr.bf16.mxu0 0
  %2452 = vmatpush1.bf16.msra.mxu0 %v2416
  %2453 = vmatprep.subr.bf16.mxu0 0
  %2454 = vmatpush1.bf16.msra.mxu0 0
  %2455 = vmatprep.subr.bf16.mxu0 0
  %2456 = vmatpush1.bf16.msra.mxu0 0
  %2457 = vmatprep.subr.bf16.mxu0 0
  %2458 = vmatpush1.bf16.msra.mxu0 0
  %2459 = vmatprep.subr.bf16.mxu0 0
  %2460 = vmatpush1.bf16.msra.mxu0 0
  %2461 = vmatprep.subr.bf16.mxu0 0
  %2462 = vmatpush1.bf16.msra.mxu0 0
  %2463 = vmatprep.subr.bf16.mxu0 0
  %2464 = vmatpush1.bf16.msra.mxu0 0
  %2465 = vmatprep.subr.bf16.mxu0 0
  %2466 = vmatpush1.bf16.msra.mxu0 0
  %2467 = vmatprep.subr.bf16.mxu0 0
  %2468 = vmatpush1.bf16.msra.mxu0 0
  %2469 = vmatprep.subr.bf16.mxu0 0
  %2470 = vmatpush1.bf16.msra.mxu0 0
  %2471 = vmatprep.subr.bf16.mxu0 0
  %2472 = vmatpush1.bf16.msra.mxu0 0
  %2473 = vmatprep.subr.bf16.mxu0 0
  %2474 = vmatpush1.bf16.msra.mxu0 0
  %2475 = vmatprep.subr.bf16.mxu0 0
  %2476 = vmatpush1.bf16.msra.mxu0 0
  %2477 = vmatprep.subr.bf16.mxu0 0
  %2478 = vmatpush1.bf16.msra.mxu0 0
  %2479 = vmatprep.subr.bf16.mxu0 0
  %2480 = vmatpush1.bf16.msra.mxu0 0
  %2481 = vmatprep.mubr.bf16.mxu0 0
  %2482 = vmatmul.mubr.bf16.gmra.mrb[0].mxu0 %v2438
  %v2483 = vpop.f32.mrb[0].mxu0
  %v2484 = vadd.f32 0.0, %v2483
  %v2485 = vpop.f32.mrb[0].mxu0
  %v2486 = vpop.f32.mrb[0].mxu0
  %v2487 = vadd.f32 0.0, %v2486
  %v2488 = vpop.f32.mrb[0].mxu0
  %2489 = vmatprep.mubr.bf16.mxu0 0
  %2490 = vmatmul.mubr.bf16.gmra.mrb[0].mxu0 %v2441
  %v2491 = vpop.f32.mrb[0].mxu0
  %v2492 = vadd.f32 0.0, %v2491
  %v2493 = vpop.f32.mrb[0].mxu0
  %v2494 = vpop.f32.mrb[0].mxu0
  %v2495 = vadd.f32 0.0, %v2494
  %v2496 = vpop.f32.mrb[0].mxu0
  %2497 = vmatprep.mubr.bf16.mxu0 0
  %2498 = vmatmul.mubr.bf16.gmra.mrb[0].mxu0 %v2444
  %v2499 = vpop.f32.mrb[0].mxu0
  %v2500 = vadd.f32 0.0, %v2499
  %v2501 = vpop.f32.mrb[0].mxu0
  %v2502 = vpop.f32.mrb[0].mxu0
  %v2503 = vadd.f32 0.0, %v2502
  %v2504 = vpop.f32.mrb[0].mxu0
  %2505 = vmatprep.mubr.bf16.mxu0 0
  %2506 = vmatmul.mubr.bf16.gmra.mrb[0].mxu0 %v2447
  %v2507 = vpop.f32.mrb[0].mxu0
  %v2508 = vadd.f32 0.0, %v2507
  %v2509 = vpop.f32.mrb[0].mxu0
  %v2510 = vpop.f32.mrb[0].mxu0
  %v2511 = vadd.f32 0.0, %v2510
  %v2512 = vpop.f32.mrb[0].mxu0
  %2513 = vdwg.mxu0
  %v2514 = vadd.f32 %v2157, %v2484
  %v2515 = vadd.f32 %v2160, %v2487
  %v2516 = vadd.f32 %v2165, %v2492
  %v2517 = vadd.f32 %v2168, %v2495
  %v2518 = vadd.f32 %v2173, %v2500
  %v2519 = vadd.f32 %v2176, %v2503
  %v2520 = vadd.f32 %v2181, %v2508
  %v2521 = vadd.f32 %v2184, %v2511
  %v2522 = vld [vmem:[%s3 + $0x210] sm:$0xf]
  %v2523 = vld [vmem:[%s3 + $0x214] sm:$0xf]
  %v2524 = vld [vmem:[%s3 + $0x218] sm:$0xf]
  %v2525 = vld [vmem:[%s3 + $0x21c] sm:$0xf]
  %v2526 = vld [vmem:[%s3 + $0x220] sm:$0xf]
  %v2527 = vld [vmem:[%s3 + $0x224] sm:$0xf]
  %v2528 = vld [vmem:[%s3 + $0x228] sm:$0xf]
  %v2529 = vld [vmem:[%s3 + $0x22c] sm:$0xf]
  %v2530 = vpack.c.bf16 %v2396, %v2395
  %v2531 = vpack.c.bf16 %v2398, %v2397
  %v2540 = vunpack.c.l.b16 %v2522
  %v2541 = vunpack.c.l.b16 %v2523
  %v2542 = vunpack.c.l.b16 %v2524
  %v2543 = vunpack.c.l.b16 %v2525
  %v2544 = vunpack.c.l.b16 %v2526
  %v2545 = vunpack.c.l.b16 %v2527
  %v2546 = vunpack.c.l.b16 %v2528
  %v2547 = vunpack.c.l.b16 %v2529
  %v2548 = vpack.c.b16 %v2541, %v2540
  %v2549 = vpack.c.b16 %v2543, %v2542
  %v2550 = vpack.c.b16 %v2545, %v2544
  %v2551 = vpack.c.b16 %v2547, %v2546
  %v2553 = vsel %vm544, %v2548, 0
  %v2556 = vsel %vm544, %v2549, 0
  %v2559 = vsel %vm544, %v2550, 0
  %v2562 = vsel %vm544, %v2551, 0
  %2564 = vmatprep.subr.bf16.mxu0 0
  %2565 = vmatpush1.bf16.msra.mxu0 %v2530
  %2566 = vmatprep.subr.bf16.mxu0 0
  %2567 = vmatpush1.bf16.msra.mxu0 %v2531
  %2568 = vmatprep.subr.bf16.mxu0 0
  %2569 = vmatpush1.bf16.msra.mxu0 0
  %2570 = vmatprep.subr.bf16.mxu0 0
  %2571 = vmatpush1.bf16.msra.mxu0 0
  %2572 = vmatprep.subr.bf16.mxu0 0
  %2573 = vmatpush1.bf16.msra.mxu0 0
  %2574 = vmatprep.subr.bf16.mxu0 0
  %2575 = vmatpush1.bf16.msra.mxu0 0
  %2576 = vmatprep.subr.bf16.mxu0 0
  %2577 = vmatpush1.bf16.msra.mxu0 0
  %2578 = vmatprep.subr.bf16.mxu0 0
  %2579 = vmatpush1.bf16.msra.mxu0 0
  %2580 = vmatprep.subr.bf16.mxu0 0
  %2581 = vmatpush1.bf16.msra.mxu0 0
  %2582 = vmatprep.subr.bf16.mxu0 0
  %2583 = vmatpush1.bf16.msra.mxu0 0
  %2584 = vmatprep.subr.bf16.mxu0 0
  %2585 = vmatpush1.bf16.msra.mxu0 0
  %2586 = vmatprep.subr.bf16.mxu0 0
  %2587 = vmatpush1.bf16.msra.mxu0 0
  %2588 = vmatprep.subr.bf16.mxu0 0
  %2589 = vmatpush1.bf16.msra.mxu0 0
  %2590 = vmatprep.subr.bf16.mxu0 0
  %2591 = vmatpush1.bf16.msra.mxu0 0
  %2592 = vmatprep.subr.bf16.mxu0 0
  %2593 = vmatpush1.bf16.msra.mxu0 0
  %2594 = vmatprep.subr.bf16.mxu0 0
  %2595 = vmatpush1.bf16.msra.mxu0 0
  %2596 = vmatprep.mubr.bf16.mxu0 0
  %2597 = vmatmul.mubr.bf16.gmra.mrb[0].mxu0 %v2553
  %v2598 = vpop.f32.mrb[0].mxu0
  %v2599 = vadd.f32 0.0, %v2598
  %v2600 = vpop.f32.mrb[0].mxu0
  %v2601 = vpop.f32.mrb[0].mxu0
  %v2602 = vadd.f32 0.0, %v2601
  %v2603 = vpop.f32.mrb[0].mxu0
  %2604 = vmatprep.mubr.bf16.mxu0 0
  %2605 = vmatmul.mubr.bf16.gmra.mrb[0].mxu0 %v2556
  %v2606 = vpop.f32.mrb[0].mxu0
  %v2607 = vadd.f32 0.0, %v2606
  %v2608 = vpop.f32.mrb[0].mxu0
  %v2609 = vpop.f32.mrb[0].mxu0
  %v2610 = vadd.f32 0.0, %v2609
  %v2611 = vpop.f32.mrb[0].mxu0
  %2612 = vmatprep.mubr.bf16.mxu0 0
  %2613 = vmatmul.mubr.bf16.gmra.mrb[0].mxu0 %v2559
  %v2614 = vpop.f32.mrb[0].mxu0
  %v2615 = vadd.f32 0.0, %v2614
  %v2616 = vpop.f32.mrb[0].mxu0
  %v2617 = vpop.f32.mrb[0].mxu0
  %v2618 = vadd.f32 0.0, %v2617
  %v2619 = vpop.f32.mrb[0].mxu0
  %2620 = vmatprep.mubr.bf16.mxu0 0
  %2621 = vmatmul.mubr.bf16.gmra.mrb[0].mxu0 %v2562
  %v2622 = vpop.f32.mrb[0].mxu0
  %v2623 = vadd.f32 0.0, %v2622
  %v2624 = vpop.f32.mrb[0].mxu0
  %v2625 = vpop.f32.mrb[0].mxu0
  %v2626 = vadd.f32 0.0, %v2625
  %v2627 = vpop.f32.mrb[0].mxu0
  %2628 = vdwg.mxu0
  %v2629 = vadd.f32 %v2514, %v2599
  %v2630 = vadd.f32 %v2515, %v2602
  %v2631 = vadd.f32 %v2516, %v2607
  %v2632 = vadd.f32 %v2517, %v2610
  %v2633 = vadd.f32 %v2518, %v2615
  %v2634 = vadd.f32 %v2519, %v2618
  %v2635 = vadd.f32 %v2520, %v2623
  %v2636 = vadd.f32 %v2521, %v2626
  %2637 = vrot.lane.b32.xlu0 %v2395, 127
  %v2638 = vpop.permute.xlu0 %2637
  %2639 = vrot.lane.b32.xlu0 %v2396, 127
  %v2640 = vpop.permute.xlu0 %2639
  %2641 = vrot.lane.b32.xlu0 %v2397, 127
  %v2642 = vpop.permute.xlu0 %2641
  %2643 = vrot.lane.b32.xlu0 %v2398, 127
  %v2644 = vpop.permute.xlu0 %2643
  %v2645 = vld [vmem:[%s3 + $0x230] sm:$0xf]
  %v2646 = vld [vmem:[%s3 + $0x234] sm:$0xf]
  %v2647 = vld [vmem:[%s3 + $0x238] sm:$0xf]
  %v2648 = vld [vmem:[%s3 + $0x23c] sm:$0xf]
  %v2649 = vld [vmem:[%s3 + $0x240] sm:$0xf]
  %v2650 = vld [vmem:[%s3 + $0x244] sm:$0xf]
  %v2651 = vld [vmem:[%s3 + $0x248] sm:$0xf]
  %v2652 = vld [vmem:[%s3 + $0x24c] sm:$0xf]
  %v2653 = vpack.c.bf16 %v2640, %v2638
  %v2654 = vpack.c.bf16 %v2644, %v2642
  %v2663 = vunpack.c.l.b16 %v2645
  %v2664 = vunpack.c.l.b16 %v2646
  %v2665 = vunpack.c.l.b16 %v2647
  %v2666 = vunpack.c.l.b16 %v2648
  %v2667 = vunpack.c.l.b16 %v2649
  %v2668 = vunpack.c.l.b16 %v2650
  %v2669 = vunpack.c.l.b16 %v2651
  %v2670 = vunpack.c.l.b16 %v2652
  %v2671 = vpack.c.b16 %v2664, %v2663
  %v2672 = vpack.c.b16 %v2666, %v2665
  %v2673 = vpack.c.b16 %v2668, %v2667
  %v2674 = vpack.c.b16 %v2670, %v2669
  %v2676 = vsel %vm544, %v2671, 0
  %v2679 = vsel %vm544, %v2672, 0
  %v2682 = vsel %vm544, %v2673, 0
  %v2685 = vsel %vm544, %v2674, 0
  %2687 = vmatprep.subr.bf16.mxu0 0
  %2688 = vmatpush1.bf16.msra.mxu0 %v2653
  %2689 = vmatprep.subr.bf16.mxu0 0
  %2690 = vmatpush1.bf16.msra.mxu0 %v2654
  %2691 = vmatprep.subr.bf16.mxu0 0
  %2692 = vmatpush1.bf16.msra.mxu0 0
  %2693 = vmatprep.subr.bf16.mxu0 0
  %2694 = vmatpush1.bf16.msra.mxu0 0
  %2695 = vmatprep.subr.bf16.mxu0 0
  %2696 = vmatpush1.bf16.msra.mxu0 0
  %2697 = vmatprep.subr.bf16.mxu0 0
  %2698 = vmatpush1.bf16.msra.mxu0 0
  %2699 = vmatprep.subr.bf16.mxu0 0
  %2700 = vmatpush1.bf16.msra.mxu0 0
  %2701 = vmatprep.subr.bf16.mxu0 0
  %2702 = vmatpush1.bf16.msra.mxu0 0
  %2703 = vmatprep.subr.bf16.mxu0 0
  %2704 = vmatpush1.bf16.msra.mxu0 0
  %2705 = vmatprep.subr.bf16.mxu0 0
  %2706 = vmatpush1.bf16.msra.mxu0 0
  %2707 = vmatprep.subr.bf16.mxu0 0
  %2708 = vmatpush1.bf16.msra.mxu0 0
  %2709 = vmatprep.subr.bf16.mxu0 0
  %2710 = vmatpush1.bf16.msra.mxu0 0
  %2711 = vmatprep.subr.bf16.mxu0 0
  %2712 = vmatpush1.bf16.msra.mxu0 0
  %2713 = vmatprep.subr.bf16.mxu0 0
  %2714 = vmatpush1.bf16.msra.mxu0 0
  %2715 = vmatprep.subr.bf16.mxu0 0
  %2716 = vmatpush1.bf16.msra.mxu0 0
  %2717 = vmatprep.subr.bf16.mxu0 0
  %2718 = vmatpush1.bf16.msra.mxu0 0
  %2719 = vmatprep.mubr.bf16.mxu0 0
  %2720 = vmatmul.mubr.bf16.gmra.mrb[0].mxu0 %v2676
  %v2721 = vpop.f32.mrb[0].mxu0
  %v2722 = vadd.f32 0.0, %v2721
  %v2723 = vpop.f32.mrb[0].mxu0
  %v2724 = vpop.f32.mrb[0].mxu0
  %v2725 = vadd.f32 0.0, %v2724
  %v2726 = vpop.f32.mrb[0].mxu0
  %2727 = vmatprep.mubr.bf16.mxu0 0
  %2728 = vmatmul.mubr.bf16.gmra.mrb[0].mxu0 %v2679
  %v2729 = vpop.f32.mrb[0].mxu0
  %v2730 = vadd.f32 0.0, %v2729
  %v2731 = vpop.f32.mrb[0].mxu0
  %v2732 = vpop.f32.mrb[0].mxu0
  %v2733 = vadd.f32 0.0, %v2732
  %v2734 = vpop.f32.mrb[0].mxu0
  %2735 = vmatprep.mubr.bf16.mxu0 0
  %2736 = vmatmul.mubr.bf16.gmra.mrb[0].mxu0 %v2682
  %v2737 = vpop.f32.mrb[0].mxu0
  %v2738 = vadd.f32 0.0, %v2737
  %v2739 = vpop.f32.mrb[0].mxu0
  %v2740 = vpop.f32.mrb[0].mxu0
  %v2741 = vadd.f32 0.0, %v2740
  %v2742 = vpop.f32.mrb[0].mxu0
  %2743 = vmatprep.mubr.bf16.mxu0 0
  %2744 = vmatmul.mubr.bf16.gmra.mrb[0].mxu0 %v2685
  %v2745 = vpop.f32.mrb[0].mxu0
  %v2746 = vadd.f32 0.0, %v2745
  %v2747 = vpop.f32.mrb[0].mxu0
  %v2748 = vpop.f32.mrb[0].mxu0
  %v2749 = vadd.f32 0.0, %v2748
  %v2750 = vpop.f32.mrb[0].mxu0
  %2751 = vdwg.mxu0
  %v2752 = vadd.f32 %v2629, %v2722
  %v2753 = vadd.f32 %v2630, %v2725
  %v2754 = vadd.f32 %v2631, %v2730
  %v2755 = vadd.f32 %v2632, %v2733
  %v2756 = vadd.f32 %v2633, %v2738
  %v2757 = vadd.f32 %v2634, %v2741
  %v2758 = vadd.f32 %v2635, %v2746
  %v2759 = vadd.f32 %v2636, %v2749
  %v2760 = vtanh.pop %v2752
  %v2761 = vtanh.pop %v2753
  %v2762 = vtanh.pop %v2754
  %v2763 = vtanh.pop %v2755
  %v2764 = vxor.u32 %v2756, 2147483648
  %v2765 = vxor.u32 %v2757, 2147483648
  %v2766 = vxor.u32 %v2758, 2147483648
  %v2767 = vxor.u32 %v2759, 2147483648
  %v2768 = vmul.f32 %v2764, 1.442695
  %v2769 = vpow.pop %v2768
  %v2770 = vmul.f32 %v2765, 1.442695
  %v2771 = vpow.pop %v2770
  %v2772 = vmul.f32 %v2766, 1.442695
  %v2773 = vpow.pop %v2772
  %v2774 = vmul.f32 %v2767, 1.442695
  %v2775 = vpow.pop %v2774
  %v2776 = vadd.f32 %v2769, 1.0
  %v2777 = vadd.f32 %v2771, 1.0
  %v2778 = vadd.f32 %v2773, 1.0
  %v2779 = vadd.f32 %v2775, 1.0
  %v2780 = vrcp.pop %v2776
  %v2781 = vmul.f32 1.0, %v2780
  %v2782 = vrcp.pop %v2777
  %v2783 = vmul.f32 1.0, %v2782
  %v2784 = vrcp.pop %v2778
  %v2785 = vmul.f32 1.0, %v2784
  %v2786 = vrcp.pop %v2779
  %v2787 = vmul.f32 1.0, %v2786
  %v2788 = vmul.f32 %v2760, %v2781
  %v2789 = vmul.f32 %v2761, %v2783
  %v2790 = vmul.f32 %v2762, %v2785
  %v2791 = vmul.f32 %v2763, %v2787
  %v2792 = vld [vmem:[%s3 + $0x250] sm:$0xf]
  %v2793 = vld [vmem:[%s3 + $0x254] sm:$0xf]
  %v2794 = vld [vmem:[%s3 + $0x258] sm:$0xf]
  %v2795 = vld [vmem:[%s3 + $0x25c] sm:$0xf]
  %v2796 = vld [vmem:[%s3 + $0x260] sm:$0xf]
  %v2797 = vld [vmem:[%s3 + $0x264] sm:$0xf]
  %v2798 = vld [vmem:[%s3 + $0x268] sm:$0xf]
  %v2799 = vld [vmem:[%s3 + $0x26c] sm:$0xf]
  %v2800 = vpack.c.bf16 %v2789, %v2788
  %v2801 = vpack.c.bf16 %v2791, %v2790
  %v2802 = vld [vmem:[%s4 + $0x1b0] sm:$0xff]
  %v2803 = vld [vmem:[%s4 + $0x1b8] sm:$0xff]
  %v2804 = vld [vmem:[%s4 + $0x1c0] sm:$0xff]
  %v2805 = vld [vmem:[%s4 + $0x1c8] sm:$0xff]
  %v2806 = vld [vmem:[%s4 + $0x1d0] sm:$0xff]
  %v2807 = vld [vmem:[%s4 + $0x1d8] sm:$0xff]
  %v2808 = vld [vmem:[%s4 + $0x1e0] sm:$0xff]
  %v2809 = vld [vmem:[%s4 + $0x1e8] sm:$0xff]
  %2811 = vset.pattern.permute.xlu0 0
  %2812 = vperm.xlu0 %2811, %v2802
  %v2813 = vpop.permute.xlu0 %2812
  %2816 = vset.pattern.permute.xlu0 0
  %2817 = vperm.xlu0 %2816, %v2803
  %v2818 = vpop.permute.xlu0 %2817
  %2821 = vset.pattern.permute.xlu0 0
  %2822 = vperm.xlu0 %2821, %v2804
  %v2823 = vpop.permute.xlu0 %2822
  %2826 = vset.pattern.permute.xlu0 0
  %2827 = vperm.xlu0 %2826, %v2805
  %v2828 = vpop.permute.xlu0 %2827
  %2831 = vset.pattern.permute.xlu0 0
  %2832 = vperm.xlu0 %2831, %v2806
  %v2833 = vpop.permute.xlu0 %2832
  %2836 = vset.pattern.permute.xlu0 0
  %2837 = vperm.xlu0 %2836, %v2807
  %v2838 = vpop.permute.xlu0 %2837
  %2841 = vset.pattern.permute.xlu0 0
  %2842 = vperm.xlu0 %2841, %v2808
  %v2843 = vpop.permute.xlu0 %2842
  %2846 = vset.pattern.permute.xlu0 0
  %2847 = vperm.xlu0 %2846, %v2809
  %v2848 = vpop.permute.xlu0 %2847
  %v2858 = vunpack.c.l.b16 %v2792
  %v2859 = vunpack.c.l.b16 %v2793
  %v2860 = vunpack.c.l.b16 %v2794
  %v2861 = vunpack.c.l.b16 %v2795
  %v2862 = vunpack.c.l.b16 %v2796
  %v2863 = vunpack.c.l.b16 %v2797
  %v2864 = vunpack.c.l.b16 %v2798
  %v2865 = vunpack.c.l.b16 %v2799
  %v2866 = vpack.c.b16 %v2859, %v2858
  %v2867 = vpack.c.b16 %v2861, %v2860
  %v2868 = vpack.c.b16 %v2863, %v2862
  %v2869 = vpack.c.b16 %v2865, %v2864
  %v2871 = vsel %vm544, %v2866, 0
  %v2874 = vsel %vm544, %v2867, 0
  %v2877 = vsel %vm544, %v2868, 0
  %v2880 = vsel %vm544, %v2869, 0
  %2882 = vmatprep.subr.bf16.mxu0 0
  %2883 = vmatpush1.bf16.msra.mxu0 %v2800
  %2884 = vmatprep.subr.bf16.mxu0 0
  %2885 = vmatpush1.bf16.msra.mxu0 %v2801
  %2886 = vmatprep.subr.bf16.mxu0 0
  %2887 = vmatpush1.bf16.msra.mxu0 0
  %2888 = vmatprep.subr.bf16.mxu0 0
  %2889 = vmatpush1.bf16.msra.mxu0 0
  %2890 = vmatprep.subr.bf16.mxu0 0
  %2891 = vmatpush1.bf16.msra.mxu0 0
  %2892 = vmatprep.subr.bf16.mxu0 0
  %2893 = vmatpush1.bf16.msra.mxu0 0
  %2894 = vmatprep.subr.bf16.mxu0 0
  %2895 = vmatpush1.bf16.msra.mxu0 0
  %2896 = vmatprep.subr.bf16.mxu0 0
  %2897 = vmatpush1.bf16.msra.mxu0 0
  %2898 = vmatprep.subr.bf16.mxu0 0
  %2899 = vmatpush1.bf16.msra.mxu0 0
  %2900 = vmatprep.subr.bf16.mxu0 0
  %2901 = vmatpush1.bf16.msra.mxu0 0
  %2902 = vmatprep.subr.bf16.mxu0 0
  %2903 = vmatpush1.bf16.msra.mxu0 0
  %2904 = vmatprep.subr.bf16.mxu0 0
  %2905 = vmatpush1.bf16.msra.mxu0 0
  %2906 = vmatprep.subr.bf16.mxu0 0
  %2907 = vmatpush1.bf16.msra.mxu0 0
  %2908 = vmatprep.subr.bf16.mxu0 0
  %2909 = vmatpush1.bf16.msra.mxu0 0
  %2910 = vmatprep.subr.bf16.mxu0 0
  %2911 = vmatpush1.bf16.msra.mxu0 0
  %2912 = vmatprep.subr.bf16.mxu0 0
  %2913 = vmatpush1.bf16.msra.mxu0 0
  %2914 = vmatprep.mubr.bf16.mxu0 0
  %2915 = vmatmul.mubr.bf16.gmra.mrb[0].mxu0 %v2871
  %v2916 = vpop.f32.mrb[0].mxu0
  %v2917 = vadd.f32 %v2813, %v2916
  %v2918 = vpop.f32.mrb[0].mxu0
  %v2919 = vpop.f32.mrb[0].mxu0
  %v2920 = vadd.f32 %v2818, %v2919
  %v2921 = vpop.f32.mrb[0].mxu0
  %2922 = vmatprep.mubr.bf16.mxu0 0
  %2923 = vmatmul.mubr.bf16.gmra.mrb[0].mxu0 %v2874
  %v2924 = vpop.f32.mrb[0].mxu0
  %v2925 = vadd.f32 %v2823, %v2924
  %v2926 = vpop.f32.mrb[0].mxu0
  %v2927 = vpop.f32.mrb[0].mxu0
  %v2928 = vadd.f32 %v2828, %v2927
  %v2929 = vpop.f32.mrb[0].mxu0
  %2930 = vmatprep.mubr.bf16.mxu0 0
  %2931 = vmatmul.mubr.bf16.gmra.mrb[0].mxu0 %v2877
  %v2932 = vpop.f32.mrb[0].mxu0
  %v2933 = vadd.f32 %v2833, %v2932
  %v2934 = vpop.f32.mrb[0].mxu0
  %v2935 = vpop.f32.mrb[0].mxu0
  %v2936 = vadd.f32 %v2838, %v2935
  %v2937 = vpop.f32.mrb[0].mxu0
  %2938 = vmatprep.mubr.bf16.mxu0 0
  %2939 = vmatmul.mubr.bf16.gmra.mrb[0].mxu0 %v2880
  %v2940 = vpop.f32.mrb[0].mxu0
  %v2941 = vadd.f32 %v2843, %v2940
  %v2942 = vpop.f32.mrb[0].mxu0
  %v2943 = vpop.f32.mrb[0].mxu0
  %v2944 = vadd.f32 %v2848, %v2943
  %v2945 = vpop.f32.mrb[0].mxu0
  %2946 = vdwg.mxu0
  %v2947 = vadd.f32 %v2391, %v2917
  %v2948 = vadd.f32 %v2392, %v2920
  %v2949 = vadd.f32 %v2393, %v2925
  %v2950 = vadd.f32 %v2394, %v2928
  %v2951 = vmul.f32 %v2947, %v500
  %v2952 = vmul.f32 %v2948, %v500
  %v2953 = vmul.f32 %v2949, %v500
  %v2954 = vmul.f32 %v2950, %v500
  %2955 = vrot.lane.b32.xlu0 %v2951, 2
  %v2956 = vpop.permute.xlu0 %2955
  %2957 = vrot.lane.b32.xlu0 %v2952, 2
  %v2958 = vpop.permute.xlu0 %2957
  %2959 = vrot.lane.b32.xlu0 %v2953, 2
  %v2960 = vpop.permute.xlu0 %2959
  %2961 = vrot.lane.b32.xlu0 %v2954, 2
  %v2962 = vpop.permute.xlu0 %2961
  %v2963 = vld [vmem:[%s3 + $0x270] sm:$0xf]
  %v2964 = vld [vmem:[%s3 + $0x274] sm:$0xf]
  %v2965 = vld [vmem:[%s3 + $0x278] sm:$0xf]
  %v2966 = vld [vmem:[%s3 + $0x27c] sm:$0xf]
  %v2967 = vld [vmem:[%s3 + $0x280] sm:$0xf]
  %v2968 = vld [vmem:[%s3 + $0x284] sm:$0xf]
  %v2969 = vld [vmem:[%s3 + $0x288] sm:$0xf]
  %v2970 = vld [vmem:[%s3 + $0x28c] sm:$0xf]
  %v2971 = vpack.c.bf16 %v2958, %v2956
  %v2972 = vpack.c.bf16 %v2962, %v2960
  %v2981 = vunpack.c.l.b16 %v2963
  %v2982 = vunpack.c.l.b16 %v2964
  %v2983 = vunpack.c.l.b16 %v2965
  %v2984 = vunpack.c.l.b16 %v2966
  %v2985 = vunpack.c.l.b16 %v2967
  %v2986 = vunpack.c.l.b16 %v2968
  %v2987 = vunpack.c.l.b16 %v2969
  %v2988 = vunpack.c.l.b16 %v2970
  %v2989 = vpack.c.b16 %v2982, %v2981
  %v2990 = vpack.c.b16 %v2984, %v2983
  %v2991 = vpack.c.b16 %v2986, %v2985
  %v2992 = vpack.c.b16 %v2988, %v2987
  %v2994 = vsel %vm544, %v2989, 0
  %v2997 = vsel %vm544, %v2990, 0
  %v3000 = vsel %vm544, %v2991, 0
  %v3003 = vsel %vm544, %v2992, 0
  %3005 = vmatprep.subr.bf16.mxu0 0
  %3006 = vmatpush1.bf16.msra.mxu0 %v2971
  %3007 = vmatprep.subr.bf16.mxu0 0
  %3008 = vmatpush1.bf16.msra.mxu0 %v2972
  %3009 = vmatprep.subr.bf16.mxu0 0
  %3010 = vmatpush1.bf16.msra.mxu0 0
  %3011 = vmatprep.subr.bf16.mxu0 0
  %3012 = vmatpush1.bf16.msra.mxu0 0
  %3013 = vmatprep.subr.bf16.mxu0 0
  %3014 = vmatpush1.bf16.msra.mxu0 0
  %3015 = vmatprep.subr.bf16.mxu0 0
  %3016 = vmatpush1.bf16.msra.mxu0 0
  %3017 = vmatprep.subr.bf16.mxu0 0
  %3018 = vmatpush1.bf16.msra.mxu0 0
  %3019 = vmatprep.subr.bf16.mxu0 0
  %3020 = vmatpush1.bf16.msra.mxu0 0
  %3021 = vmatprep.subr.bf16.mxu0 0
  %3022 = vmatpush1.bf16.msra.mxu0 0
  %3023 = vmatprep.subr.bf16.mxu0 0
  %3024 = vmatpush1.bf16.msra.mxu0 0
  %3025 = vmatprep.subr.bf16.mxu0 0
  %3026 = vmatpush1.bf16.msra.mxu0 0
  %3027 = vmatprep.subr.bf16.mxu0 0
  %3028 = vmatpush1.bf16.msra.mxu0 0
  %3029 = vmatprep.subr.bf16.mxu0 0
  %3030 = vmatpush1.bf16.msra.mxu0 0
  %3031 = vmatprep.subr.bf16.mxu0 0
  %3032 = vmatpush1.bf16.msra.mxu0 0
  %3033 = vmatprep.subr.bf16.mxu0 0
  %3034 = vmatpush1.bf16.msra.mxu0 0
  %3035 = vmatprep.subr.bf16.mxu0 0
  %3036 = vmatpush1.bf16.msra.mxu0 0
  %3037 = vmatprep.mubr.bf16.mxu0 0
  %3038 = vmatmul.mubr.bf16.gmra.mrb[0].mxu0 %v2994
  %v3039 = vpop.f32.mrb[0].mxu0
  %v3040 = vadd.f32 0.0, %v3039
  %v3041 = vpop.f32.mrb[0].mxu0
  %v3042 = vpop.f32.mrb[0].mxu0
  %v3043 = vadd.f32 0.0, %v3042
  %v3044 = vpop.f32.mrb[0].mxu0
  %3045 = vmatprep.mubr.bf16.mxu0 0
  %3046 = vmatmul.mubr.bf16.gmra.mrb[0].mxu0 %v2997
  %v3047 = vpop.f32.mrb[0].mxu0
  %v3048 = vadd.f32 0.0, %v3047
  %v3049 = vpop.f32.mrb[0].mxu0
  %v3050 = vpop.f32.mrb[0].mxu0
  %v3051 = vadd.f32 0.0, %v3050
  %v3052 = vpop.f32.mrb[0].mxu0
  %3053 = vmatprep.mubr.bf16.mxu0 0
  %3054 = vmatmul.mubr.bf16.gmra.mrb[0].mxu0 %v3000
  %v3055 = vpop.f32.mrb[0].mxu0
  %v3056 = vadd.f32 0.0, %v3055
  %v3057 = vpop.f32.mrb[0].mxu0
  %v3058 = vpop.f32.mrb[0].mxu0
  %v3059 = vadd.f32 0.0, %v3058
  %v3060 = vpop.f32.mrb[0].mxu0
  %3061 = vmatprep.mubr.bf16.mxu0 0
  %3062 = vmatmul.mubr.bf16.gmra.mrb[0].mxu0 %v3003
  %v3063 = vpop.f32.mrb[0].mxu0
  %v3064 = vadd.f32 0.0, %v3063
  %v3065 = vpop.f32.mrb[0].mxu0
  %v3066 = vpop.f32.mrb[0].mxu0
  %v3067 = vadd.f32 0.0, %v3066
  %v3068 = vpop.f32.mrb[0].mxu0
  %3069 = vdwg.mxu0
  %v3070 = vadd.f32 %v2189, %v3040
  %v3071 = vadd.f32 %v2192, %v3043
  %v3072 = vadd.f32 %v2197, %v3048
  %v3073 = vadd.f32 %v2200, %v3051
  %v3074 = vadd.f32 %v2205, %v3056
  %v3075 = vadd.f32 %v2208, %v3059
  %v3076 = vadd.f32 %v2213, %v3064
  %v3077 = vadd.f32 %v2216, %v3067
  %v3078 = vld [vmem:[%s3 + $0x290] sm:$0xf]
  %v3079 = vld [vmem:[%s3 + $0x294] sm:$0xf]
  %v3080 = vld [vmem:[%s3 + $0x298] sm:$0xf]
  %v3081 = vld [vmem:[%s3 + $0x29c] sm:$0xf]
  %v3082 = vld [vmem:[%s3 + $0x2a0] sm:$0xf]
  %v3083 = vld [vmem:[%s3 + $0x2a4] sm:$0xf]
  %v3084 = vld [vmem:[%s3 + $0x2a8] sm:$0xf]
  %v3085 = vld [vmem:[%s3 + $0x2ac] sm:$0xf]
  %v3086 = vpack.c.bf16 %v2952, %v2951
  %v3087 = vpack.c.bf16 %v2954, %v2953
  %v3096 = vunpack.c.l.b16 %v3078
  %v3097 = vunpack.c.l.b16 %v3079
  %v3098 = vunpack.c.l.b16 %v3080
  %v3099 = vunpack.c.l.b16 %v3081
  %v3100 = vunpack.c.l.b16 %v3082
  %v3101 = vunpack.c.l.b16 %v3083
  %v3102 = vunpack.c.l.b16 %v3084
  %v3103 = vunpack.c.l.b16 %v3085
  %v3104 = vpack.c.b16 %v3097, %v3096
  %v3105 = vpack.c.b16 %v3099, %v3098
  %v3106 = vpack.c.b16 %v3101, %v3100
  %v3107 = vpack.c.b16 %v3103, %v3102
  %v3109 = vsel %vm544, %v3104, 0
  %v3112 = vsel %vm544, %v3105, 0
  %v3115 = vsel %vm544, %v3106, 0
  %v3118 = vsel %vm544, %v3107, 0
  %3120 = vmatprep.subr.bf16.mxu0 0
  %3121 = vmatpush1.bf16.msra.mxu0 %v3086
  %3122 = vmatprep.subr.bf16.mxu0 0
  %3123 = vmatpush1.bf16.msra.mxu0 %v3087
  %3124 = vmatprep.subr.bf16.mxu0 0
  %3125 = vmatpush1.bf16.msra.mxu0 0
  %3126 = vmatprep.subr.bf16.mxu0 0
  %3127 = vmatpush1.bf16.msra.mxu0 0
  %3128 = vmatprep.subr.bf16.mxu0 0
  %3129 = vmatpush1.bf16.msra.mxu0 0
  %3130 = vmatprep.subr.bf16.mxu0 0
  %3131 = vmatpush1.bf16.msra.mxu0 0
  %3132 = vmatprep.subr.bf16.mxu0 0
  %3133 = vmatpush1.bf16.msra.mxu0 0
  %3134 = vmatprep.subr.bf16.mxu0 0
  %3135 = vmatpush1.bf16.msra.mxu0 0
  %3136 = vmatprep.subr.bf16.mxu0 0
  %3137 = vmatpush1.bf16.msra.mxu0 0
  %3138 = vmatprep.subr.bf16.mxu0 0
  %3139 = vmatpush1.bf16.msra.mxu0 0
  %3140 = vmatprep.subr.bf16.mxu0 0
  %3141 = vmatpush1.bf16.msra.mxu0 0
  %3142 = vmatprep.subr.bf16.mxu0 0
  %3143 = vmatpush1.bf16.msra.mxu0 0
  %3144 = vmatprep.subr.bf16.mxu0 0
  %3145 = vmatpush1.bf16.msra.mxu0 0
  %3146 = vmatprep.subr.bf16.mxu0 0
  %3147 = vmatpush1.bf16.msra.mxu0 0
  %3148 = vmatprep.subr.bf16.mxu0 0
  %3149 = vmatpush1.bf16.msra.mxu0 0
  %3150 = vmatprep.subr.bf16.mxu0 0
  %3151 = vmatpush1.bf16.msra.mxu0 0
  %3152 = vmatprep.mubr.bf16.mxu0 0
  %3153 = vmatmul.mubr.bf16.gmra.mrb[0].mxu0 %v3109
  %v3154 = vpop.f32.mrb[0].mxu0
  %v3155 = vadd.f32 0.0, %v3154
  %v3156 = vpop.f32.mrb[0].mxu0
  %v3157 = vpop.f32.mrb[0].mxu0
  %v3158 = vadd.f32 0.0, %v3157
  %v3159 = vpop.f32.mrb[0].mxu0
  %3160 = vmatprep.mubr.bf16.mxu0 0
  %3161 = vmatmul.mubr.bf16.gmra.mrb[0].mxu0 %v3112
  %v3162 = vpop.f32.mrb[0].mxu0
  %v3163 = vadd.f32 0.0, %v3162
  %v3164 = vpop.f32.mrb[0].mxu0
  %v3165 = vpop.f32.mrb[0].mxu0
  %v3166 = vadd.f32 0.0, %v3165
  %v3167 = vpop.f32.mrb[0].mxu0
  %3168 = vmatprep.mubr.bf16.mxu0 0
  %3169 = vmatmul.mubr.bf16.gmra.mrb[0].mxu0 %v3115
  %v3170 = vpop.f32.mrb[0].mxu0
  %v3171 = vadd.f32 0.0, %v3170
  %v3172 = vpop.f32.mrb[0].mxu0
  %v3173 = vpop.f32.mrb[0].mxu0
  %v3174 = vadd.f32 0.0, %v3173
  %v3175 = vpop.f32.mrb[0].mxu0
  %3176 = vmatprep.mubr.bf16.mxu0 0
  %3177 = vmatmul.mubr.bf16.gmra.mrb[0].mxu0 %v3118
  %v3178 = vpop.f32.mrb[0].mxu0
  %v3179 = vadd.f32 0.0, %v3178
  %v3180 = vpop.f32.mrb[0].mxu0
  %v3181 = vpop.f32.mrb[0].mxu0
  %v3182 = vadd.f32 0.0, %v3181
  %v3183 = vpop.f32.mrb[0].mxu0
  %3184 = vdwg.mxu0
  %v3185 = vadd.f32 %v3070, %v3155
  %v3186 = vadd.f32 %v3071, %v3158
  %v3187 = vadd.f32 %v3072, %v3163
  %v3188 = vadd.f32 %v3073, %v3166
  %v3189 = vadd.f32 %v3074, %v3171
  %v3190 = vadd.f32 %v3075, %v3174
  %v3191 = vadd.f32 %v3076, %v3179
  %v3192 = vadd.f32 %v3077, %v3182
  %3193 = vrot.lane.b32.xlu0 %v2951, 126
  %v3194 = vpop.permute.xlu0 %3193
  %3195 = vrot.lane.b32.xlu0 %v2952, 126
  %v3196 = vpop.permute.xlu0 %3195
  %3197 = vrot.lane.b32.xlu0 %v2953, 126
  %v3198 = vpop.permute.xlu0 %3197
  %3199 = vrot.lane.b32.xlu0 %v2954, 126
  %v3200 = vpop.permute.xlu0 %3199
  %v3201 = vld [vmem:[%s3 + $0x2b0] sm:$0xf]
  %v3202 = vld [vmem:[%s3 + $0x2b4] sm:$0xf]
  %v3203 = vld [vmem:[%s3 + $0x2b8] sm:$0xf]
  %v3204 = vld [vmem:[%s3 + $0x2bc] sm:$0xf]
  %v3205 = vld [vmem:[%s3 + $0x2c0] sm:$0xf]
  %v3206 = vld [vmem:[%s3 + $0x2c4] sm:$0xf]
  %v3207 = vld [vmem:[%s3 + $0x2c8] sm:$0xf]
  %v3208 = vld [vmem:[%s3 + $0x2cc] sm:$0xf]
  %v3209 = vpack.c.bf16 %v3196, %v3194
  %v3210 = vpack.c.bf16 %v3200, %v3198
  %v3219 = vunpack.c.l.b16 %v3201
  %v3220 = vunpack.c.l.b16 %v3202
  %v3221 = vunpack.c.l.b16 %v3203
  %v3222 = vunpack.c.l.b16 %v3204
  %v3223 = vunpack.c.l.b16 %v3205
  %v3224 = vunpack.c.l.b16 %v3206
  %v3225 = vunpack.c.l.b16 %v3207
  %v3226 = vunpack.c.l.b16 %v3208
  %v3227 = vpack.c.b16 %v3220, %v3219
  %v3228 = vpack.c.b16 %v3222, %v3221
  %v3229 = vpack.c.b16 %v3224, %v3223
  %v3230 = vpack.c.b16 %v3226, %v3225
  %v3232 = vsel %vm544, %v3227, 0
  %v3235 = vsel %vm544, %v3228, 0
  %v3238 = vsel %vm544, %v3229, 0
  %v3241 = vsel %vm544, %v3230, 0
  %3243 = vmatprep.subr.bf16.mxu0 0
  %3244 = vmatpush1.bf16.msra.mxu0 %v3209
  %3245 = vmatprep.subr.bf16.mxu0 0
  %3246 = vmatpush1.bf16.msra.mxu0 %v3210
  %3247 = vmatprep.subr.bf16.mxu0 0
  %3248 = vmatpush1.bf16.msra.mxu0 0
  %3249 = vmatprep.subr.bf16.mxu0 0
  %3250 = vmatpush1.bf16.msra.mxu0 0
  %3251 = vmatprep.subr.bf16.mxu0 0
  %3252 = vmatpush1.bf16.msra.mxu0 0
  %3253 = vmatprep.subr.bf16.mxu0 0
  %3254 = vmatpush1.bf16.msra.mxu0 0
  %3255 = vmatprep.subr.bf16.mxu0 0
  %3256 = vmatpush1.bf16.msra.mxu0 0
  %3257 = vmatprep.subr.bf16.mxu0 0
  %3258 = vmatpush1.bf16.msra.mxu0 0
  %3259 = vmatprep.subr.bf16.mxu0 0
  %3260 = vmatpush1.bf16.msra.mxu0 0
  %3261 = vmatprep.subr.bf16.mxu0 0
  %3262 = vmatpush1.bf16.msra.mxu0 0
  %3263 = vmatprep.subr.bf16.mxu0 0
  %3264 = vmatpush1.bf16.msra.mxu0 0
  %3265 = vmatprep.subr.bf16.mxu0 0
  %3266 = vmatpush1.bf16.msra.mxu0 0
  %3267 = vmatprep.subr.bf16.mxu0 0
  %3268 = vmatpush1.bf16.msra.mxu0 0
  %3269 = vmatprep.subr.bf16.mxu0 0
  %3270 = vmatpush1.bf16.msra.mxu0 0
  %3271 = vmatprep.subr.bf16.mxu0 0
  %3272 = vmatpush1.bf16.msra.mxu0 0
  %3273 = vmatprep.subr.bf16.mxu0 0
  %3274 = vmatpush1.bf16.msra.mxu0 0
  %3275 = vmatprep.mubr.bf16.mxu0 0
  %3276 = vmatmul.mubr.bf16.gmra.mrb[0].mxu0 %v3232
  %v3277 = vpop.f32.mrb[0].mxu0
  %v3278 = vadd.f32 0.0, %v3277
  %v3279 = vpop.f32.mrb[0].mxu0
  %v3280 = vpop.f32.mrb[0].mxu0
  %v3281 = vadd.f32 0.0, %v3280
  %v3282 = vpop.f32.mrb[0].mxu0
  %3283 = vmatprep.mubr.bf16.mxu0 0
  %3284 = vmatmul.mubr.bf16.gmra.mrb[0].mxu0 %v3235
  %v3285 = vpop.f32.mrb[0].mxu0
  %v3286 = vadd.f32 0.0, %v3285
  %v3287 = vpop.f32.mrb[0].mxu0
  %v3288 = vpop.f32.mrb[0].mxu0
  %v3289 = vadd.f32 0.0, %v3288
  %v3290 = vpop.f32.mrb[0].mxu0
  %3291 = vmatprep.mubr.bf16.mxu0 0
  %3292 = vmatmul.mubr.bf16.gmra.mrb[0].mxu0 %v3238
  %v3293 = vpop.f32.mrb[0].mxu0
  %v3294 = vadd.f32 0.0, %v3293
  %v3295 = vpop.f32.mrb[0].mxu0
  %v3296 = vpop.f32.mrb[0].mxu0
  %v3297 = vadd.f32 0.0, %v3296
  %v3298 = vpop.f32.mrb[0].mxu0
  %3299 = vmatprep.mubr.bf16.mxu0 0
  %3300 = vmatmul.mubr.bf16.gmra.mrb[0].mxu0 %v3241
  %v3301 = vpop.f32.mrb[0].mxu0
  %v3302 = vadd.f32 0.0, %v3301
  %v3303 = vpop.f32.mrb[0].mxu0
  %v3304 = vpop.f32.mrb[0].mxu0
  %v3305 = vadd.f32 0.0, %v3304
  %v3306 = vpop.f32.mrb[0].mxu0
  %3307 = vdwg.mxu0
  %v3308 = vadd.f32 %v3185, %v3278
  %v3309 = vadd.f32 %v3186, %v3281
  %v3310 = vadd.f32 %v3187, %v3286
  %v3311 = vadd.f32 %v3188, %v3289
  %v3312 = vadd.f32 %v3189, %v3294
  %v3313 = vadd.f32 %v3190, %v3297
  %v3314 = vadd.f32 %v3191, %v3302
  %v3315 = vadd.f32 %v3192, %v3305
  %v3316 = vtanh.pop %v3308
  %v3317 = vtanh.pop %v3309
  %v3318 = vtanh.pop %v3310
  %v3319 = vtanh.pop %v3311
  %v3320 = vxor.u32 %v3312, 2147483648
  %v3321 = vxor.u32 %v3313, 2147483648
  %v3322 = vxor.u32 %v3314, 2147483648
  %v3323 = vxor.u32 %v3315, 2147483648
  %v3324 = vmul.f32 %v3320, 1.442695
  %v3325 = vpow.pop %v3324
  %v3326 = vmul.f32 %v3321, 1.442695
  %v3327 = vpow.pop %v3326
  %v3328 = vmul.f32 %v3322, 1.442695
  %v3329 = vpow.pop %v3328
  %v3330 = vmul.f32 %v3323, 1.442695
  %v3331 = vpow.pop %v3330
  %v3332 = vadd.f32 %v3325, 1.0
  %v3333 = vadd.f32 %v3327, 1.0
  %v3334 = vadd.f32 %v3329, 1.0
  %v3335 = vadd.f32 %v3331, 1.0
  %v3336 = vrcp.pop %v3332
  %v3337 = vmul.f32 1.0, %v3336
  %v3338 = vrcp.pop %v3333
  %v3339 = vmul.f32 1.0, %v3338
  %v3340 = vrcp.pop %v3334
  %v3341 = vmul.f32 1.0, %v3340
  %v3342 = vrcp.pop %v3335
  %v3343 = vmul.f32 1.0, %v3342
  %v3344 = vmul.f32 %v3316, %v3337
  %v3345 = vmul.f32 %v3317, %v3339
  %v3346 = vmul.f32 %v3318, %v3341
  %v3347 = vmul.f32 %v3319, %v3343
  %v3348 = vld [vmem:[%s3 + $0x2d0] sm:$0xf]
  %v3349 = vld [vmem:[%s3 + $0x2d4] sm:$0xf]
  %v3350 = vld [vmem:[%s3 + $0x2d8] sm:$0xf]
  %v3351 = vld [vmem:[%s3 + $0x2dc] sm:$0xf]
  %v3352 = vpack.c.bf16 %v3345, %v3344
  %v3353 = vpack.c.bf16 %v3347, %v3346
  %v3354 = vld [vmem:[%s4 + $0x1f0] sm:$0xff]
  %v3355 = vld [vmem:[%s4 + $0x1f8] sm:$0xff]
  %v3356 = vld [vmem:[%s4 + $0x200] sm:$0xff]
  %v3357 = vld [vmem:[%s4 + $0x208] sm:$0xff]
  %3359 = vset.pattern.permute.xlu0 0
  %3360 = vperm.xlu0 %3359, %v3354
  %v3361 = vpop.permute.xlu0 %3360
  %3364 = vset.pattern.permute.xlu0 0
  %3365 = vperm.xlu0 %3364, %v3355
  %v3366 = vpop.permute.xlu0 %3365
  %3369 = vset.pattern.permute.xlu0 0
  %3370 = vperm.xlu0 %3369, %v3356
  %v3371 = vpop.permute.xlu0 %3370
  %3374 = vset.pattern.permute.xlu0 0
  %3375 = vperm.xlu0 %3374, %v3357
  %v3376 = vpop.permute.xlu0 %3375
  %v3382 = vunpack.c.l.b16 %v3348
  %v3383 = vunpack.c.l.b16 %v3349
  %v3384 = vunpack.c.l.b16 %v3350
  %v3385 = vunpack.c.l.b16 %v3351
  %v3386 = vpack.c.b16 %v3383, %v3382
  %v3387 = vpack.c.b16 %v3385, %v3384
  %v3389 = vsel %vm544, %v3386, 0
  %v3392 = vsel %vm544, %v3387, 0
  %3394 = vmatprep.subr.bf16.mxu0 0
  %3395 = vmatpush1.bf16.msra.mxu0 %v3352
  %3396 = vmatprep.subr.bf16.mxu0 0
  %3397 = vmatpush1.bf16.msra.mxu0 %v3353
  %3398 = vmatprep.subr.bf16.mxu0 0
  %3399 = vmatpush1.bf16.msra.mxu0 0
  %3400 = vmatprep.subr.bf16.mxu0 0
  %3401 = vmatpush1.bf16.msra.mxu0 0
  %3402 = vmatprep.subr.bf16.mxu0 0
  %3403 = vmatpush1.bf16.msra.mxu0 0
  %3404 = vmatprep.subr.bf16.mxu0 0
  %3405 = vmatpush1.bf16.msra.mxu0 0
  %3406 = vmatprep.subr.bf16.mxu0 0
  %3407 = vmatpush1.bf16.msra.mxu0 0
  %3408 = vmatprep.subr.bf16.mxu0 0
  %3409 = vmatpush1.bf16.msra.mxu0 0
  %3410 = vmatprep.subr.bf16.mxu0 0
  %3411 = vmatpush1.bf16.msra.mxu0 0
  %3412 = vmatprep.subr.bf16.mxu0 0
  %3413 = vmatpush1.bf16.msra.mxu0 0
  %3414 = vmatprep.subr.bf16.mxu0 0
  %3415 = vmatpush1.bf16.msra.mxu0 0
  %3416 = vmatprep.subr.bf16.mxu0 0
  %3417 = vmatpush1.bf16.msra.mxu0 0
  %3418 = vmatprep.subr.bf16.mxu0 0
  %3419 = vmatpush1.bf16.msra.mxu0 0
  %3420 = vmatprep.subr.bf16.mxu0 0
  %3421 = vmatpush1.bf16.msra.mxu0 0
  %3422 = vmatprep.subr.bf16.mxu0 0
  %3423 = vmatpush1.bf16.msra.mxu0 0
  %3424 = vmatprep.subr.bf16.mxu0 0
  %3425 = vmatpush1.bf16.msra.mxu0 0
  %3426 = vmatprep.mubr.bf16.mxu0 0
  %3427 = vmatmul.mubr.bf16.gmra.mrb[0].mxu0 %v3389
  %v3428 = vpop.f32.mrb[0].mxu0
  %v3429 = vadd.f32 %v3361, %v3428
  %v3430 = vpop.f32.mrb[0].mxu0
  %v3431 = vpop.f32.mrb[0].mxu0
  %v3432 = vadd.f32 %v3366, %v3431
  %v3433 = vpop.f32.mrb[0].mxu0
  %3434 = vmatprep.mubr.bf16.mxu0 0
  %3435 = vmatmul.mubr.bf16.gmra.mrb[0].mxu0 %v3392
  %v3436 = vpop.f32.mrb[0].mxu0
  %v3437 = vadd.f32 %v3371, %v3436
  %v3438 = vpop.f32.mrb[0].mxu0
  %v3439 = vpop.f32.mrb[0].mxu0
  %v3440 = vadd.f32 %v3376, %v3439
  %v3441 = vpop.f32.mrb[0].mxu0
  %3442 = vdwg.mxu0
  %v3443 = vadd.f32 %v2933, %v3429
  %v3444 = vadd.f32 %v2936, %v3432
  %v3445 = vadd.f32 %v2941, %v3437
  %v3446 = vadd.f32 %v2944, %v3440
  %v3447 = vld [vmem:[%s3 + $0x2e0] sm:$0x3]
  %v3448 = vpack.c.bf16 %v3444, %v3443
  %v3449 = vpack.c.bf16 %v3446, %v3445
  %v3450 = vld [vmem:[%s4 + $0x210] sm:$0xf]
  %3452 = vset.pattern.permute.xlu0 0
  %3453 = vperm.xlu0 %3452, %v3450
  %v3454 = vpop.permute.xlu0 %3453
  %v3457 = vsel %vm544, %v3447, 0
  %3459 = vmatprep.subr.bf16.mxu0 0
  %3460 = vmatpush1.bf16.msra.mxu0 %v3448
  %3461 = vmatprep.subr.bf16.mxu0 0
  %3462 = vmatpush1.bf16.msra.mxu0 %v3449
  %3463 = vmatprep.subr.bf16.mxu0 0
  %3464 = vmatpush1.bf16.msra.mxu0 0
  %3465 = vmatprep.subr.bf16.mxu0 0
  %3466 = vmatpush1.bf16.msra.mxu0 0
  %3467 = vmatprep.subr.bf16.mxu0 0
  %3468 = vmatpush1.bf16.msra.mxu0 0
  %3469 = vmatprep.subr.bf16.mxu0 0
  %3470 = vmatpush1.bf16.msra.mxu0 0
  %3471 = vmatprep.subr.bf16.mxu0 0
  %3472 = vmatpush1.bf16.msra.mxu0 0
  %3473 = vmatprep.subr.bf16.mxu0 0
  %3474 = vmatpush1.bf16.msra.mxu0 0
  %3475 = vmatprep.subr.bf16.mxu0 0
  %3476 = vmatpush1.bf16.msra.mxu0 0
  %3477 = vmatprep.subr.bf16.mxu0 0
  %3478 = vmatpush1.bf16.msra.mxu0 0
  %3479 = vmatprep.subr.bf16.mxu0 0
  %3480 = vmatpush1.bf16.msra.mxu0 0
  %3481 = vmatprep.subr.bf16.mxu0 0
  %3482 = vmatpush1.bf16.msra.mxu0 0
  %3483 = vmatprep.subr.bf16.mxu0 0
  %3484 = vmatpush1.bf16.msra.mxu0 0
  %3485 = vmatprep.subr.bf16.mxu0 0
  %3486 = vmatpush1.bf16.msra.mxu0 0
  %3487 = vmatprep.subr.bf16.mxu0 0
  %3488 = vmatpush1.bf16.msra.mxu0 0
  %3489 = vmatprep.subr.bf16.mxu0 0
  %3490 = vmatpush1.bf16.msra.mxu0 0
  %3491 = vmatprep.mubr.bf16.mxu0 0
  %3492 = vmatmul.mubr.bf16.gmra.mrb[0].mxu0 %v3457
  %v3493 = vpop.f32.mrb[0].mxu0
  %v3494 = vadd.f32 %v3454, %v3493
  %v3495 = vpop.f32.mrb[0].mxu0
  %v3496 = vpop.f32.mrb[0].mxu0
  %v3497 = vpop.f32.mrb[0].mxu0
  %3498 = vdwg.mxu0
  %v3499 = vld [vmem:[%s3 + $0x2e8] sm:$0x3]
  %v3500 = vld [vmem:[%s4 + $0x218] sm:$0xf]
  %3502 = vset.pattern.permute.xlu0 0
  %3503 = vperm.xlu0 %3502, %v3500
  %v3504 = vpop.permute.xlu0 %3503
  %v3507 = vsel %vm544, %v3499, 0
  %3509 = vmatprep.subr.bf16.mxu0 0
  %3510 = vmatpush1.bf16.msra.mxu0 %v3448
  %3511 = vmatprep.subr.bf16.mxu0 0
  %3512 = vmatpush1.bf16.msra.mxu0 %v3449
  %3513 = vmatprep.subr.bf16.mxu0 0
  %3514 = vmatpush1.bf16.msra.mxu0 0
  %3515 = vmatprep.subr.bf16.mxu0 0
  %3516 = vmatpush1.bf16.msra.mxu0 0
  %3517 = vmatprep.subr.bf16.mxu0 0
  %3518 = vmatpush1.bf16.msra.mxu0 0
  %3519 = vmatprep.subr.bf16.mxu0 0
  %3520 = vmatpush1.bf16.msra.mxu0 0
  %3521 = vmatprep.subr.bf16.mxu0 0
  %3522 = vmatpush1.bf16.msra.mxu0 0
  %3523 = vmatprep.subr.bf16.mxu0 0
  %3524 = vmatpush1.bf16.msra.mxu0 0
  %3525 = vmatprep.subr.bf16.mxu0 0
  %3526 = vmatpush1.bf16.msra.mxu0 0
  %3527 = vmatprep.subr.bf16.mxu0 0
  %3528 = vmatpush1.bf16.msra.mxu0 0
  %3529 = vmatprep.subr.bf16.mxu0 0
  %3530 = vmatpush1.bf16.msra.mxu0 0
  %3531 = vmatprep.subr.bf16.mxu0 0
  %3532 = vmatpush1.bf16.msra.mxu0 0
  %3533 = vmatprep.subr.bf16.mxu0 0
  %3534 = vmatpush1.bf16.msra.mxu0 0
  %3535 = vmatprep.subr.bf16.mxu0 0
  %3536 = vmatpush1.bf16.msra.mxu0 0
  %3537 = vmatprep.subr.bf16.mxu0 0
  %3538 = vmatpush1.bf16.msra.mxu0 0
  %3539 = vmatprep.subr.bf16.mxu0 0
  %3540 = vmatpush1.bf16.msra.mxu0 0
  %3541 = vmatprep.mubr.bf16.mxu0 0
  %3542 = vmatmul.mubr.bf16.gmra.mrb[0].mxu0 %v3507
  %v3543 = vpop.f32.mrb[0].mxu0
  %v3544 = vadd.f32 %v3504, %v3543
  %v3545 = vpop.f32.mrb[0].mxu0
  %v3546 = vpop.f32.mrb[0].mxu0
  %v3547 = vpop.f32.mrb[0].mxu0
  %3548 = vdwg.mxu0
  %v3549 = vmul.f32 %v3544, %v500
  %v3550 = vmul.f32 %v3549, 1.442695
  %v3551 = vpow.pop %v3550
  %v3552 = vmul.f32 %v1941, %v3551
  %v3553 = vadd.f32 %v3552, %v3494
  %vm3554 = vcmp.ne.f32.partialorder %v3553, %v3553
  %v3555 = vsel %vm3554, 0.0, %v3553
  %vm3556 = vcmp.ne.f32.partialorder %v1765, %v1765
  %v3557 = vsel %vm3556, 0.0, %v1765
  %vm3558 = vcmp.ne.f32.partialorder %v1853, %v1853
  %v3559 = vsel %vm3558, 0.0, %v1853
  %v3560 = vsel %vm32, %v3549, 0.0
  %v3561 = vrot.slane %v3560, 4
  %v3562 = vadd.f32 %v3560, %v3561
  %v3563 = vrot.slane %v3562, 2
  %v3564 = vadd.f32 %v3562, %v3563
  %v3565 = vrot.slane %v3564, 1
  %v3566 = vadd.f32 %v3564, %v3565
  %3567 = vst [vmem:[%s6 + $0x1] sm:$0x1] %v3566
  %3568 = vst [vmem:[%s5] sm:$0x3] %v3557
  %v3569 = vpack.c.bf16 %v3559, %v3559
  %v3570 = vpack.c.bf16 %v3555, %v3555
  %v3571 = vld [vmem:[%s3 + $0x2f0] sm:$0x3]
  %v3572 = vld [vmem:[%s3 + $0x2f8] sm:$0x3]
  %v3574 = vsel %vm436, %v3572, 0
  %v3577 = vsel %vm443, %v3570, 0
  %3579 = vmatprep.subr.bf16.mxu0 0
  %3580 = vmatpush1.bf16.msra.mxu0 %v3577
  %3581 = vmatprep.subr.bf16.mxu0 0
  %3582 = vmatpush1.bf16.msra.mxu0 0
  %3583 = vmatprep.subr.bf16.mxu0 0
  %3584 = vmatpush1.bf16.msra.mxu0 0
  %3585 = vmatprep.subr.bf16.mxu0 0
  %3586 = vmatpush1.bf16.msra.mxu0 0
  %3587 = vmatprep.subr.bf16.mxu0 0
  %3588 = vmatpush1.bf16.msra.mxu0 0
  %3589 = vmatprep.subr.bf16.mxu0 0
  %3590 = vmatpush1.bf16.msra.mxu0 0
  %3591 = vmatprep.subr.bf16.mxu0 0
  %3592 = vmatpush1.bf16.msra.mxu0 0
  %3593 = vmatprep.subr.bf16.mxu0 0
  %3594 = vmatpush1.bf16.msra.mxu0 0
  %3595 = vmatprep.subr.bf16.mxu0 0
  %3596 = vmatpush1.bf16.msra.mxu0 0
  %3597 = vmatprep.subr.bf16.mxu0 0
  %3598 = vmatpush1.bf16.msra.mxu0 0
  %3599 = vmatprep.subr.bf16.mxu0 0
  %3600 = vmatpush1.bf16.msra.mxu0 0
  %3601 = vmatprep.subr.bf16.mxu0 0
  %3602 = vmatpush1.bf16.msra.mxu0 0
  %3603 = vmatprep.subr.bf16.mxu0 0
  %3604 = vmatpush1.bf16.msra.mxu0 0
  %3605 = vmatprep.subr.bf16.mxu0 0
  %3606 = vmatpush1.bf16.msra.mxu0 0
  %3607 = vmatprep.subr.bf16.mxu0 0
  %3608 = vmatpush1.bf16.msra.mxu0 0
  %3609 = vmatprep.subr.bf16.mxu0 0
  %3610 = vmatpush1.bf16.msra.mxu0 0
  %3611 = vmatprep.mubr.bf16.mxu0 0
  %3612 = vmatmul.mubr.bf16.gmra.mrb[0].mxu0 %v3574
  %v3613 = vpop.f32.mrb[0].mxu0
  %v3614 = vadd.f32 0.0, %v3613
  %v3615 = vpop.f32.mrb[0].mxu0
  %v3616 = vpop.f32.mrb[0].mxu0
  %v3617 = vpop.f32.mrb[0].mxu0
  %3618 = vdwg.mxu0
  %v3620 = vsel %vm2239, %v3571, 0
  %v3623 = vsel %vm2246, %v3569, 0
  %3625 = vmatprep.subr.bf16.mxu0 0
  %3626 = vmatpush1.bf16.msra.mxu0 %v3623
  %3627 = vmatprep.subr.bf16.mxu0 0
  %3628 = vmatpush1.bf16.msra.mxu0 0
  %3629 = vmatprep.subr.bf16.mxu0 0
  %3630 = vmatpush1.bf16.msra.mxu0 0
  %3631 = vmatprep.subr.bf16.mxu0 0
  %3632 = vmatpush1.bf16.msra.mxu0 0
  %3633 = vmatprep.subr.bf16.mxu0 0
  %3634 = vmatpush1.bf16.msra.mxu0 0
  %3635 = vmatprep.subr.bf16.mxu0 0
  %3636 = vmatpush1.bf16.msra.mxu0 0
  %3637 = vmatprep.subr.bf16.mxu0 0
  %3638 = vmatpush1.bf16.msra.mxu0 0
  %3639 = vmatprep.subr.bf16.mxu0 0
  %3640 = vmatpush1.bf16.msra.mxu0 0
  %3641 = vmatprep.subr.bf16.mxu0 0
  %3642 = vmatpush1.bf16.msra.mxu0 0
  %3643 = vmatprep.subr.bf16.mxu0 0
  %3644 = vmatpush1.bf16.msra.mxu0 0
  %3645 = vmatprep.subr.bf16.mxu0 0
  %3646 = vmatpush1.bf16.msra.mxu0 0
  %3647 = vmatprep.subr.bf16.mxu0 0
  %3648 = vmatpush1.bf16.msra.mxu0 0
  %3649 = vmatprep.subr.bf16.mxu0 0
  %3650 = vmatpush1.bf16.msra.mxu0 0
  %3651 = vmatprep.subr.bf16.mxu0 0
  %3652 = vmatpush1.bf16.msra.mxu0 0
  %3653 = vmatprep.subr.bf16.mxu0 0
  %3654 = vmatpush1.bf16.msra.mxu0 0
  %3655 = vmatprep.subr.bf16.mxu0 0
  %3656 = vmatpush1.bf16.msra.mxu0 0
  %3657 = vmatprep.mubr.bf16.mxu0 0
  %3658 = vmatmul.mubr.bf16.gmra.mrb[0].mxu0 %v3620
  %v3659 = vpop.f32.mrb[0].mxu0
  %v3660 = vadd.f32 %v3614, %v3659
  %v3661 = vpop.f32.mrb[0].mxu0
  %v3662 = vpop.f32.mrb[0].mxu0
  %v3663 = vpop.f32.mrb[0].mxu0
  %3664 = vdwg.mxu0
  %v3665 = vld [vmem:[%s3 + $0x300] sm:$0x3]
  %v3666 = vld [vmem:[%s3 + $0x308] sm:$0x3]
  %v3668 = vsel %vm436, %v3666, 0
  %3670 = vmatprep.subr.bf16.mxu0 0
  %3671 = vmatpush1.bf16.msra.mxu0 %v3577
  %3672 = vmatprep.subr.bf16.mxu0 0
  %3673 = vmatpush1.bf16.msra.mxu0 0
  %3674 = vmatprep.subr.bf16.mxu0 0
  %3675 = vmatpush1.bf16.msra.mxu0 0
  %3676 = vmatprep.subr.bf16.mxu0 0
  %3677 = vmatpush1.bf16.msra.mxu0 0
  %3678 = vmatprep.subr.bf16.mxu0 0
  %3679 = vmatpush1.bf16.msra.mxu0 0
  %3680 = vmatprep.subr.bf16.mxu0 0
  %3681 = vmatpush1.bf16.msra.mxu0 0
  %3682 = vmatprep.subr.bf16.mxu0 0
  %3683 = vmatpush1.bf16.msra.mxu0 0
  %3684 = vmatprep.subr.bf16.mxu0 0
  %3685 = vmatpush1.bf16.msra.mxu0 0
  %3686 = vmatprep.subr.bf16.mxu0 0
  %3687 = vmatpush1.bf16.msra.mxu0 0
  %3688 = vmatprep.subr.bf16.mxu0 0
  %3689 = vmatpush1.bf16.msra.mxu0 0
  %3690 = vmatprep.subr.bf16.mxu0 0
  %3691 = vmatpush1.bf16.msra.mxu0 0
  %3692 = vmatprep.subr.bf16.mxu0 0
  %3693 = vmatpush1.bf16.msra.mxu0 0
  %3694 = vmatprep.subr.bf16.mxu0 0
  %3695 = vmatpush1.bf16.msra.mxu0 0
  %3696 = vmatprep.subr.bf16.mxu0 0
  %3697 = vmatpush1.bf16.msra.mxu0 0
  %3698 = vmatprep.subr.bf16.mxu0 0
  %3699 = vmatpush1.bf16.msra.mxu0 0
  %3700 = vmatprep.subr.bf16.mxu0 0
  %3701 = vmatpush1.bf16.msra.mxu0 0
  %3702 = vmatprep.mubr.bf16.mxu0 0
  %3703 = vmatmul.mubr.bf16.gmra.mrb[0].mxu0 %v3668
  %v3704 = vpop.f32.mrb[0].mxu0
  %v3705 = vadd.f32 0.0, %v3704
  %v3706 = vpop.f32.mrb[0].mxu0
  %v3707 = vpop.f32.mrb[0].mxu0
  %v3708 = vpop.f32.mrb[0].mxu0
  %3709 = vdwg.mxu0
  %v3711 = vsel %vm2239, %v3665, 0
  %3713 = vmatprep.subr.bf16.mxu0 0
  %3714 = vmatpush1.bf16.msra.mxu0 %v3623
  %3715 = vmatprep.subr.bf16.mxu0 0
  %3716 = vmatpush1.bf16.msra.mxu0 0
  %3717 = vmatprep.subr.bf16.mxu0 0
  %3718 = vmatpush1.bf16.msra.mxu0 0
  %3719 = vmatprep.subr.bf16.mxu0 0
  %3720 = vmatpush1.bf16.msra.mxu0 0
  %3721 = vmatprep.subr.bf16.mxu0 0
  %3722 = vmatpush1.bf16.msra.mxu0 0
  %3723 = vmatprep.subr.bf16.mxu0 0
  %3724 = vmatpush1.bf16.msra.mxu0 0
  %3725 = vmatprep.subr.bf16.mxu0 0
  %3726 = vmatpush1.bf16.msra.mxu0 0
  %3727 = vmatprep.subr.bf16.mxu0 0
  %3728 = vmatpush1.bf16.msra.mxu0 0
  %3729 = vmatprep.subr.bf16.mxu0 0
  %3730 = vmatpush1.bf16.msra.mxu0 0
  %3731 = vmatprep.subr.bf16.mxu0 0
  %3732 = vmatpush1.bf16.msra.mxu0 0
  %3733 = vmatprep.subr.bf16.mxu0 0
  %3734 = vmatpush1.bf16.msra.mxu0 0
  %3735 = vmatprep.subr.bf16.mxu0 0
  %3736 = vmatpush1.bf16.msra.mxu0 0
  %3737 = vmatprep.subr.bf16.mxu0 0
  %3738 = vmatpush1.bf16.msra.mxu0 0
  %3739 = vmatprep.subr.bf16.mxu0 0
  %3740 = vmatpush1.bf16.msra.mxu0 0
  %3741 = vmatprep.subr.bf16.mxu0 0
  %3742 = vmatpush1.bf16.msra.mxu0 0
  %3743 = vmatprep.subr.bf16.mxu0 0
  %3744 = vmatpush1.bf16.msra.mxu0 0
  %3745 = vmatprep.mubr.bf16.mxu0 0
  %3746 = vmatmul.mubr.bf16.gmra.mrb[0].mxu0 %v3711
  %v3747 = vpop.f32.mrb[0].mxu0
  %v3748 = vadd.f32 %v3705, %v3747
  %v3749 = vpop.f32.mrb[0].mxu0
  %v3750 = vpop.f32.mrb[0].mxu0
  %v3751 = vpop.f32.mrb[0].mxu0
  %3752 = vdwg.mxu0
  %v3753 = vld [vmem:[%s3 + $0x320] sm:$0xf]
  %v3754 = vld [vmem:[%s3 + $0x324] sm:$0xf]
  %v3755 = vld [vmem:[%s3 + $0x328] sm:$0xf]
  %v3756 = vld [vmem:[%s3 + $0x32c] sm:$0xf]
  %v3757 = vld [vmem:[%s3 + $0x330] sm:$0xf]
  %v3758 = vld [vmem:[%s3 + $0x334] sm:$0xf]
  %v3759 = vld [vmem:[%s3 + $0x338] sm:$0xf]
  %v3760 = vld [vmem:[%s3 + $0x33c] sm:$0xf]
  %v3761 = vld [vmem:[%s3 + $0x340] sm:$0xf]
  %v3762 = vld [vmem:[%s3 + $0x344] sm:$0xf]
  %v3763 = vld [vmem:[%s3 + $0x348] sm:$0xf]
  %v3764 = vld [vmem:[%s3 + $0x34c] sm:$0xf]
  %v3765 = vld [vmem:[%s3 + $0x350] sm:$0xf]
  %v3766 = vld [vmem:[%s3 + $0x354] sm:$0xf]
  %v3767 = vld [vmem:[%s3 + $0x358] sm:$0xf]
  %v3768 = vld [vmem:[%s3 + $0x35c] sm:$0xf]
  %v3769 = vld [vmem:[%s4 + $0x240] sm:$0xff]
  %v3770 = vld [vmem:[%s4 + $0x248] sm:$0xff]
  %v3771 = vld [vmem:[%s4 + $0x250] sm:$0xff]
  %v3772 = vld [vmem:[%s4 + $0x258] sm:$0xff]
  %v3773 = vld [vmem:[%s4 + $0x260] sm:$0xff]
  %v3774 = vld [vmem:[%s4 + $0x268] sm:$0xff]
  %v3775 = vld [vmem:[%s4 + $0x270] sm:$0xff]
  %v3776 = vld [vmem:[%s4 + $0x278] sm:$0xff]
  %v3777 = vld [vmem:[%s4 + $0x280] sm:$0xff]
  %v3778 = vld [vmem:[%s4 + $0x288] sm:$0xff]
  %v3779 = vld [vmem:[%s4 + $0x290] sm:$0xff]
  %v3780 = vld [vmem:[%s4 + $0x298] sm:$0xff]
  %v3781 = vld [vmem:[%s4 + $0x2a0] sm:$0xff]
  %v3782 = vld [vmem:[%s4 + $0x2a8] sm:$0xff]
  %v3783 = vld [vmem:[%s4 + $0x2b0] sm:$0xff]
  %v3784 = vld [vmem:[%s4 + $0x2b8] sm:$0xff]
  %3786 = vset.pattern.permute.xlu0 0
  %3787 = vperm.xlu0 %3786, %v3769
  %v3788 = vpop.permute.xlu0 %3787
  %3791 = vset.pattern.permute.xlu0 0
  %3792 = vperm.xlu0 %3791, %v3770
  %v3793 = vpop.permute.xlu0 %3792
  %3796 = vset.pattern.permute.xlu0 0
  %3797 = vperm.xlu0 %3796, %v3771
  %v3798 = vpop.permute.xlu0 %3797
  %3801 = vset.pattern.permute.xlu0 0
  %3802 = vperm.xlu0 %3801, %v3772
  %v3803 = vpop.permute.xlu0 %3802
  %3806 = vset.pattern.permute.xlu0 0
  %3807 = vperm.xlu0 %3806, %v3773
  %v3808 = vpop.permute.xlu0 %3807
  %3811 = vset.pattern.permute.xlu0 0
  %3812 = vperm.xlu0 %3811, %v3774
  %v3813 = vpop.permute.xlu0 %3812
  %3816 = vset.pattern.permute.xlu0 0
  %3817 = vperm.xlu0 %3816, %v3775
  %v3818 = vpop.permute.xlu0 %3817
  %3821 = vset.pattern.permute.xlu0 0
  %3822 = vperm.xlu0 %3821, %v3776
  %v3823 = vpop.permute.xlu0 %3822
  %3826 = vset.pattern.permute.xlu0 0
  %3827 = vperm.xlu0 %3826, %v3777
  %v3828 = vpop.permute.xlu0 %3827
  %3831 = vset.pattern.permute.xlu0 0
  %3832 = vperm.xlu0 %3831, %v3778
  %v3833 = vpop.permute.xlu0 %3832
  %3836 = vset.pattern.permute.xlu0 0
  %3837 = vperm.xlu0 %3836, %v3779
  %v3838 = vpop.permute.xlu0 %3837
  %3841 = vset.pattern.permute.xlu0 0
  %3842 = vperm.xlu0 %3841, %v3780
  %v3843 = vpop.permute.xlu0 %3842
  %3846 = vset.pattern.permute.xlu0 0
  %3847 = vperm.xlu0 %3846, %v3781
  %v3848 = vpop.permute.xlu0 %3847
  %3851 = vset.pattern.permute.xlu0 0
  %3852 = vperm.xlu0 %3851, %v3782
  %v3853 = vpop.permute.xlu0 %3852
  %3856 = vset.pattern.permute.xlu0 0
  %3857 = vperm.xlu0 %3856, %v3783
  %v3858 = vpop.permute.xlu0 %3857
  %3861 = vset.pattern.permute.xlu0 0
  %3862 = vperm.xlu0 %3861, %v3784
  %v3863 = vpop.permute.xlu0 %3862
  %v3881 = vunpack.c.l.b16 %v3753
  %v3882 = vunpack.c.l.b16 %v3754
  %v3883 = vunpack.c.l.b16 %v3755
  %v3884 = vunpack.c.l.b16 %v3756
  %v3885 = vunpack.c.l.b16 %v3757
  %v3886 = vunpack.c.l.b16 %v3758
  %v3887 = vunpack.c.l.b16 %v3759
  %v3888 = vunpack.c.l.b16 %v3760
  %v3889 = vunpack.c.l.b16 %v3761
  %v3890 = vunpack.c.l.b16 %v3762
  %v3891 = vunpack.c.l.b16 %v3763
  %v3892 = vunpack.c.l.b16 %v3764
  %v3893 = vunpack.c.l.b16 %v3765
  %v3894 = vunpack.c.l.b16 %v3766
  %v3895 = vunpack.c.l.b16 %v3767
  %v3896 = vunpack.c.l.b16 %v3768
  %v3897 = vpack.c.b16 %v3882, %v3881
  %v3898 = vpack.c.b16 %v3884, %v3883
  %v3899 = vpack.c.b16 %v3886, %v3885
  %v3900 = vpack.c.b16 %v3888, %v3887
  %v3901 = vpack.c.b16 %v3890, %v3889
  %v3902 = vpack.c.b16 %v3892, %v3891
  %v3903 = vpack.c.b16 %v3894, %v3893
  %v3904 = vpack.c.b16 %v3896, %v3895
  %v3906 = vsel %vm28, %v3897, 0
  %v3909 = vsel %vm28, %v3898, 0
  %v3912 = vsel %vm28, %v3899, 0
  %v3915 = vsel %vm28, %v3900, 0
  %v3918 = vsel %vm28, %v3901, 0
  %v3921 = vsel %vm28, %v3902, 0
  %v3924 = vsel %vm28, %v3903, 0
  %v3927 = vsel %vm28, %v3904, 0
  %3929 = vmatprep.subr.bf16.mxu0 0
  %3930 = vmatpush1.bf16.msra.mxu0 %v298
  %3931 = vmatprep.subr.bf16.mxu0 0
  %3932 = vmatpush1.bf16.msra.mxu0 0
  %3933 = vmatprep.subr.bf16.mxu0 0
  %3934 = vmatpush1.bf16.msra.mxu0 0
  %3935 = vmatprep.subr.bf16.mxu0 0
  %3936 = vmatpush1.bf16.msra.mxu0 0
  %3937 = vmatprep.subr.bf16.mxu0 0
  %3938 = vmatpush1.bf16.msra.mxu0 0
  %3939 = vmatprep.subr.bf16.mxu0 0
  %3940 = vmatpush1.bf16.msra.mxu0 0
  %3941 = vmatprep.subr.bf16.mxu0 0
  %3942 = vmatpush1.bf16.msra.mxu0 0
  %3943 = vmatprep.subr.bf16.mxu0 0
  %3944 = vmatpush1.bf16.msra.mxu0 0
  %3945 = vmatprep.subr.bf16.mxu0 0
  %3946 = vmatpush1.bf16.msra.mxu0 0
  %3947 = vmatprep.subr.bf16.mxu0 0
  %3948 = vmatpush1.bf16.msra.mxu0 0
  %3949 = vmatprep.subr.bf16.mxu0 0
  %3950 = vmatpush1.bf16.msra.mxu0 0
  %3951 = vmatprep.subr.bf16.mxu0 0
  %3952 = vmatpush1.bf16.msra.mxu0 0
  %3953 = vmatprep.subr.bf16.mxu0 0
  %3954 = vmatpush1.bf16.msra.mxu0 0
  %3955 = vmatprep.subr.bf16.mxu0 0
  %3956 = vmatpush1.bf16.msra.mxu0 0
  %3957 = vmatprep.subr.bf16.mxu0 0
  %3958 = vmatpush1.bf16.msra.mxu0 0
  %3959 = vmatprep.subr.bf16.mxu0 0
  %3960 = vmatpush1.bf16.msra.mxu0 0
  %3961 = vmatprep.mubr.bf16.mxu0 0
  %3962 = vmatmul.mubr.bf16.gmra.mrb[0].mxu0 %v3906
  %v3963 = vpop.f32.mrb[0].mxu0
  %v3964 = vadd.f32 %v3788, %v3963
  %v3965 = vpop.f32.mrb[0].mxu0
  %v3966 = vpop.f32.mrb[0].mxu0
  %v3967 = vadd.f32 %v3793, %v3966
  %v3968 = vpop.f32.mrb[0].mxu0
  %3969 = vmatprep.mubr.bf16.mxu0 0
  %3970 = vmatmul.mubr.bf16.gmra.mrb[0].mxu0 %v3909
  %v3971 = vpop.f32.mrb[0].mxu0
  %v3972 = vadd.f32 %v3798, %v3971
  %v3973 = vpop.f32.mrb[0].mxu0
  %v3974 = vpop.f32.mrb[0].mxu0
  %v3975 = vadd.f32 %v3803, %v3974
  %v3976 = vpop.f32.mrb[0].mxu0
  %3977 = vmatprep.mubr.bf16.mxu0 0
  %3978 = vmatmul.mubr.bf16.gmra.mrb[0].mxu0 %v3912
  %v3979 = vpop.f32.mrb[0].mxu0
  %v3980 = vadd.f32 %v3808, %v3979
  %v3981 = vpop.f32.mrb[0].mxu0
  %v3982 = vpop.f32.mrb[0].mxu0
  %v3983 = vadd.f32 %v3813, %v3982
  %v3984 = vpop.f32.mrb[0].mxu0
  %3985 = vmatprep.mubr.bf16.mxu0 0
  %3986 = vmatmul.mubr.bf16.gmra.mrb[0].mxu0 %v3915
  %v3987 = vpop.f32.mrb[0].mxu0
  %v3988 = vadd.f32 %v3818, %v3987
  %v3989 = vpop.f32.mrb[0].mxu0
  %v3990 = vpop.f32.mrb[0].mxu0
  %v3991 = vadd.f32 %v3823, %v3990
  %v3992 = vpop.f32.mrb[0].mxu0
  %3993 = vmatprep.mubr.bf16.mxu0 0
  %3994 = vmatmul.mubr.bf16.gmra.mrb[0].mxu0 %v3918
  %v3995 = vpop.f32.mrb[0].mxu0
  %v3996 = vadd.f32 %v3828, %v3995
  %v3997 = vpop.f32.mrb[0].mxu0
  %v3998 = vpop.f32.mrb[0].mxu0
  %v3999 = vadd.f32 %v3833, %v3998
  %v4000 = vpop.f32.mrb[0].mxu0
  %4001 = vmatprep.mubr.bf16.mxu0 0
  %4002 = vmatmul.mubr.bf16.gmra.mrb[0].mxu0 %v3921
  %v4003 = vpop.f32.mrb[0].mxu0
  %v4004 = vadd.f32 %v3838, %v4003
  %v4005 = vpop.f32.mrb[0].mxu0
  %v4006 = vpop.f32.mrb[0].mxu0
  %v4007 = vadd.f32 %v3843, %v4006
  %v4008 = vpop.f32.mrb[0].mxu0
  %4009 = vmatprep.mubr.bf16.mxu0 0
  %4010 = vmatmul.mubr.bf16.gmra.mrb[0].mxu0 %v3924
  %v4011 = vpop.f32.mrb[0].mxu0
  %v4012 = vadd.f32 %v3848, %v4011
  %v4013 = vpop.f32.mrb[0].mxu0
  %v4014 = vpop.f32.mrb[0].mxu0
  %v4015 = vadd.f32 %v3853, %v4014
  %v4016 = vpop.f32.mrb[0].mxu0
  %4017 = vmatprep.mubr.bf16.mxu0 0
  %4018 = vmatmul.mubr.bf16.gmra.mrb[0].mxu0 %v3927
  %v4019 = vpop.f32.mrb[0].mxu0
  %v4020 = vadd.f32 %v3858, %v4019
  %v4021 = vpop.f32.mrb[0].mxu0
  %v4022 = vpop.f32.mrb[0].mxu0
  %v4023 = vadd.f32 %v3863, %v4022
  %v4024 = vpop.f32.mrb[0].mxu0
  %4025 = vdwg.mxu0
  %v4026 = vld [vmem:[%s3 + $0x310] sm:$0xf]
  %v4027 = vld [vmem:[%s3 + $0x314] sm:$0xf]
  %v4028 = vld [vmem:[%s3 + $0x318] sm:$0xf]
  %v4029 = vld [vmem:[%s3 + $0x31c] sm:$0xf]
  %v4030 = vpack.c.bf16 %v3660, %v3660
  %v4031 = vld [vmem:[%s4 + $0x220] sm:$0xff]
  %v4032 = vld [vmem:[%s4 + $0x228] sm:$0xff]
  %v4033 = vld [vmem:[%s4 + $0x230] sm:$0xff]
  %v4034 = vld [vmem:[%s4 + $0x238] sm:$0xff]
  %4036 = vset.pattern.permute.xlu0 0
  %4037 = vperm.xlu0 %4036, %v4031
  %v4038 = vpop.permute.xlu0 %4037
  %4041 = vset.pattern.permute.xlu0 0
  %4042 = vperm.xlu0 %4041, %v4032
  %v4043 = vpop.permute.xlu0 %4042
  %4046 = vset.pattern.permute.xlu0 0
  %4047 = vperm.xlu0 %4046, %v4033
  %v4048 = vpop.permute.xlu0 %4047
  %4051 = vset.pattern.permute.xlu0 0
  %4052 = vperm.xlu0 %4051, %v4034
  %v4053 = vpop.permute.xlu0 %4052
  %v4059 = vunpack.c.l.b16 %v4026
  %v4060 = vunpack.c.l.b16 %v4027
  %v4061 = vunpack.c.l.b16 %v4028
  %v4062 = vunpack.c.l.b16 %v4029
  %v4063 = vpack.c.b16 %v4060, %v4059
  %v4064 = vpack.c.b16 %v4062, %v4061
  %vm4065 = vcmask 23552
  %v4067 = vsel %vm4065, %v4063, 0
  %v4070 = vsel %vm4065, %v4064, 0
  %v4072 = vsel %vm2246, 4294967295, 65535
  %v4073 = vsel %vm443, %v4072, 0
  %v4075 = vand.u32 %v4030, %v4073
  %4077 = vmatprep.subr.bf16.mxu0 0
  %4078 = vmatpush1.bf16.msra.mxu0 %v4075
  %4079 = vmatprep.subr.bf16.mxu0 0
  %4080 = vmatpush1.bf16.msra.mxu0 0
  %4081 = vmatprep.subr.bf16.mxu0 0
  %4082 = vmatpush1.bf16.msra.mxu0 0
  %4083 = vmatprep.subr.bf16.mxu0 0
  %4084 = vmatpush1.bf16.msra.mxu0 0
  %4085 = vmatprep.subr.bf16.mxu0 0
  %4086 = vmatpush1.bf16.msra.mxu0 0
  %4087 = vmatprep.subr.bf16.mxu0 0
  %4088 = vmatpush1.bf16.msra.mxu0 0
  %4089 = vmatprep.subr.bf16.mxu0 0
  %4090 = vmatpush1.bf16.msra.mxu0 0
  %4091 = vmatprep.subr.bf16.mxu0 0
  %4092 = vmatpush1.bf16.msra.mxu0 0
  %4093 = vmatprep.subr.bf16.mxu0 0
  %4094 = vmatpush1.bf16.msra.mxu0 0
  %4095 = vmatprep.subr.bf16.mxu0 0
  %4096 = vmatpush1.bf16.msra.mxu0 0
  %4097 = vmatprep.subr.bf16.mxu0 0
  %4098 = vmatpush1.bf16.msra.mxu0 0
  %4099 = vmatprep.subr.bf16.mxu0 0
  %4100 = vmatpush1.bf16.msra.mxu0 0
  %4101 = vmatprep.subr.bf16.mxu0 0
  %4102 = vmatpush1.bf16.msra.mxu0 0
  %4103 = vmatprep.subr.bf16.mxu0 0
  %4104 = vmatpush1.bf16.msra.mxu0 0
  %4105 = vmatprep.subr.bf16.mxu0 0
  %4106 = vmatpush1.bf16.msra.mxu0 0
  %4107 = vmatprep.subr.bf16.mxu0 0
  %4108 = vmatpush1.bf16.msra.mxu0 0
  %4109 = vmatprep.mubr.bf16.mxu0 0
  %4110 = vmatmul.mubr.bf16.gmra.mrb[0].mxu0 %v4067
  %v4111 = vpop.f32.mrb[0].mxu0
  %v4112 = vadd.f32 %v4038, %v4111
  %v4113 = vpop.f32.mrb[0].mxu0
  %v4114 = vpop.f32.mrb[0].mxu0
  %v4115 = vadd.f32 %v4043, %v4114
  %v4116 = vpop.f32.mrb[0].mxu0
  %4117 = vmatprep.mubr.bf16.mxu0 0
  %4118 = vmatmul.mubr.bf16.gmra.mrb[0].mxu0 %v4070
  %v4119 = vpop.f32.mrb[0].mxu0
  %v4120 = vadd.f32 %v4048, %v4119
  %v4121 = vpop.f32.mrb[0].mxu0
  %v4122 = vpop.f32.mrb[0].mxu0
  %v4123 = vadd.f32 %v4053, %v4122
  %v4124 = vpop.f32.mrb[0].mxu0
  %4125 = vdwg.mxu0
  %v4126 = vmul.f32 %v4112, %v500
  %v4127 = vmul.f32 %v4115, %v500
  %v4128 = vmul.f32 %v4120, %v500
  %v4129 = vmul.f32 %v4123, %v500
  %4130 = vrot.lane.b32.xlu0 %v4126, 1
  %v4131 = vpop.permute.xlu0 %4130
  %4132 = vrot.lane.b32.xlu0 %v4127, 1
  %v4133 = vpop.permute.xlu0 %4132
  %4134 = vrot.lane.b32.xlu0 %v4128, 1
  %v4135 = vpop.permute.xlu0 %4134
  %4136 = vrot.lane.b32.xlu0 %v4129, 1
  %v4137 = vpop.permute.xlu0 %4136
  %v4138 = vld [vmem:[%s3 + $0x360] sm:$0xf]
  %v4139 = vld [vmem:[%s3 + $0x364] sm:$0xf]
  %v4140 = vld [vmem:[%s3 + $0x368] sm:$0xf]
  %v4141 = vld [vmem:[%s3 + $0x36c] sm:$0xf]
  %v4142 = vld [vmem:[%s3 + $0x370] sm:$0xf]
  %v4143 = vld [vmem:[%s3 + $0x374] sm:$0xf]
  %v4144 = vld [vmem:[%s3 + $0x378] sm:$0xf]
  %v4145 = vld [vmem:[%s3 + $0x37c] sm:$0xf]
  %v4146 = vpack.c.bf16 %v4133, %v4131
  %v4147 = vpack.c.bf16 %v4137, %v4135
  %v4156 = vunpack.c.l.b16 %v4138
  %v4157 = vunpack.c.l.b16 %v4139
  %v4158 = vunpack.c.l.b16 %v4140
  %v4159 = vunpack.c.l.b16 %v4141
  %v4160 = vunpack.c.l.b16 %v4142
  %v4161 = vunpack.c.l.b16 %v4143
  %v4162 = vunpack.c.l.b16 %v4144
  %v4163 = vunpack.c.l.b16 %v4145
  %v4164 = vpack.c.b16 %v4157, %v4156
  %v4165 = vpack.c.b16 %v4159, %v4158
  %v4166 = vpack.c.b16 %v4161, %v4160
  %v4167 = vpack.c.b16 %v4163, %v4162
  %v4169 = vsel %vm544, %v4164, 0
  %v4172 = vsel %vm544, %v4165, 0
  %v4175 = vsel %vm544, %v4166, 0
  %v4178 = vsel %vm544, %v4167, 0
  %4180 = vmatprep.subr.bf16.mxu0 0
  %4181 = vmatpush1.bf16.msra.mxu0 %v4146
  %4182 = vmatprep.subr.bf16.mxu0 0
  %4183 = vmatpush1.bf16.msra.mxu0 %v4147
  %4184 = vmatprep.subr.bf16.mxu0 0
  %4185 = vmatpush1.bf16.msra.mxu0 0
  %4186 = vmatprep.subr.bf16.mxu0 0
  %4187 = vmatpush1.bf16.msra.mxu0 0
  %4188 = vmatprep.subr.bf16.mxu0 0
  %4189 = vmatpush1.bf16.msra.mxu0 0
  %4190 = vmatprep.subr.bf16.mxu0 0
  %4191 = vmatpush1.bf16.msra.mxu0 0
  %4192 = vmatprep.subr.bf16.mxu0 0
  %4193 = vmatpush1.bf16.msra.mxu0 0
  %4194 = vmatprep.subr.bf16.mxu0 0
  %4195 = vmatpush1.bf16.msra.mxu0 0
  %4196 = vmatprep.subr.bf16.mxu0 0
  %4197 = vmatpush1.bf16.msra.mxu0 0
  %4198 = vmatprep.subr.bf16.mxu0 0
  %4199 = vmatpush1.bf16.msra.mxu0 0
  %4200 = vmatprep.subr.bf16.mxu0 0
  %4201 = vmatpush1.bf16.msra.mxu0 0
  %4202 = vmatprep.subr.bf16.mxu0 0
  %4203 = vmatpush1.bf16.msra.mxu0 0
  %4204 = vmatprep.subr.bf16.mxu0 0
  %4205 = vmatpush1.bf16.msra.mxu0 0
  %4206 = vmatprep.subr.bf16.mxu0 0
  %4207 = vmatpush1.bf16.msra.mxu0 0
  %4208 = vmatprep.subr.bf16.mxu0 0
  %4209 = vmatpush1.bf16.msra.mxu0 0
  %4210 = vmatprep.subr.bf16.mxu0 0
  %4211 = vmatpush1.bf16.msra.mxu0 0
  %4212 = vmatprep.mubr.bf16.mxu0 0
  %4213 = vmatmul.mubr.bf16.gmra.mrb[0].mxu0 %v4169
  %v4214 = vpop.f32.mrb[0].mxu0
  %v4215 = vadd.f32 0.0, %v4214
  %v4216 = vpop.f32.mrb[0].mxu0
  %v4217 = vpop.f32.mrb[0].mxu0
  %v4218 = vadd.f32 0.0, %v4217
  %v4219 = vpop.f32.mrb[0].mxu0
  %4220 = vmatprep.mubr.bf16.mxu0 0
  %4221 = vmatmul.mubr.bf16.gmra.mrb[0].mxu0 %v4172
  %v4222 = vpop.f32.mrb[0].mxu0
  %v4223 = vadd.f32 0.0, %v4222
  %v4224 = vpop.f32.mrb[0].mxu0
  %v4225 = vpop.f32.mrb[0].mxu0
  %v4226 = vadd.f32 0.0, %v4225
  %v4227 = vpop.f32.mrb[0].mxu0
  %4228 = vmatprep.mubr.bf16.mxu0 0
  %4229 = vmatmul.mubr.bf16.gmra.mrb[0].mxu0 %v4175
  %v4230 = vpop.f32.mrb[0].mxu0
  %v4231 = vadd.f32 0.0, %v4230
  %v4232 = vpop.f32.mrb[0].mxu0
  %v4233 = vpop.f32.mrb[0].mxu0
  %v4234 = vadd.f32 0.0, %v4233
  %v4235 = vpop.f32.mrb[0].mxu0
  %4236 = vmatprep.mubr.bf16.mxu0 0
  %4237 = vmatmul.mubr.bf16.gmra.mrb[0].mxu0 %v4178
  %v4238 = vpop.f32.mrb[0].mxu0
  %v4239 = vadd.f32 0.0, %v4238
  %v4240 = vpop.f32.mrb[0].mxu0
  %v4241 = vpop.f32.mrb[0].mxu0
  %v4242 = vadd.f32 0.0, %v4241
  %v4243 = vpop.f32.mrb[0].mxu0
  %4244 = vdwg.mxu0
  %v4245 = vadd.f32 %v3964, %v4215
  %v4246 = vadd.f32 %v3967, %v4218
  %v4247 = vadd.f32 %v3972, %v4223
  %v4248 = vadd.f32 %v3975, %v4226
  %v4249 = vadd.f32 %v3980, %v4231
  %v4250 = vadd.f32 %v3983, %v4234
  %v4251 = vadd.f32 %v3988, %v4239
  %v4252 = vadd.f32 %v3991, %v4242
  %v4253 = vld [vmem:[%s3 + $0x380] sm:$0xf]
  %v4254 = vld [vmem:[%s3 + $0x384] sm:$0xf]
  %v4255 = vld [vmem:[%s3 + $0x388] sm:$0xf]
  %v4256 = vld [vmem:[%s3 + $0x38c] sm:$0xf]
  %v4257 = vld [vmem:[%s3 + $0x390] sm:$0xf]
  %v4258 = vld [vmem:[%s3 + $0x394] sm:$0xf]
  %v4259 = vld [vmem:[%s3 + $0x398] sm:$0xf]
  %v4260 = vld [vmem:[%s3 + $0x39c] sm:$0xf]
  %v4261 = vpack.c.bf16 %v4127, %v4126
  %v4262 = vpack.c.bf16 %v4129, %v4128
  %v4271 = vunpack.c.l.b16 %v4253
  %v4272 = vunpack.c.l.b16 %v4254
  %v4273 = vunpack.c.l.b16 %v4255
  %v4274 = vunpack.c.l.b16 %v4256
  %v4275 = vunpack.c.l.b16 %v4257
  %v4276 = vunpack.c.l.b16 %v4258
  %v4277 = vunpack.c.l.b16 %v4259
  %v4278 = vunpack.c.l.b16 %v4260
  %v4279 = vpack.c.b16 %v4272, %v4271
  %v4280 = vpack.c.b16 %v4274, %v4273
  %v4281 = vpack.c.b16 %v4276, %v4275
  %v4282 = vpack.c.b16 %v4278, %v4277
  %v4284 = vsel %vm544, %v4279, 0
  %v4287 = vsel %vm544, %v4280, 0
  %v4290 = vsel %vm544, %v4281, 0
  %v4293 = vsel %vm544, %v4282, 0
  %4295 = vmatprep.subr.bf16.mxu0 0
  %4296 = vmatpush1.bf16.msra.mxu0 %v4261
  %4297 = vmatprep.subr.bf16.mxu0 0
  %4298 = vmatpush1.bf16.msra.mxu0 %v4262
  %4299 = vmatprep.subr.bf16.mxu0 0
  %4300 = vmatpush1.bf16.msra.mxu0 0
  %4301 = vmatprep.subr.bf16.mxu0 0
  %4302 = vmatpush1.bf16.msra.mxu0 0
  %4303 = vmatprep.subr.bf16.mxu0 0
  %4304 = vmatpush1.bf16.msra.mxu0 0
  %4305 = vmatprep.subr.bf16.mxu0 0
  %4306 = vmatpush1.bf16.msra.mxu0 0
  %4307 = vmatprep.subr.bf16.mxu0 0
  %4308 = vmatpush1.bf16.msra.mxu0 0
  %4309 = vmatprep.subr.bf16.mxu0 0
  %4310 = vmatpush1.bf16.msra.mxu0 0
  %4311 = vmatprep.subr.bf16.mxu0 0
  %4312 = vmatpush1.bf16.msra.mxu0 0
  %4313 = vmatprep.subr.bf16.mxu0 0
  %4314 = vmatpush1.bf16.msra.mxu0 0
  %4315 = vmatprep.subr.bf16.mxu0 0
  %4316 = vmatpush1.bf16.msra.mxu0 0
  %4317 = vmatprep.subr.bf16.mxu0 0
  %4318 = vmatpush1.bf16.msra.mxu0 0
  %4319 = vmatprep.subr.bf16.mxu0 0
  %4320 = vmatpush1.bf16.msra.mxu0 0
  %4321 = vmatprep.subr.bf16.mxu0 0
  %4322 = vmatpush1.bf16.msra.mxu0 0
  %4323 = vmatprep.subr.bf16.mxu0 0
  %4324 = vmatpush1.bf16.msra.mxu0 0
  %4325 = vmatprep.subr.bf16.mxu0 0
  %4326 = vmatpush1.bf16.msra.mxu0 0
  %4327 = vmatprep.mubr.bf16.mxu0 0
  %4328 = vmatmul.mubr.bf16.gmra.mrb[0].mxu0 %v4284
  %v4329 = vpop.f32.mrb[0].mxu0
  %v4330 = vadd.f32 0.0, %v4329
  %v4331 = vpop.f32.mrb[0].mxu0
  %v4332 = vpop.f32.mrb[0].mxu0
  %v4333 = vadd.f32 0.0, %v4332
  %v4334 = vpop.f32.mrb[0].mxu0
  %4335 = vmatprep.mubr.bf16.mxu0 0
  %4336 = vmatmul.mubr.bf16.gmra.mrb[0].mxu0 %v4287
  %v4337 = vpop.f32.mrb[0].mxu0
  %v4338 = vadd.f32 0.0, %v4337
  %v4339 = vpop.f32.mrb[0].mxu0
  %v4340 = vpop.f32.mrb[0].mxu0
  %v4341 = vadd.f32 0.0, %v4340
  %v4342 = vpop.f32.mrb[0].mxu0
  %4343 = vmatprep.mubr.bf16.mxu0 0
  %4344 = vmatmul.mubr.bf16.gmra.mrb[0].mxu0 %v4290
  %v4345 = vpop.f32.mrb[0].mxu0
  %v4346 = vadd.f32 0.0, %v4345
  %v4347 = vpop.f32.mrb[0].mxu0
  %v4348 = vpop.f32.mrb[0].mxu0
  %v4349 = vadd.f32 0.0, %v4348
  %v4350 = vpop.f32.mrb[0].mxu0
  %4351 = vmatprep.mubr.bf16.mxu0 0
  %4352 = vmatmul.mubr.bf16.gmra.mrb[0].mxu0 %v4293
  %v4353 = vpop.f32.mrb[0].mxu0
  %v4354 = vadd.f32 0.0, %v4353
  %v4355 = vpop.f32.mrb[0].mxu0
  %v4356 = vpop.f32.mrb[0].mxu0
  %v4357 = vadd.f32 0.0, %v4356
  %v4358 = vpop.f32.mrb[0].mxu0
  %4359 = vdwg.mxu0
  %v4360 = vadd.f32 %v4245, %v4330
  %v4361 = vadd.f32 %v4246, %v4333
  %v4362 = vadd.f32 %v4247, %v4338
  %v4363 = vadd.f32 %v4248, %v4341
  %v4364 = vadd.f32 %v4249, %v4346
  %v4365 = vadd.f32 %v4250, %v4349
  %v4366 = vadd.f32 %v4251, %v4354
  %v4367 = vadd.f32 %v4252, %v4357
  %4368 = vrot.lane.b32.xlu0 %v4126, 127
  %v4369 = vpop.permute.xlu0 %4368
  %4370 = vrot.lane.b32.xlu0 %v4127, 127
  %v4371 = vpop.permute.xlu0 %4370
  %4372 = vrot.lane.b32.xlu0 %v4128, 127
  %v4373 = vpop.permute.xlu0 %4372
  %4374 = vrot.lane.b32.xlu0 %v4129, 127
  %v4375 = vpop.permute.xlu0 %4374
  %v4376 = vld [vmem:[%s3 + $0x3a0] sm:$0xf]
  %v4377 = vld [vmem:[%s3 + $0x3a4] sm:$0xf]
  %v4378 = vld [vmem:[%s3 + $0x3a8] sm:$0xf]
  %v4379 = vld [vmem:[%s3 + $0x3ac] sm:$0xf]
  %v4380 = vld [vmem:[%s3 + $0x3b0] sm:$0xf]
  %v4381 = vld [vmem:[%s3 + $0x3b4] sm:$0xf]
  %v4382 = vld [vmem:[%s3 + $0x3b8] sm:$0xf]
  %v4383 = vld [vmem:[%s3 + $0x3bc] sm:$0xf]
  %v4384 = vpack.c.bf16 %v4371, %v4369
  %v4385 = vpack.c.bf16 %v4375, %v4373
  %v4394 = vunpack.c.l.b16 %v4376
  %v4395 = vunpack.c.l.b16 %v4377
  %v4396 = vunpack.c.l.b16 %v4378
  %v4397 = vunpack.c.l.b16 %v4379
  %v4398 = vunpack.c.l.b16 %v4380
  %v4399 = vunpack.c.l.b16 %v4381
  %v4400 = vunpack.c.l.b16 %v4382
  %v4401 = vunpack.c.l.b16 %v4383
  %v4402 = vpack.c.b16 %v4395, %v4394
  %v4403 = vpack.c.b16 %v4397, %v4396
  %v4404 = vpack.c.b16 %v4399, %v4398
  %v4405 = vpack.c.b16 %v4401, %v4400
  %v4407 = vsel %vm544, %v4402, 0
  %v4410 = vsel %vm544, %v4403, 0
  %v4413 = vsel %vm544, %v4404, 0
  %v4416 = vsel %vm544, %v4405, 0
  %4418 = vmatprep.subr.bf16.mxu0 0
  %4419 = vmatpush1.bf16.msra.mxu0 %v4384
  %4420 = vmatprep.subr.bf16.mxu0 0
  %4421 = vmatpush1.bf16.msra.mxu0 %v4385
  %4422 = vmatprep.subr.bf16.mxu0 0
  %4423 = vmatpush1.bf16.msra.mxu0 0
  %4424 = vmatprep.subr.bf16.mxu0 0
  %4425 = vmatpush1.bf16.msra.mxu0 0
  %4426 = vmatprep.subr.bf16.mxu0 0
  %4427 = vmatpush1.bf16.msra.mxu0 0
  %4428 = vmatprep.subr.bf16.mxu0 0
  %4429 = vmatpush1.bf16.msra.mxu0 0
  %4430 = vmatprep.subr.bf16.mxu0 0
  %4431 = vmatpush1.bf16.msra.mxu0 0
  %4432 = vmatprep.subr.bf16.mxu0 0
  %4433 = vmatpush1.bf16.msra.mxu0 0
  %4434 = vmatprep.subr.bf16.mxu0 0
  %4435 = vmatpush1.bf16.msra.mxu0 0
  %4436 = vmatprep.subr.bf16.mxu0 0
  %4437 = vmatpush1.bf16.msra.mxu0 0
  %4438 = vmatprep.subr.bf16.mxu0 0
  %4439 = vmatpush1.bf16.msra.mxu0 0
  %4440 = vmatprep.subr.bf16.mxu0 0
  %4441 = vmatpush1.bf16.msra.mxu0 0
  %4442 = vmatprep.subr.bf16.mxu0 0
  %4443 = vmatpush1.bf16.msra.mxu0 0
  %4444 = vmatprep.subr.bf16.mxu0 0
  %4445 = vmatpush1.bf16.msra.mxu0 0
  %4446 = vmatprep.subr.bf16.mxu0 0
  %4447 = vmatpush1.bf16.msra.mxu0 0
  %4448 = vmatprep.subr.bf16.mxu0 0
  %4449 = vmatpush1.bf16.msra.mxu0 0
  %4450 = vmatprep.mubr.bf16.mxu0 0
  %4451 = vmatmul.mubr.bf16.gmra.mrb[0].mxu0 %v4407
  %v4452 = vpop.f32.mrb[0].mxu0
  %v4453 = vadd.f32 0.0, %v4452
  %v4454 = vpop.f32.mrb[0].mxu0
  %v4455 = vpop.f32.mrb[0].mxu0
  %v4456 = vadd.f32 0.0, %v4455
  %v4457 = vpop.f32.mrb[0].mxu0
  %4458 = vmatprep.mubr.bf16.mxu0 0
  %4459 = vmatmul.mubr.bf16.gmra.mrb[0].mxu0 %v4410
  %v4460 = vpop.f32.mrb[0].mxu0
  %v4461 = vadd.f32 0.0, %v4460
  %v4462 = vpop.f32.mrb[0].mxu0
  %v4463 = vpop.f32.mrb[0].mxu0
  %v4464 = vadd.f32 0.0, %v4463
  %v4465 = vpop.f32.mrb[0].mxu0
  %4466 = vmatprep.mubr.bf16.mxu0 0
  %4467 = vmatmul.mubr.bf16.gmra.mrb[0].mxu0 %v4413
  %v4468 = vpop.f32.mrb[0].mxu0
  %v4469 = vadd.f32 0.0, %v4468
  %v4470 = vpop.f32.mrb[0].mxu0
  %v4471 = vpop.f32.mrb[0].mxu0
  %v4472 = vadd.f32 0.0, %v4471
  %v4473 = vpop.f32.mrb[0].mxu0
  %4474 = vmatprep.mubr.bf16.mxu0 0
  %4475 = vmatmul.mubr.bf16.gmra.mrb[0].mxu0 %v4416
  %v4476 = vpop.f32.mrb[0].mxu0
  %v4477 = vadd.f32 0.0, %v4476
  %v4478 = vpop.f32.mrb[0].mxu0
  %v4479 = vpop.f32.mrb[0].mxu0
  %v4480 = vadd.f32 0.0, %v4479
  %v4481 = vpop.f32.mrb[0].mxu0
  %4482 = vdwg.mxu0
  %v4483 = vadd.f32 %v4360, %v4453
  %v4484 = vadd.f32 %v4361, %v4456
  %v4485 = vadd.f32 %v4362, %v4461
  %v4486 = vadd.f32 %v4363, %v4464
  %v4487 = vadd.f32 %v4364, %v4469
  %v4488 = vadd.f32 %v4365, %v4472
  %v4489 = vadd.f32 %v4366, %v4477
  %v4490 = vadd.f32 %v4367, %v4480
  %v4491 = vtanh.pop %v4483
  %v4492 = vtanh.pop %v4484
  %v4493 = vtanh.pop %v4485
  %v4494 = vtanh.pop %v4486
  %v4495 = vxor.u32 %v4487, 2147483648
  %v4496 = vxor.u32 %v4488, 2147483648
  %v4497 = vxor.u32 %v4489, 2147483648
  %v4498 = vxor.u32 %v4490, 2147483648
  %v4499 = vmul.f32 %v4495, 1.442695
  %v4500 = vpow.pop %v4499
  %v4501 = vmul.f32 %v4496, 1.442695
  %v4502 = vpow.pop %v4501
  %v4503 = vmul.f32 %v4497, 1.442695
  %v4504 = vpow.pop %v4503
  %v4505 = vmul.f32 %v4498, 1.442695
  %v4506 = vpow.pop %v4505
  %v4507 = vadd.f32 %v4500, 1.0
  %v4508 = vadd.f32 %v4502, 1.0
  %v4509 = vadd.f32 %v4504, 1.0
  %v4510 = vadd.f32 %v4506, 1.0
  %v4511 = vrcp.pop %v4507
  %v4512 = vmul.f32 1.0, %v4511
  %v4513 = vrcp.pop %v4508
  %v4514 = vmul.f32 1.0, %v4513
  %v4515 = vrcp.pop %v4509
  %v4516 = vmul.f32 1.0, %v4515
  %v4517 = vrcp.pop %v4510
  %v4518 = vmul.f32 1.0, %v4517
  %v4519 = vmul.f32 %v4491, %v4512
  %v4520 = vmul.f32 %v4492, %v4514
  %v4521 = vmul.f32 %v4493, %v4516
  %v4522 = vmul.f32 %v4494, %v4518
  %v4523 = vld [vmem:[%s3 + $0x3c0] sm:$0xf]
  %v4524 = vld [vmem:[%s3 + $0x3c4] sm:$0xf]
  %v4525 = vld [vmem:[%s3 + $0x3c8] sm:$0xf]
  %v4526 = vld [vmem:[%s3 + $0x3cc] sm:$0xf]
  %v4527 = vld [vmem:[%s3 + $0x3d0] sm:$0xf]
  %v4528 = vld [vmem:[%s3 + $0x3d4] sm:$0xf]
  %v4529 = vld [vmem:[%s3 + $0x3d8] sm:$0xf]
  %v4530 = vld [vmem:[%s3 + $0x3dc] sm:$0xf]
  %v4531 = vpack.c.bf16 %v4520, %v4519
  %v4532 = vpack.c.bf16 %v4522, %v4521
  %v4533 = vld [vmem:[%s4 + $0x2c0] sm:$0xff]
  %v4534 = vld [vmem:[%s4 + $0x2c8] sm:$0xff]
  %v4535 = vld [vmem:[%s4 + $0x2d0] sm:$0xff]
  %v4536 = vld [vmem:[%s4 + $0x2d8] sm:$0xff]
  %v4537 = vld [vmem:[%s4 + $0x2e0] sm:$0xff]
  %v4538 = vld [vmem:[%s4 + $0x2e8] sm:$0xff]
  %v4539 = vld [vmem:[%s4 + $0x2f0] sm:$0xff]
  %v4540 = vld [vmem:[%s4 + $0x2f8] sm:$0xff]
  %4542 = vset.pattern.permute.xlu0 0
  %4543 = vperm.xlu0 %4542, %v4533
  %v4544 = vpop.permute.xlu0 %4543
  %4547 = vset.pattern.permute.xlu0 0
  %4548 = vperm.xlu0 %4547, %v4534
  %v4549 = vpop.permute.xlu0 %4548
  %4552 = vset.pattern.permute.xlu0 0
  %4553 = vperm.xlu0 %4552, %v4535
  %v4554 = vpop.permute.xlu0 %4553
  %4557 = vset.pattern.permute.xlu0 0
  %4558 = vperm.xlu0 %4557, %v4536
  %v4559 = vpop.permute.xlu0 %4558
  %4562 = vset.pattern.permute.xlu0 0
  %4563 = vperm.xlu0 %4562, %v4537
  %v4564 = vpop.permute.xlu0 %4563
  %4567 = vset.pattern.permute.xlu0 0
  %4568 = vperm.xlu0 %4567, %v4538
  %v4569 = vpop.permute.xlu0 %4568
  %4572 = vset.pattern.permute.xlu0 0
  %4573 = vperm.xlu0 %4572, %v4539
  %v4574 = vpop.permute.xlu0 %4573
  %4577 = vset.pattern.permute.xlu0 0
  %4578 = vperm.xlu0 %4577, %v4540
  %v4579 = vpop.permute.xlu0 %4578
  %v4589 = vunpack.c.l.b16 %v4523
  %v4590 = vunpack.c.l.b16 %v4524
  %v4591 = vunpack.c.l.b16 %v4525
  %v4592 = vunpack.c.l.b16 %v4526
  %v4593 = vunpack.c.l.b16 %v4527
  %v4594 = vunpack.c.l.b16 %v4528
  %v4595 = vunpack.c.l.b16 %v4529
  %v4596 = vunpack.c.l.b16 %v4530
  %v4597 = vpack.c.b16 %v4590, %v4589
  %v4598 = vpack.c.b16 %v4592, %v4591
  %v4599 = vpack.c.b16 %v4594, %v4593
  %v4600 = vpack.c.b16 %v4596, %v4595
  %v4602 = vsel %vm544, %v4597, 0
  %v4605 = vsel %vm544, %v4598, 0
  %v4608 = vsel %vm544, %v4599, 0
  %v4611 = vsel %vm544, %v4600, 0
  %4613 = vmatprep.subr.bf16.mxu0 0
  %4614 = vmatpush1.bf16.msra.mxu0 %v4531
  %4615 = vmatprep.subr.bf16.mxu0 0
  %4616 = vmatpush1.bf16.msra.mxu0 %v4532
  %4617 = vmatprep.subr.bf16.mxu0 0
  %4618 = vmatpush1.bf16.msra.mxu0 0
  %4619 = vmatprep.subr.bf16.mxu0 0
  %4620 = vmatpush1.bf16.msra.mxu0 0
  %4621 = vmatprep.subr.bf16.mxu0 0
  %4622 = vmatpush1.bf16.msra.mxu0 0
  %4623 = vmatprep.subr.bf16.mxu0 0
  %4624 = vmatpush1.bf16.msra.mxu0 0
  %4625 = vmatprep.subr.bf16.mxu0 0
  %4626 = vmatpush1.bf16.msra.mxu0 0
  %4627 = vmatprep.subr.bf16.mxu0 0
  %4628 = vmatpush1.bf16.msra.mxu0 0
  %4629 = vmatprep.subr.bf16.mxu0 0
  %4630 = vmatpush1.bf16.msra.mxu0 0
  %4631 = vmatprep.subr.bf16.mxu0 0
  %4632 = vmatpush1.bf16.msra.mxu0 0
  %4633 = vmatprep.subr.bf16.mxu0 0
  %4634 = vmatpush1.bf16.msra.mxu0 0
  %4635 = vmatprep.subr.bf16.mxu0 0
  %4636 = vmatpush1.bf16.msra.mxu0 0
  %4637 = vmatprep.subr.bf16.mxu0 0
  %4638 = vmatpush1.bf16.msra.mxu0 0
  %4639 = vmatprep.subr.bf16.mxu0 0
  %4640 = vmatpush1.bf16.msra.mxu0 0
  %4641 = vmatprep.subr.bf16.mxu0 0
  %4642 = vmatpush1.bf16.msra.mxu0 0
  %4643 = vmatprep.subr.bf16.mxu0 0
  %4644 = vmatpush1.bf16.msra.mxu0 0
  %4645 = vmatprep.mubr.bf16.mxu0 0
  %4646 = vmatmul.mubr.bf16.gmra.mrb[0].mxu0 %v4602
  %v4647 = vpop.f32.mrb[0].mxu0
  %v4648 = vadd.f32 %v4544, %v4647
  %v4649 = vpop.f32.mrb[0].mxu0
  %v4650 = vpop.f32.mrb[0].mxu0
  %v4651 = vadd.f32 %v4549, %v4650
  %v4652 = vpop.f32.mrb[0].mxu0
  %4653 = vmatprep.mubr.bf16.mxu0 0
  %4654 = vmatmul.mubr.bf16.gmra.mrb[0].mxu0 %v4605
  %v4655 = vpop.f32.mrb[0].mxu0
  %v4656 = vadd.f32 %v4554, %v4655
  %v4657 = vpop.f32.mrb[0].mxu0
  %v4658 = vpop.f32.mrb[0].mxu0
  %v4659 = vadd.f32 %v4559, %v4658
  %v4660 = vpop.f32.mrb[0].mxu0
  %4661 = vmatprep.mubr.bf16.mxu0 0
  %4662 = vmatmul.mubr.bf16.gmra.mrb[0].mxu0 %v4608
  %v4663 = vpop.f32.mrb[0].mxu0
  %v4664 = vadd.f32 %v4564, %v4663
  %v4665 = vpop.f32.mrb[0].mxu0
  %v4666 = vpop.f32.mrb[0].mxu0
  %v4667 = vadd.f32 %v4569, %v4666
  %v4668 = vpop.f32.mrb[0].mxu0
  %4669 = vmatprep.mubr.bf16.mxu0 0
  %4670 = vmatmul.mubr.bf16.gmra.mrb[0].mxu0 %v4611
  %v4671 = vpop.f32.mrb[0].mxu0
  %v4672 = vadd.f32 %v4574, %v4671
  %v4673 = vpop.f32.mrb[0].mxu0
  %v4674 = vpop.f32.mrb[0].mxu0
  %v4675 = vadd.f32 %v4579, %v4674
  %v4676 = vpop.f32.mrb[0].mxu0
  %4677 = vdwg.mxu0
  %v4678 = vadd.f32 %v4112, %v4648
  %v4679 = vadd.f32 %v4115, %v4651
  %v4680 = vadd.f32 %v4120, %v4656
  %v4681 = vadd.f32 %v4123, %v4659
  %v4682 = vmul.f32 %v4678, %v500
  %v4683 = vmul.f32 %v4679, %v500
  %v4684 = vmul.f32 %v4680, %v500
  %v4685 = vmul.f32 %v4681, %v500
  %4686 = vrot.lane.b32.xlu0 %v4682, 2
  %v4687 = vpop.permute.xlu0 %4686
  %4688 = vrot.lane.b32.xlu0 %v4683, 2
  %v4689 = vpop.permute.xlu0 %4688
  %4690 = vrot.lane.b32.xlu0 %v4684, 2
  %v4691 = vpop.permute.xlu0 %4690
  %4692 = vrot.lane.b32.xlu0 %v4685, 2
  %v4693 = vpop.permute.xlu0 %4692
  %v4694 = vld [vmem:[%s3 + $0x3e0] sm:$0xf]
  %v4695 = vld [vmem:[%s3 + $0x3e4] sm:$0xf]
  %v4696 = vld [vmem:[%s3 + $0x3e8] sm:$0xf]
  %v4697 = vld [vmem:[%s3 + $0x3ec] sm:$0xf]
  %v4698 = vld [vmem:[%s3 + $0x3f0] sm:$0xf]
  %v4699 = vld [vmem:[%s3 + $0x3f4] sm:$0xf]
  %v4700 = vld [vmem:[%s3 + $0x3f8] sm:$0xf]
  %v4701 = vld [vmem:[%s3 + $0x3fc] sm:$0xf]
  %v4702 = vpack.c.bf16 %v4689, %v4687
  %v4703 = vpack.c.bf16 %v4693, %v4691
  %v4712 = vunpack.c.l.b16 %v4694
  %v4713 = vunpack.c.l.b16 %v4695
  %v4714 = vunpack.c.l.b16 %v4696
  %v4715 = vunpack.c.l.b16 %v4697
  %v4716 = vunpack.c.l.b16 %v4698
  %v4717 = vunpack.c.l.b16 %v4699
  %v4718 = vunpack.c.l.b16 %v4700
  %v4719 = vunpack.c.l.b16 %v4701
  %v4720 = vpack.c.b16 %v4713, %v4712
  %v4721 = vpack.c.b16 %v4715, %v4714
  %v4722 = vpack.c.b16 %v4717, %v4716
  %v4723 = vpack.c.b16 %v4719, %v4718
  %v4725 = vsel %vm544, %v4720, 0
  %v4728 = vsel %vm544, %v4721, 0
  %v4731 = vsel %vm544, %v4722, 0
  %v4734 = vsel %vm544, %v4723, 0
  %4736 = vmatprep.subr.bf16.mxu0 0
  %4737 = vmatpush1.bf16.msra.mxu0 %v4702
  %4738 = vmatprep.subr.bf16.mxu0 0
  %4739 = vmatpush1.bf16.msra.mxu0 %v4703
  %4740 = vmatprep.subr.bf16.mxu0 0
  %4741 = vmatpush1.bf16.msra.mxu0 0
  %4742 = vmatprep.subr.bf16.mxu0 0
  %4743 = vmatpush1.bf16.msra.mxu0 0
  %4744 = vmatprep.subr.bf16.mxu0 0
  %4745 = vmatpush1.bf16.msra.mxu0 0
  %4746 = vmatprep.subr.bf16.mxu0 0
  %4747 = vmatpush1.bf16.msra.mxu0 0
  %4748 = vmatprep.subr.bf16.mxu0 0
  %4749 = vmatpush1.bf16.msra.mxu0 0
  %4750 = vmatprep.subr.bf16.mxu0 0
  %4751 = vmatpush1.bf16.msra.mxu0 0
  %4752 = vmatprep.subr.bf16.mxu0 0
  %4753 = vmatpush1.bf16.msra.mxu0 0
  %4754 = vmatprep.subr.bf16.mxu0 0
  %4755 = vmatpush1.bf16.msra.mxu0 0
  %4756 = vmatprep.subr.bf16.mxu0 0
  %4757 = vmatpush1.bf16.msra.mxu0 0
  %4758 = vmatprep.subr.bf16.mxu0 0
  %4759 = vmatpush1.bf16.msra.mxu0 0
  %4760 = vmatprep.subr.bf16.mxu0 0
  %4761 = vmatpush1.bf16.msra.mxu0 0
  %4762 = vmatprep.subr.bf16.mxu0 0
  %4763 = vmatpush1.bf16.msra.mxu0 0
  %4764 = vmatprep.subr.bf16.mxu0 0
  %4765 = vmatpush1.bf16.msra.mxu0 0
  %4766 = vmatprep.subr.bf16.mxu0 0
  %4767 = vmatpush1.bf16.msra.mxu0 0
  %4768 = vmatprep.mubr.bf16.mxu0 0
  %4769 = vmatmul.mubr.bf16.gmra.mrb[0].mxu0 %v4725
  %v4770 = vpop.f32.mrb[0].mxu0
  %v4771 = vadd.f32 0.0, %v4770
  %v4772 = vpop.f32.mrb[0].mxu0
  %v4773 = vpop.f32.mrb[0].mxu0
  %v4774 = vadd.f32 0.0, %v4773
  %v4775 = vpop.f32.mrb[0].mxu0
  %4776 = vmatprep.mubr.bf16.mxu0 0
  %4777 = vmatmul.mubr.bf16.gmra.mrb[0].mxu0 %v4728
  %v4778 = vpop.f32.mrb[0].mxu0
  %v4779 = vadd.f32 0.0, %v4778
  %v4780 = vpop.f32.mrb[0].mxu0
  %v4781 = vpop.f32.mrb[0].mxu0
  %v4782 = vadd.f32 0.0, %v4781
  %v4783 = vpop.f32.mrb[0].mxu0
  %4784 = vmatprep.mubr.bf16.mxu0 0
  %4785 = vmatmul.mubr.bf16.gmra.mrb[0].mxu0 %v4731
  %v4786 = vpop.f32.mrb[0].mxu0
  %v4787 = vadd.f32 0.0, %v4786
  %v4788 = vpop.f32.mrb[0].mxu0
  %v4789 = vpop.f32.mrb[0].mxu0
  %v4790 = vadd.f32 0.0, %v4789
  %v4791 = vpop.f32.mrb[0].mxu0
  %4792 = vmatprep.mubr.bf16.mxu0 0
  %4793 = vmatmul.mubr.bf16.gmra.mrb[0].mxu0 %v4734
  %v4794 = vpop.f32.mrb[0].mxu0
  %v4795 = vadd.f32 0.0, %v4794
  %v4796 = vpop.f32.mrb[0].mxu0
  %v4797 = vpop.f32.mrb[0].mxu0
  %v4798 = vadd.f32 0.0, %v4797
  %v4799 = vpop.f32.mrb[0].mxu0
  %4800 = vdwg.mxu0
  %v4801 = vadd.f32 %v3996, %v4771
  %v4802 = vadd.f32 %v3999, %v4774
  %v4803 = vadd.f32 %v4004, %v4779
  %v4804 = vadd.f32 %v4007, %v4782
  %v4805 = vadd.f32 %v4012, %v4787
  %v4806 = vadd.f32 %v4015, %v4790
  %v4807 = vadd.f32 %v4020, %v4795
  %v4808 = vadd.f32 %v4023, %v4798
  %v4809 = vld [vmem:[%s3 + $0x400] sm:$0xf]
  %v4810 = vld [vmem:[%s3 + $0x404] sm:$0xf]
  %v4811 = vld [vmem:[%s3 + $0x408] sm:$0xf]
  %v4812 = vld [vmem:[%s3 + $0x40c] sm:$0xf]
  %v4813 = vld [vmem:[%s3 + $0x410] sm:$0xf]
  %v4814 = vld [vmem:[%s3 + $0x414] sm:$0xf]
  %v4815 = vld [vmem:[%s3 + $0x418] sm:$0xf]
  %v4816 = vld [vmem:[%s3 + $0x41c] sm:$0xf]
  %v4817 = vpack.c.bf16 %v4683, %v4682
  %v4818 = vpack.c.bf16 %v4685, %v4684
  %v4827 = vunpack.c.l.b16 %v4809
  %v4828 = vunpack.c.l.b16 %v4810
  %v4829 = vunpack.c.l.b16 %v4811
  %v4830 = vunpack.c.l.b16 %v4812
  %v4831 = vunpack.c.l.b16 %v4813
  %v4832 = vunpack.c.l.b16 %v4814
  %v4833 = vunpack.c.l.b16 %v4815
  %v4834 = vunpack.c.l.b16 %v4816
  %v4835 = vpack.c.b16 %v4828, %v4827
  %v4836 = vpack.c.b16 %v4830, %v4829
  %v4837 = vpack.c.b16 %v4832, %v4831
  %v4838 = vpack.c.b16 %v4834, %v4833
  %v4840 = vsel %vm544, %v4835, 0
  %v4843 = vsel %vm544, %v4836, 0
  %v4846 = vsel %vm544, %v4837, 0
  %v4849 = vsel %vm544, %v4838, 0
  %4851 = vmatprep.subr.bf16.mxu0 0
  %4852 = vmatpush1.bf16.msra.mxu0 %v4817
  %4853 = vmatprep.subr.bf16.mxu0 0
  %4854 = vmatpush1.bf16.msra.mxu0 %v4818
  %4855 = vmatprep.subr.bf16.mxu0 0
  %4856 = vmatpush1.bf16.msra.mxu0 0
  %4857 = vmatprep.subr.bf16.mxu0 0
  %4858 = vmatpush1.bf16.msra.mxu0 0
  %4859 = vmatprep.subr.bf16.mxu0 0
  %4860 = vmatpush1.bf16.msra.mxu0 0
  %4861 = vmatprep.subr.bf16.mxu0 0
  %4862 = vmatpush1.bf16.msra.mxu0 0
  %4863 = vmatprep.subr.bf16.mxu0 0
  %4864 = vmatpush1.bf16.msra.mxu0 0
  %4865 = vmatprep.subr.bf16.mxu0 0
  %4866 = vmatpush1.bf16.msra.mxu0 0
  %4867 = vmatprep.subr.bf16.mxu0 0
  %4868 = vmatpush1.bf16.msra.mxu0 0
  %4869 = vmatprep.subr.bf16.mxu0 0
  %4870 = vmatpush1.bf16.msra.mxu0 0
  %4871 = vmatprep.subr.bf16.mxu0 0
  %4872 = vmatpush1.bf16.msra.mxu0 0
  %4873 = vmatprep.subr.bf16.mxu0 0
  %4874 = vmatpush1.bf16.msra.mxu0 0
  %4875 = vmatprep.subr.bf16.mxu0 0
  %4876 = vmatpush1.bf16.msra.mxu0 0
  %4877 = vmatprep.subr.bf16.mxu0 0
  %4878 = vmatpush1.bf16.msra.mxu0 0
  %4879 = vmatprep.subr.bf16.mxu0 0
  %4880 = vmatpush1.bf16.msra.mxu0 0
  %4881 = vmatprep.subr.bf16.mxu0 0
  %4882 = vmatpush1.bf16.msra.mxu0 0
  %4883 = vmatprep.mubr.bf16.mxu0 0
  %4884 = vmatmul.mubr.bf16.gmra.mrb[0].mxu0 %v4840
  %v4885 = vpop.f32.mrb[0].mxu0
  %v4886 = vadd.f32 0.0, %v4885
  %v4887 = vpop.f32.mrb[0].mxu0
  %v4888 = vpop.f32.mrb[0].mxu0
  %v4889 = vadd.f32 0.0, %v4888
  %v4890 = vpop.f32.mrb[0].mxu0
  %4891 = vmatprep.mubr.bf16.mxu0 0
  %4892 = vmatmul.mubr.bf16.gmra.mrb[0].mxu0 %v4843
  %v4893 = vpop.f32.mrb[0].mxu0
  %v4894 = vadd.f32 0.0, %v4893
  %v4895 = vpop.f32.mrb[0].mxu0
  %v4896 = vpop.f32.mrb[0].mxu0
  %v4897 = vadd.f32 0.0, %v4896
  %v4898 = vpop.f32.mrb[0].mxu0
  %4899 = vmatprep.mubr.bf16.mxu0 0
  %4900 = vmatmul.mubr.bf16.gmra.mrb[0].mxu0 %v4846
  %v4901 = vpop.f32.mrb[0].mxu0
  %v4902 = vadd.f32 0.0, %v4901
  %v4903 = vpop.f32.mrb[0].mxu0
  %v4904 = vpop.f32.mrb[0].mxu0
  %v4905 = vadd.f32 0.0, %v4904
  %v4906 = vpop.f32.mrb[0].mxu0
  %4907 = vmatprep.mubr.bf16.mxu0 0
  %4908 = vmatmul.mubr.bf16.gmra.mrb[0].mxu0 %v4849
  %v4909 = vpop.f32.mrb[0].mxu0
  %v4910 = vadd.f32 0.0, %v4909
  %v4911 = vpop.f32.mrb[0].mxu0
  %v4912 = vpop.f32.mrb[0].mxu0
  %v4913 = vadd.f32 0.0, %v4912
  %v4914 = vpop.f32.mrb[0].mxu0
  %4915 = vdwg.mxu0
  %v4916 = vadd.f32 %v4801, %v4886
  %v4917 = vadd.f32 %v4802, %v4889
  %v4918 = vadd.f32 %v4803, %v4894
  %v4919 = vadd.f32 %v4804, %v4897
  %v4920 = vadd.f32 %v4805, %v4902
  %v4921 = vadd.f32 %v4806, %v4905
  %v4922 = vadd.f32 %v4807, %v4910
  %v4923 = vadd.f32 %v4808, %v4913
  %4924 = vrot.lane.b32.xlu0 %v4682, 126
  %v4925 = vpop.permute.xlu0 %4924
  %4926 = vrot.lane.b32.xlu0 %v4683, 126
  %v4927 = vpop.permute.xlu0 %4926
  %4928 = vrot.lane.b32.xlu0 %v4684, 126
  %v4929 = vpop.permute.xlu0 %4928
  %4930 = vrot.lane.b32.xlu0 %v4685, 126
  %v4931 = vpop.permute.xlu0 %4930
  %v4932 = vld [vmem:[%s3 + $0x420] sm:$0xf]
  %v4933 = vld [vmem:[%s3 + $0x424] sm:$0xf]
  %v4934 = vld [vmem:[%s3 + $0x428] sm:$0xf]
  %v4935 = vld [vmem:[%s3 + $0x42c] sm:$0xf]
  %v4936 = vld [vmem:[%s3 + $0x430] sm:$0xf]
  %v4937 = vld [vmem:[%s3 + $0x434] sm:$0xf]
  %v4938 = vld [vmem:[%s3 + $0x438] sm:$0xf]
  %v4939 = vld [vmem:[%s3 + $0x43c] sm:$0xf]
  %v4940 = vpack.c.bf16 %v4927, %v4925
  %v4941 = vpack.c.bf16 %v4931, %v4929
  %v4950 = vunpack.c.l.b16 %v4932
  %v4951 = vunpack.c.l.b16 %v4933
  %v4952 = vunpack.c.l.b16 %v4934
  %v4953 = vunpack.c.l.b16 %v4935
  %v4954 = vunpack.c.l.b16 %v4936
  %v4955 = vunpack.c.l.b16 %v4937
  %v4956 = vunpack.c.l.b16 %v4938
  %v4957 = vunpack.c.l.b16 %v4939
  %v4958 = vpack.c.b16 %v4951, %v4950
  %v4959 = vpack.c.b16 %v4953, %v4952
  %v4960 = vpack.c.b16 %v4955, %v4954
  %v4961 = vpack.c.b16 %v4957, %v4956
  %v4963 = vsel %vm544, %v4958, 0
  %v4966 = vsel %vm544, %v4959, 0
  %v4969 = vsel %vm544, %v4960, 0
  %v4972 = vsel %vm544, %v4961, 0
  %4974 = vmatprep.subr.bf16.mxu0 0
  %4975 = vmatpush1.bf16.msra.mxu0 %v4940
  %4976 = vmatprep.subr.bf16.mxu0 0
  %4977 = vmatpush1.bf16.msra.mxu0 %v4941
  %4978 = vmatprep.subr.bf16.mxu0 0
  %4979 = vmatpush1.bf16.msra.mxu0 0
  %4980 = vmatprep.subr.bf16.mxu0 0
  %4981 = vmatpush1.bf16.msra.mxu0 0
  %4982 = vmatprep.subr.bf16.mxu0 0
  %4983 = vmatpush1.bf16.msra.mxu0 0
  %4984 = vmatprep.subr.bf16.mxu0 0
  %4985 = vmatpush1.bf16.msra.mxu0 0
  %4986 = vmatprep.subr.bf16.mxu0 0
  %4987 = vmatpush1.bf16.msra.mxu0 0
  %4988 = vmatprep.subr.bf16.mxu0 0
  %4989 = vmatpush1.bf16.msra.mxu0 0
  %4990 = vmatprep.subr.bf16.mxu0 0
  %4991 = vmatpush1.bf16.msra.mxu0 0
  %4992 = vmatprep.subr.bf16.mxu0 0
  %4993 = vmatpush1.bf16.msra.mxu0 0
  %4994 = vmatprep.subr.bf16.mxu0 0
  %4995 = vmatpush1.bf16.msra.mxu0 0
  %4996 = vmatprep.subr.bf16.mxu0 0
  %4997 = vmatpush1.bf16.msra.mxu0 0
  %4998 = vmatprep.subr.bf16.mxu0 0
  %4999 = vmatpush1.bf16.msra.mxu0 0
  %5000 = vmatprep.subr.bf16.mxu0 0
  %5001 = vmatpush1.bf16.msra.mxu0 0
  %5002 = vmatprep.subr.bf16.mxu0 0
  %5003 = vmatpush1.bf16.msra.mxu0 0
  %5004 = vmatprep.subr.bf16.mxu0 0
  %5005 = vmatpush1.bf16.msra.mxu0 0
  %5006 = vmatprep.mubr.bf16.mxu0 0
  %5007 = vmatmul.mubr.bf16.gmra.mrb[0].mxu0 %v4963
  %v5008 = vpop.f32.mrb[0].mxu0
  %v5009 = vadd.f32 0.0, %v5008
  %v5010 = vpop.f32.mrb[0].mxu0
  %v5011 = vpop.f32.mrb[0].mxu0
  %v5012 = vadd.f32 0.0, %v5011
  %v5013 = vpop.f32.mrb[0].mxu0
  %5014 = vmatprep.mubr.bf16.mxu0 0
  %5015 = vmatmul.mubr.bf16.gmra.mrb[0].mxu0 %v4966
  %v5016 = vpop.f32.mrb[0].mxu0
  %v5017 = vadd.f32 0.0, %v5016
  %v5018 = vpop.f32.mrb[0].mxu0
  %v5019 = vpop.f32.mrb[0].mxu0
  %v5020 = vadd.f32 0.0, %v5019
  %v5021 = vpop.f32.mrb[0].mxu0
  %5022 = vmatprep.mubr.bf16.mxu0 0
  %5023 = vmatmul.mubr.bf16.gmra.mrb[0].mxu0 %v4969
  %v5024 = vpop.f32.mrb[0].mxu0
  %v5025 = vadd.f32 0.0, %v5024
  %v5026 = vpop.f32.mrb[0].mxu0
  %v5027 = vpop.f32.mrb[0].mxu0
  %v5028 = vadd.f32 0.0, %v5027
  %v5029 = vpop.f32.mrb[0].mxu0
  %5030 = vmatprep.mubr.bf16.mxu0 0
  %5031 = vmatmul.mubr.bf16.gmra.mrb[0].mxu0 %v4972
  %v5032 = vpop.f32.mrb[0].mxu0
  %v5033 = vadd.f32 0.0, %v5032
  %v5034 = vpop.f32.mrb[0].mxu0
  %v5035 = vpop.f32.mrb[0].mxu0
  %v5036 = vadd.f32 0.0, %v5035
  %v5037 = vpop.f32.mrb[0].mxu0
  %5038 = vdwg.mxu0
  %v5039 = vadd.f32 %v4916, %v5009
  %v5040 = vadd.f32 %v4917, %v5012
  %v5041 = vadd.f32 %v4918, %v5017
  %v5042 = vadd.f32 %v4919, %v5020
  %v5043 = vadd.f32 %v4920, %v5025
  %v5044 = vadd.f32 %v4921, %v5028
  %v5045 = vadd.f32 %v4922, %v5033
  %v5046 = vadd.f32 %v4923, %v5036
  %v5047 = vtanh.pop %v5039
  %v5048 = vtanh.pop %v5040
  %v5049 = vtanh.pop %v5041
  %v5050 = vtanh.pop %v5042
  %v5051 = vxor.u32 %v5043, 2147483648
  %v5052 = vxor.u32 %v5044, 2147483648
  %v5053 = vxor.u32 %v5045, 2147483648
  %v5054 = vxor.u32 %v5046, 2147483648
  %v5055 = vmul.f32 %v5051, 1.442695
  %v5056 = vpow.pop %v5055
  %v5057 = vmul.f32 %v5052, 1.442695
  %v5058 = vpow.pop %v5057
  %v5059 = vmul.f32 %v5053, 1.442695
  %v5060 = vpow.pop %v5059
  %v5061 = vmul.f32 %v5054, 1.442695
  %v5062 = vpow.pop %v5061
  %v5063 = vadd.f32 %v5056, 1.0
  %v5064 = vadd.f32 %v5058, 1.0
  %v5065 = vadd.f32 %v5060, 1.0
  %v5066 = vadd.f32 %v5062, 1.0
  %v5067 = vrcp.pop %v5063
  %v5068 = vmul.f32 1.0, %v5067
  %v5069 = vrcp.pop %v5064
  %v5070 = vmul.f32 1.0, %v5069
  %v5071 = vrcp.pop %v5065
  %v5072 = vmul.f32 1.0, %v5071
  %v5073 = vrcp.pop %v5066
  %v5074 = vmul.f32 1.0, %v5073
  %v5075 = vmul.f32 %v5047, %v5068
  %v5076 = vmul.f32 %v5048, %v5070
  %v5077 = vmul.f32 %v5049, %v5072
  %v5078 = vmul.f32 %v5050, %v5074
  %v5079 = vld [vmem:[%s3 + $0x440] sm:$0xf]
  %v5080 = vld [vmem:[%s3 + $0x444] sm:$0xf]
  %v5081 = vld [vmem:[%s3 + $0x448] sm:$0xf]
  %v5082 = vld [vmem:[%s3 + $0x44c] sm:$0xf]
  %v5083 = vpack.c.bf16 %v5076, %v5075
  %v5084 = vpack.c.bf16 %v5078, %v5077
  %v5085 = vld [vmem:[%s4 + $0x300] sm:$0xff]
  %v5086 = vld [vmem:[%s4 + $0x308] sm:$0xff]
  %v5087 = vld [vmem:[%s4 + $0x310] sm:$0xff]
  %v5088 = vld [vmem:[%s4 + $0x318] sm:$0xff]
  %5090 = vset.pattern.permute.xlu0 0
  %5091 = vperm.xlu0 %5090, %v5085
  %v5092 = vpop.permute.xlu0 %5091
  %5095 = vset.pattern.permute.xlu0 0
  %5096 = vperm.xlu0 %5095, %v5086
  %v5097 = vpop.permute.xlu0 %5096
  %5100 = vset.pattern.permute.xlu0 0
  %5101 = vperm.xlu0 %5100, %v5087
  %v5102 = vpop.permute.xlu0 %5101
  %5105 = vset.pattern.permute.xlu0 0
  %5106 = vperm.xlu0 %5105, %v5088
  %v5107 = vpop.permute.xlu0 %5106
  %v5113 = vunpack.c.l.b16 %v5079
  %v5114 = vunpack.c.l.b16 %v5080
  %v5115 = vunpack.c.l.b16 %v5081
  %v5116 = vunpack.c.l.b16 %v5082
  %v5117 = vpack.c.b16 %v5114, %v5113
  %v5118 = vpack.c.b16 %v5116, %v5115
  %v5120 = vsel %vm544, %v5117, 0
  %v5123 = vsel %vm544, %v5118, 0
  %5125 = vmatprep.subr.bf16.mxu0 0
  %5126 = vmatpush1.bf16.msra.mxu0 %v5083
  %5127 = vmatprep.subr.bf16.mxu0 0
  %5128 = vmatpush1.bf16.msra.mxu0 %v5084
  %5129 = vmatprep.subr.bf16.mxu0 0
  %5130 = vmatpush1.bf16.msra.mxu0 0
  %5131 = vmatprep.subr.bf16.mxu0 0
  %5132 = vmatpush1.bf16.msra.mxu0 0
  %5133 = vmatprep.subr.bf16.mxu0 0
  %5134 = vmatpush1.bf16.msra.mxu0 0
  %5135 = vmatprep.subr.bf16.mxu0 0
  %5136 = vmatpush1.bf16.msra.mxu0 0
  %5137 = vmatprep.subr.bf16.mxu0 0
  %5138 = vmatpush1.bf16.msra.mxu0 0
  %5139 = vmatprep.subr.bf16.mxu0 0
  %5140 = vmatpush1.bf16.msra.mxu0 0
  %5141 = vmatprep.subr.bf16.mxu0 0
  %5142 = vmatpush1.bf16.msra.mxu0 0
  %5143 = vmatprep.subr.bf16.mxu0 0
  %5144 = vmatpush1.bf16.msra.mxu0 0
  %5145 = vmatprep.subr.bf16.mxu0 0
  %5146 = vmatpush1.bf16.msra.mxu0 0
  %5147 = vmatprep.subr.bf16.mxu0 0
  %5148 = vmatpush1.bf16.msra.mxu0 0
  %5149 = vmatprep.subr.bf16.mxu0 0
  %5150 = vmatpush1.bf16.msra.mxu0 0
  %5151 = vmatprep.subr.bf16.mxu0 0
  %5152 = vmatpush1.bf16.msra.mxu0 0
  %5153 = vmatprep.subr.bf16.mxu0 0
  %5154 = vmatpush1.bf16.msra.mxu0 0
  %5155 = vmatprep.subr.bf16.mxu0 0
  %5156 = vmatpush1.bf16.msra.mxu0 0
  %5157 = vmatprep.mubr.bf16.mxu0 0
  %5158 = vmatmul.mubr.bf16.gmra.mrb[0].mxu0 %v5120
  %v5159 = vpop.f32.mrb[0].mxu0
  %v5160 = vadd.f32 %v5092, %v5159
  %v5161 = vpop.f32.mrb[0].mxu0
  %v5162 = vpop.f32.mrb[0].mxu0
  %v5163 = vadd.f32 %v5097, %v5162
  %v5164 = vpop.f32.mrb[0].mxu0
  %5165 = vmatprep.mubr.bf16.mxu0 0
  %5166 = vmatmul.mubr.bf16.gmra.mrb[0].mxu0 %v5123
  %v5167 = vpop.f32.mrb[0].mxu0
  %v5168 = vadd.f32 %v5102, %v5167
  %v5169 = vpop.f32.mrb[0].mxu0
  %v5170 = vpop.f32.mrb[0].mxu0
  %v5171 = vadd.f32 %v5107, %v5170
  %v5172 = vpop.f32.mrb[0].mxu0
  %5173 = vdwg.mxu0
  %v5174 = vadd.f32 %v4664, %v5160
  %v5175 = vadd.f32 %v4667, %v5163
  %v5176 = vadd.f32 %v4672, %v5168
  %v5177 = vadd.f32 %v4675, %v5171
  %v5178 = vld [vmem:[%s3 + $0x450] sm:$0x3]
  %v5179 = vpack.c.bf16 %v5175, %v5174
  %v5180 = vpack.c.bf16 %v5177, %v5176
  %v5181 = vld [vmem:[%s4 + $0x320] sm:$0x7]
  %5183 = vset.pattern.permute.xlu0 0
  %5184 = vperm.xlu0 %5183, %v5181
  %v5185 = vpop.permute.xlu0 %5184
  %v5188 = vsel %vm544, %v5178, 0
  %5190 = vmatprep.subr.bf16.mxu0 0
  %5191 = vmatpush1.bf16.msra.mxu0 %v5179
  %5192 = vmatprep.subr.bf16.mxu0 0
  %5193 = vmatpush1.bf16.msra.mxu0 %v5180
  %5194 = vmatprep.subr.bf16.mxu0 0
  %5195 = vmatpush1.bf16.msra.mxu0 0
  %5196 = vmatprep.subr.bf16.mxu0 0
  %5197 = vmatpush1.bf16.msra.mxu0 0
  %5198 = vmatprep.subr.bf16.mxu0 0
  %5199 = vmatpush1.bf16.msra.mxu0 0
  %5200 = vmatprep.subr.bf16.mxu0 0
  %5201 = vmatpush1.bf16.msra.mxu0 0
  %5202 = vmatprep.subr.bf16.mxu0 0
  %5203 = vmatpush1.bf16.msra.mxu0 0
  %5204 = vmatprep.subr.bf16.mxu0 0
  %5205 = vmatpush1.bf16.msra.mxu0 0
  %5206 = vmatprep.subr.bf16.mxu0 0
  %5207 = vmatpush1.bf16.msra.mxu0 0
  %5208 = vmatprep.subr.bf16.mxu0 0
  %5209 = vmatpush1.bf16.msra.mxu0 0
  %5210 = vmatprep.subr.bf16.mxu0 0
  %5211 = vmatpush1.bf16.msra.mxu0 0
  %5212 = vmatprep.subr.bf16.mxu0 0
  %5213 = vmatpush1.bf16.msra.mxu0 0
  %5214 = vmatprep.subr.bf16.mxu0 0
  %5215 = vmatpush1.bf16.msra.mxu0 0
  %5216 = vmatprep.subr.bf16.mxu0 0
  %5217 = vmatpush1.bf16.msra.mxu0 0
  %5218 = vmatprep.subr.bf16.mxu0 0
  %5219 = vmatpush1.bf16.msra.mxu0 0
  %5220 = vmatprep.subr.bf16.mxu0 0
  %5221 = vmatpush1.bf16.msra.mxu0 0
  %5222 = vmatprep.mubr.bf16.mxu0 0
  %5223 = vmatmul.mubr.bf16.gmra.mrb[0].mxu0 %v5188
  %v5224 = vpop.f32.mrb[0].mxu0
  %v5225 = vadd.f32 %v5185, %v5224
  %v5226 = vpop.f32.mrb[0].mxu0
  %v5227 = vpop.f32.mrb[0].mxu0
  %v5228 = vpop.f32.mrb[0].mxu0
  %5229 = vdwg.mxu0
  %v5230 = vld [vmem:[%s3 + $0x458] sm:$0x3]
  %v5231 = vld [vmem:[%s4 + $0x328] sm:$0x7]
  %5233 = vset.pattern.permute.xlu0 0
  %5234 = vperm.xlu0 %5233, %v5231
  %v5235 = vpop.permute.xlu0 %5234
  %v5238 = vsel %vm544, %v5230, 0
  %5240 = vmatprep.subr.bf16.mxu0 0
  %5241 = vmatpush1.bf16.msra.mxu0 %v5179
  %5242 = vmatprep.subr.bf16.mxu0 0
  %5243 = vmatpush1.bf16.msra.mxu0 %v5180
  %5244 = vmatprep.subr.bf16.mxu0 0
  %5245 = vmatpush1.bf16.msra.mxu0 0
  %5246 = vmatprep.subr.bf16.mxu0 0
  %5247 = vmatpush1.bf16.msra.mxu0 0
  %5248 = vmatprep.subr.bf16.mxu0 0
  %5249 = vmatpush1.bf16.msra.mxu0 0
  %5250 = vmatprep.subr.bf16.mxu0 0
  %5251 = vmatpush1.bf16.msra.mxu0 0
  %5252 = vmatprep.subr.bf16.mxu0 0
  %5253 = vmatpush1.bf16.msra.mxu0 0
  %5254 = vmatprep.subr.bf16.mxu0 0
  %5255 = vmatpush1.bf16.msra.mxu0 0
  %5256 = vmatprep.subr.bf16.mxu0 0
  %5257 = vmatpush1.bf16.msra.mxu0 0
  %5258 = vmatprep.subr.bf16.mxu0 0
  %5259 = vmatpush1.bf16.msra.mxu0 0
  %5260 = vmatprep.subr.bf16.mxu0 0
  %5261 = vmatpush1.bf16.msra.mxu0 0
  %5262 = vmatprep.subr.bf16.mxu0 0
  %5263 = vmatpush1.bf16.msra.mxu0 0
  %5264 = vmatprep.subr.bf16.mxu0 0
  %5265 = vmatpush1.bf16.msra.mxu0 0
  %5266 = vmatprep.subr.bf16.mxu0 0
  %5267 = vmatpush1.bf16.msra.mxu0 0
  %5268 = vmatprep.subr.bf16.mxu0 0
  %5269 = vmatpush1.bf16.msra.mxu0 0
  %5270 = vmatprep.subr.bf16.mxu0 0
  %5271 = vmatpush1.bf16.msra.mxu0 0
  %5272 = vmatprep.mubr.bf16.mxu0 0
  %5273 = vmatmul.mubr.bf16.gmra.mrb[0].mxu0 %v5238
  %v5274 = vpop.f32.mrb[0].mxu0
  %v5275 = vadd.f32 %v5235, %v5274
  %v5276 = vpop.f32.mrb[0].mxu0
  %v5277 = vpop.f32.mrb[0].mxu0
  %v5278 = vpop.f32.mrb[0].mxu0
  %5279 = vdwg.mxu0
  %v5280 = vmul.f32 %v5275, %v500
  %v5281 = vmul.f32 %v5280, 1.442695
  %v5282 = vpow.pop %v5281
  %v5283 = vmul.f32 %v3748, %v5282
  %v5284 = vadd.f32 %v5283, %v5225
  %vm5285 = vcmp.ne.f32.partialorder %v5284, %v5284
  %v5286 = vsel %vm5285, 0.0, %v5284
  %vm5287 = vcmp.ne.f32.partialorder %v3660, %v3660
  %v5288 = vsel %vm5287, 0.0, %v3660
  %vm5289 = vcmask 1042432
  %v5290 = vsel %vm5289, %v5280, 0.0
  %v5291 = vrot.slane %v5290, 4
  %v5292 = vadd.f32 %v5290, %v5291
  %v5293 = vrot.slane %v5292, 2
  %v5294 = vadd.f32 %v5292, %v5293
  %v5295 = vrot.slane %v5294, 1
  %v5296 = vadd.f32 %v5294, %v5295
  %5297 = vst [vmem:[%s6 + $0x2] sm:$0x1] %v5296
  %5298 = vst [vmem:[%s5 + $0x2] sm:$0x7] %v5288
  %5299 = vst [vmem:[%s5 + $0x5] sm:$0x7] %v5286
  // Predicated region
  $region22: #{waveglow_forward.1} parent=0 // pred_check
    _
  $region23: #{waveglow_forward.1} parent=0 // pred_check_branch
    %5301 = sbr.rel (0) target = $region25
  $region24: #{waveglow_forward.1} parent=0 // pred_region
    _
  $region25: #{waveglow_forward.1} parent=0 // pred_fallthru
    _
  // Predicated region
  $region26: #{waveglow_forward.1} parent=0 // pred_check
    _
  $region27: #{waveglow_forward.1} parent=0 // pred_check_branch
    %5303 = sbr.rel (0) target = $region29
  $region28: #{waveglow_forward.1} parent=0 // pred_region
    _
  $region29: #{waveglow_forward.1} parent=0 // pred_fallthru
    _
  // Predicated region
  $region30: #{waveglow_forward.1} parent=0 // pred_check
    _
  $region31: #{waveglow_forward.1} parent=0 // pred_check_branch
    %5305 = sbr.rel (0) target = $region33
  $region32: #{waveglow_forward.1} parent=0 // pred_region
    _
  $region33: #{waveglow_forward.1} parent=0 // pred_fallthru
    _
  // Predicated region
  $region34: #{waveglow_forward.1} parent=0 // pred_check
    _
  $region35: #{waveglow_forward.1} parent=0 // pred_check_branch
    %5307 = sbr.rel (0) target = $region37
  $region36: #{waveglow_forward.1} parent=0 // pred_region
    _
  $region37: #{waveglow_forward.1} parent=0 // pred_fallthru
    _

</llo_original>
